<compile_context>
chip_gen: v5e
topology: v5e:2x2
jax: 0.10.0
libtpu: 0.0.40
codegen_flags: <defaults>
</compile_context>

<pallas_src>
import math

import jax
import jax.numpy as jnp
from jax import lax
from jax.experimental import pallas as pl
from jax.experimental.pallas import tpu as pltpu


def _lstm_cell(gates, c_prev, H):
    # PyTorch gate order: i, f, g, o.  Cell math kept in f32 (v5e has no bf16 VPU/EUP).
    i_g = jax.nn.sigmoid(gates[:, 0:H])
    f_g = jax.nn.sigmoid(gates[:, H:2 * H])
    g_g = jnp.tanh(gates[:, 2 * H:3 * H])
    o_g = jax.nn.sigmoid(gates[:, 3 * H:4 * H])
    c_new = f_g * c_prev + i_g * g_g
    h_new = o_g * jnp.tanh(c_new)
    return h_new, c_new


# ----------------------------------------------------------------------------
# Fused kernel: per batch-block (grid over batch) BiDAF forward after the
# embedding lookup.  All matmuls / recurrences / softmaxes / pooling / MLP are
# here and every intermediate lives in VMEM scratch.
# ----------------------------------------------------------------------------
def bidaf_kernel(
    # activations (time-major, bf16) + shared pre-packed weights
    x_rec_ref, x_rep_ref,
    wih1_ref, whf1_ref, whb1_ref, b1_ref,          # encoder BiLSTM (lstm1_rec)
    wih2a_ref, whf2a_ref, whb2a_ref, b2a_ref,      # modeling BiLSTM layer 0
    wih2b_ref, whf2b_ref, whb2b_ref, b2b_ref,      # modeling BiLSTM layer 1
    wd1_ref, bd1_ref, wd2_ref, bd2_ref, wd3_ref, bd3_ref,   # denseOut MLP
    # output
    pred_ref,
    # scratch
    xw_ref, ctx_ref, qry_ref, m_ref,
):
    T, Bblk, D = x_rec_ref.shape
    J = x_rep_ref.shape[0]
    H = whf1_ref.shape[0]
    H2, H4, H8 = 2 * H, 4 * H, 8 * H
    bf16 = jnp.bfloat16
    f32 = jnp.float32

    def run_bilstm(streams, whf_ref, whb_ref):
        """Batched bidirectional LSTM recurrence.

        `streams` is a static list of (xw_row_offset, length, out_ref).  All
        streams share the weights and run in ONE loop of max(length) steps:
        their rows are stacked so each direction's recurrent matmul is a single
        (n_streams*Bblk, H) x (H, 4H) MXU op per step and sigmoid/tanh EUP work
        is amortized over all rows.  Gate pre-activations are read from xw_ref
        (time-major); outputs go time-major into each stream's out_ref.
        Streams shorter than max(length) are handled branch-free: their state
        is frozen via jnp.where and clamped indices rewrite identical values.
        """
        ns = len(streams)
        n_steps = max(L for (_, L, _) in streams)
        need_mask = any(L != n_steps for (_, L, _) in streams)
        whf = whf_ref[...]                  # (H, 4H) bf16, loaded once per layer
        whb = whb_ref[...]

        def step(i, carry):
            h_f, c_f, h_b, c_b = carry      # (ns*Bblk, H) f32 each
            t_f = [jnp.minimum(i, L - 1) for (_, L, _) in streams]
            t_b = [jnp.maximum(L - 1 - i, 0) for (_, L, _) in streams]
            gx_f = [xw_ref[pl.ds(off + t, 1), :, 0:H4][0]
                    for (off, _, _), t in zip(streams, t_f)]
            gx_b = [xw_ref[pl.ds(off + t, 1), :, H4:H8][0]
                    for (off, _, _), t in zip(streams, t_b)]
            gx_f = gx_f[0] if ns == 1 else jnp.concatenate(gx_f, axis=0)
            gx_b = gx_b[0] if ns == 1 else jnp.concatenate(gx_b, axis=0)
            # only h @ W_hh stays on the serial path (bf16 LHS, f32 accumulate)
            g_f = gx_f + jnp.dot(h_f.astype(bf16), whf, preferred_element_type=f32)
            g_b = gx_b + jnp.dot(h_b.astype(bf16), whb, preferred_element_type=f32)
            nh_f, nc_f = _lstm_cell(g_f, c_f, H)
            nh_b, nc_b = _lstm_cell(g_b, c_b, H)
            if need_mask:
                valid = jnp.concatenate(
                    [jnp.broadcast_to(i < L, (Bblk, 1)) for (_, L, _) in streams],
                    axis=0)
                nh_f = jnp.where(valid, nh_f, h_f)
                nc_f = jnp.where(valid, nc_f, c_f)
                nh_b = jnp.where(valid, nh_b, h_b)
                nc_b = jnp.where(valid, nc_b, c_b)
            for si, ((_, _, out_ref), tf, tb) in enumerate(zip(streams, t_f, t_b)):
                r0 = si * Bblk
                out_ref[pl.ds(tf, 1), :, 0:H] = nh_f[None, r0:r0 + Bblk, :]
                out_ref[pl.ds(tb, 1), :, H:H2] = nh_b[None, r0:r0 + Bblk, :]
            return nh_f, nc_f, nh_b, nc_b

        z = jnp.zeros((ns * Bblk, H), f32)
        lax.fori_loop(0, n_steps, step, (z, z, z, z))

    # ---- encoder BiLSTM: both streams, hoisted input projection, one loop ----
    wih1 = wih1_ref[...]
    b1 = b1_ref[...]
    xw_ref[0:T] = (jnp.dot(x_rec_ref[...].reshape(T * Bblk, D), wih1,
                           preferred_element_type=f32) + b1).reshape(T, Bblk, H8)
    xw_ref[T:T + J] = (jnp.dot(x_rep_ref[...].reshape(J * Bblk, D), wih1,
                               preferred_element_type=f32) + b1).reshape(J, Bblk, H8)
    run_bilstm([(0, T, ctx_ref), (T, J, qry_ref)], whf1_ref, whb1_ref)

    # ---- BiDAF attention: score matrix S computed ONCE and reused ----
    ctx_tm = ctx_ref[...]                                  # (T, Bblk, 2H) f32
    qry_tm = qry_ref[...]                                  # (J, Bblk, 2H) f32
    ctx_b = jnp.swapaxes(ctx_tm, 0, 1)                     # (Bblk, T, 2H)
    qry_b = jnp.swapaxes(qry_tm, 0, 1)                     # (Bblk, J, 2H)
    s = jnp.einsum("btd,bjd->btj", ctx_b.astype(bf16), qry_b.astype(bf16),
                   preferred_element_type=f32)             # (Bblk, T, J)
    row_max = jnp.max(s, axis=2, keepdims=True)            # (Bblk, T, 1)
    e = jnp.exp(s - row_max)
    att = e * pl.reciprocal(jnp.sum(e, axis=2, keepdims=True), approx=True)
    c2q = jnp.einsum("btj,bjd->btd", att.astype(bf16), qry_b.astype(bf16),
                     preferred_element_type=f32)           # (Bblk, T, 2H)
    # q2c: softmax over T of max_j S  (row_max IS torch.max(S, 2)[0] -> reused)
    g_max = jnp.max(row_max, axis=1, keepdims=True)
    be = jnp.exp(row_max - g_max)                          # (Bblk, T, 1)
    b_att = be * pl.reciprocal(jnp.sum(be, axis=1, keepdims=True), approx=True)
    q2c = jnp.sum(b_att * ctx_b, axis=1)                   # (Bblk, 2H)

    # ---- modeling layer 0: row-split W_ih (G never materialized) ----
    c2q_tm = jnp.swapaxes(c2q, 0, 1)                       # (T, Bblk, 2H)
    g3_tm = ctx_tm * c2q_tm
    g4_tm = ctx_tm * q2c[None, :, :]

    def _proj(x_tm, w):                                    # (T*Bblk,2H) x (2H,8H)
        return jnp.dot(x_tm.reshape(T * Bblk, H2).astype(bf16), w,
                       preferred_element_type=f32)

    xw_m = (_proj(ctx_tm, wih2a_ref[0:H2, :])
            + _proj(c2q_tm, wih2a_ref[H2:2 * H2, :])
            + _proj(g3_tm, wih2a_ref[2 * H2:3 * H2, :])
            + _proj(g4_tm, wih2a_ref[3 * H2:4 * H2, :])
            + b2a_ref[...])
    xw_ref[0:T] = xw_m.reshape(T, Bblk, H8)
    run_bilstm([(0, T, m_ref)], whf2a_ref, whb2a_ref)

    # ---- modeling layer 1 ----
    # TODO(synk): the PyTorch module's inter-layer dropout is train-only; this
    # kernel implements the inference-mode forward.
    xw_ref[0:T] = (jnp.dot(m_ref[...].reshape(T * Bblk, H2).astype(bf16),
                           wih2b_ref[...], preferred_element_type=f32)
                   + b2b_ref[...]).reshape(T, Bblk, H8)
    run_bilstm([(0, T, ctx_ref)], whf2b_ref, whb2b_ref)    # reuse ctx_ref for M

    # ---- pooling (last | max | mean) + denseOut MLP head ----
    m = ctx_ref[...]                                       # (T, Bblk, 2H)
    feat = jnp.concatenate(
        [m[T - 1], jnp.max(m, axis=0), jnp.mean(m, axis=0)], axis=1)   # (Bblk, 6H)
    o = jnp.maximum(
        jnp.dot(feat.astype(bf16), wd1_ref[...], preferred_element_type=f32)
        + bd1_ref[...], 0.0)
    o = jnp.maximum(
        jnp.dot(o.astype(bf16), wd2_ref[...], preferred_element_type=f32)
        + bd2_ref[...], 0.0)
    # final Linear(32 -> 1) as a lane reduction (weight kept as a (1, 32) row)
    pred_ref[...] = jnp.sum(o * wd3_ref[...], axis=1, keepdims=True) + bd3_ref[...]


# ----------------------------------------------------------------------------
# Host-side weight packing (once per call, inside jit; trivially cheap)
# ----------------------------------------------------------------------------
def _pack_bilstm(p):
    """PyTorch-layout LSTM params -> bf16 (Din,8H) fused W_ih (fwd|bwd, gates
    i,f,g,o), bf16 (H,4H) W_hh per direction, f32 (1,8H) fused bias."""
    wih = jnp.concatenate([p["wih_f"].T, p["wih_b"].T], axis=1).astype(jnp.bfloat16)
    whf = p["whh_f"].T.astype(jnp.bfloat16)
    whb = p["whh_b"].T.astype(jnp.bfloat16)
    b = jnp.concatenate(
        [p["bih_f"] + p["bhh_f"], p["bih_b"] + p["bhh_b"]])[None, :].astype(jnp.float32)
    return wih, whf, whb, b


def bidaf_forward(params, ids_rec, ids_rep, block_batch=8):
    emb = params["emb"]
    B, T = ids_rec.shape
    J = ids_rep.shape[1]
    D = emb.shape[1]
    H = params["lstm1"]["whh_f"].shape[1]

    # Batch blocking: Bblk examples per grid step.  Bblk is a multiple of 8 (or
    # the whole padded batch) so the (Bblk, D) trailing block dims satisfy the
    # (8, 128) rule; keep the grid a multiple of 2 at real batch sizes so both
    # v7x TensorCores get work.
    Bblk = block_batch if B >= block_batch else B
    Bpad = pl.cdiv(B, Bblk) * Bblk
    grid = (Bpad // Bblk,)

    # TODO(synk): the data-dependent embedding gather stays in XLA (jnp.take);
    # a Pallas version would need manual per-row DMA gathers, not worthwhile here.
    x_rec = jnp.take(emb, ids_rec, axis=0)                 # (B, T, D)
    x_rep = jnp.take(emb, ids_rep, axis=0)                 # (B, J, D)
    if Bpad != B:
        pad = ((0, Bpad - B), (0, 0), (0, 0))
        x_rec = jnp.pad(x_rec, pad)
        x_rep = jnp.pad(x_rep, pad)
    # host-side layout plumbing: time-major bf16 activations so per-step kernel
    # loads/stores are plain leading-axis slices (and activation DMA is halved)
    x_rec_tm = jnp.swapaxes(x_rec, 0, 1).astype(jnp.bfloat16)   # (T, Bpad, D)
    x_rep_tm = jnp.swapaxes(x_rep, 0, 1).astype(jnp.bfloat16)   # (J, Bpad, D)

    weights = (
        _pack_bilstm(params["lstm1"])
        + _pack_bilstm(params["lstm2_l0"])
        + _pack_bilstm(params["lstm2_l1"])
        + (params["d1_w"].T.astype(jnp.bfloat16), params["d1_b"][None, :],
           params["d2_w"].T.astype(jnp.bfloat16), params["d2_b"][None, :],
           params["d3_w"].astype(jnp.float32), params["d3_b"][None, :])
    )

    # Weights are grid-invariant: keep them out of the pipelined specs entirely
    # (one VMEM-resident copy, no per-step double buffering).
    weight_spec = pl.BlockSpec(memory_space=pltpu.MemorySpace.VMEM)

    pred = pl.pallas_call(
        bidaf_kernel,
        out_shape=jax.ShapeDtypeStruct((Bpad, 1), jnp.float32),
        grid=grid,
        in_specs=[
            pl.BlockSpec((T, Bblk, D), lambda i: (0, i, 0)),
            pl.BlockSpec((J, Bblk, D), lambda i: (0, i, 0)),
        ] + [weight_spec] * len(weights),
        out_specs=pl.BlockSpec((Bblk, 1), lambda i: (i, 0)),
        scratch_shapes=[
            pltpu.VMEM((T + J, Bblk, 8 * H), jnp.float32),  # gate pre-activations
            pltpu.VMEM((T, Bblk, 2 * H), jnp.float32),      # embd_context / final M
            pltpu.VMEM((J, Bblk, 2 * H), jnp.float32),      # embd_query
            pltpu.VMEM((T, Bblk, 2 * H), jnp.float32),      # modeling layer-0 output
        ],
        compiler_params=pltpu.CompilerParams(
            dimension_semantics=("parallel",),              # shard batch blocks over TCs
            vmem_limit_bytes=48 * 1024 * 1024,              # > default; still v7x-safe
        ),
    )(x_rec_tm, x_rep_tm, *weights)

    return pred[:B, 0]                                      # == pred.squeeze()


# ----------------------------------------------------------------------------
# Parameter init (PyTorch shape conventions: Linear (out,in), LSTM (4H,in))
# ----------------------------------------------------------------------------
def _uniform(key, shape, scale):
    return jax.random.uniform(key, shape, jnp.float32, -scale, scale)


def init_lstm(key, din, H):
    scale = 1.0 / math.sqrt(H)
    ks = jax.random.split(key, 8)
    return dict(
        wih_f=_uniform(ks[0], (4 * H, din), scale), whh_f=_uniform(ks[1], (4 * H, H), scale),
        bih_f=_uniform(ks[2], (4 * H,), scale), bhh_f=_uniform(ks[3], (4 * H,), scale),
        wih_b=_uniform(ks[4], (4 * H, din), scale), whh_b=_uniform(ks[5], (4 * H, H), scale),
        bih_b=_uniform(ks[6], (4 * H,), scale), bhh_b=_uniform(ks[7], (4 * H,), scale),
    )


def init_params(key, vocab, d_emb, H):
    ks = jax.random.split(key, 10)
    s1, s2, s3 = 1.0 / math.sqrt(6 * H), 1.0 / math.sqrt(H), 1.0 / math.sqrt(32)
    return dict(
        emb=0.1 * jax.random.normal(ks[0], (vocab, d_emb), jnp.float32),
        lstm1=init_lstm(ks[1], d_emb, H),
        lstm2_l0=init_lstm(ks[2], 8 * H, H),
        lstm2_l1=init_lstm(ks[3], 2 * H, H),
        d1_w=_uniform(ks[4], (H, 6 * H), s1), d1_b=_uniform(ks[5], (H,), s1),
        d2_w=_uniform(ks[6], (32, H), s2), d2_b=_uniform(ks[7], (32,), s2),
        d3_w=_uniform(ks[8], (1, 32), s3), d3_b=_uniform(ks[9], (1,), s3),
    )


# ----------------------------------------------------------------------------
# Pure-JAX f32 reference (mirrors the PyTorch forward) for correctness checking
# ----------------------------------------------------------------------------
def _lstm_dir_ref(x, wih, whh, bih, bhh, reverse):
    B, T, _ = x.shape
    H = whh.shape[1]
    h = jnp.zeros((B, H), jnp.float32)
    c = jnp.zeros((B, H), jnp.float32)
    ys = [None] * T
    order = range(T - 1, -1, -1) if reverse else range(T)
    for t in order:
        g = x[:, t] @ wih.T + h @ whh.T + bih + bhh
        i = jax.nn.sigmoid(g[:, :H]); f = jax.nn.sigmoid(g[:, H:2 * H])
        gg = jnp.tanh(g[:, 2 * H:3 * H]); o = jax.nn.sigmoid(g[:, 3 * H:])
        c = f * c + i * gg
        h = o * jnp.tanh(c)
        ys[t] = h
    return jnp.stack(ys, axis=1)


def _bilstm_ref(x, p):
    yf = _lstm_dir_ref(x, p["wih_f"], p["whh_f"], p["bih_f"], p["bhh_f"], False)
    yb = _lstm_dir_ref(x, p["wih_b"], p["whh_b"], p["bih_b"], p["bhh_b"], True)
    return jnp.concatenate([yf, yb], axis=-1)


def forward_ref(params, ids_rec, ids_rep):
    x_rec = params["emb"][ids_rec]
    x_rep = params["emb"][ids_rep]
    ec = _bilstm_ref(x_rec, params["lstm1"])                 # embd_context
    eq = _bilstm_ref(x_rep, params["lstm1"])                 # embd_query
    S = jnp.einsum("btd,bjd->btj", ec, eq)
    c2q = jnp.einsum("btj,bjd->btd", jax.nn.softmax(S, axis=-1), eq)
    b = jax.nn.softmax(jnp.max(S, axis=2), axis=-1)
    q2c = jnp.einsum("bt,btd->bd", b, ec)[:, None, :]
    G = jnp.concatenate([ec, c2q, ec * c2q, ec * q2c], axis=2)
    M1 = _bilstm_ref(G, params["lstm2_l0"])
    M = _bilstm_ref(M1, params["lstm2_l1"])
    feat = jnp.concatenate([M[:, -1], M.max(axis=1), M.mean(axis=1)], axis=1)
    o = jax.nn.relu(feat @ params["d1_w"].T + params["d1_b"])
    o = jax.nn.relu(o @ params["d2_w"].T + params["d2_b"])
    pred = o @ params["d3_w"].T + params["d3_b"]
    return pred[:, 0]


if __name__ == "__main__":
    # Small shapes consistent with the module (scaled down: emb 300->128, H 256->32).
    B, T, J = 16, 8, 6         # batch (2 grid steps of Bblk=8), context len, query len
    H = 32                     # hidden_size
    D = 128                    # word-embedding / LSTM input dim
    V = 500                    # vocab size

    key = jax.random.PRNGKey(0)
    kp, kr, kq = jax.random.split(key, 3)
    params = init_params(kp, V, D, H)
    ids_rec = jax.random.randint(kr, (B, T), 0, V)
    ids_rep = jax.random.randint(kq, (B, J), 0, V)

    fwd = jax.jit(bidaf_forward)
    pred = fwd(params, ids_rec, ids_rep)
    jax.block_until_ready(pred)

    pred_want = jax.jit(forward_ref)(params, ids_rec, ids_rep)
    assert pred.shape == (B,)
    # bf16 MXU operands (f32 accumulation) vs the all-f32 reference -> 5% tolerance
    assert jnp.allclose(pred, pred_want, rtol=5e-2, atol=5e-2), (pred, pred_want)

    print("KERNEL_OK")
</pallas_src>

<mosaic_0001>
module attributes {stable_mosaic.version = 11 : i64} {
  func.func @bidaf_kernel(%arg0: i32, %arg1: memref<8x8x128xbf16, #tpu.memory_space<vmem>>, %arg2: memref<6x8x128xbf16, #tpu.memory_space<vmem>>, %arg3: memref<128x256xbf16, #tpu.memory_space<vmem>>, %arg4: memref<32x128xbf16, #tpu.memory_space<vmem>>, %arg5: memref<32x128xbf16, #tpu.memory_space<vmem>>, %arg6: memref<1x256xf32, #tpu.memory_space<vmem>>, %arg7: memref<256x256xbf16, #tpu.memory_space<vmem>>, %arg8: memref<32x128xbf16, #tpu.memory_space<vmem>>, %arg9: memref<32x128xbf16, #tpu.memory_space<vmem>>, %arg10: memref<1x256xf32, #tpu.memory_space<vmem>>, %arg11: memref<64x256xbf16, #tpu.memory_space<vmem>>, %arg12: memref<32x128xbf16, #tpu.memory_space<vmem>>, %arg13: memref<32x128xbf16, #tpu.memory_space<vmem>>, %arg14: memref<1x256xf32, #tpu.memory_space<vmem>>, %arg15: memref<192x32xbf16, #tpu.memory_space<vmem>>, %arg16: memref<1x32xf32, #tpu.memory_space<vmem>>, %arg17: memref<32x32xbf16, #tpu.memory_space<vmem>>, %arg18: memref<1x32xf32, #tpu.memory_space<vmem>>, %arg19: memref<1x32xf32, #tpu.memory_space<vmem>>, %arg20: memref<1x1xf32, #tpu.memory_space<vmem>>, %arg21: memref<8x1xf32, #tpu.memory_space<vmem>>, %arg22: memref<14x8x256xf32, #tpu.memory_space<vmem>>, %arg23: memref<8x8x64xf32, #tpu.memory_space<vmem>>, %arg24: memref<6x8x64xf32, #tpu.memory_space<vmem>>, %arg25: memref<8x8x64xf32, #tpu.memory_space<vmem>>) attributes {dimension_semantics = [#tpu.dimension_semantics<parallel>], iteration_bounds = array<i64: 2>, scalar_prefetch = 0 : i64, scratch_operands = 4 : i64, tpu.core_type = #tpu.core_type<tc>, window_params = [{transform_indices = @transform_0, window_bounds = array<i64: 8, 8, 128>}, {transform_indices = @transform_1, window_bounds = array<i64: 6, 8, 128>}, {pipeline_mode = #tpu.pipeline_mode<synchronous>, transform_indices = @transform_2, window_bounds = array<i64: 128, 256>}, {pipeline_mode = #tpu.pipeline_mode<synchronous>, transform_indices = @transform_3, window_bounds = array<i64: 32, 128>}, {pipeline_mode = #tpu.pipeline_mode<synchronous>, transform_indices = @transform_4, window_bounds = array<i64: 32, 128>}, {pipeline_mode = #tpu.pipeline_mode<synchronous>, transform_indices = @transform_5, window_bounds = array<i64: 1, 256>}, {pipeline_mode = #tpu.pipeline_mode<synchronous>, transform_indices = @transform_6, window_bounds = array<i64: 256, 256>}, {pipeline_mode = #tpu.pipeline_mode<synchronous>, transform_indices = @transform_7, window_bounds = array<i64: 32, 128>}, {pipeline_mode = #tpu.pipeline_mode<synchronous>, transform_indices = @transform_8, window_bounds = array<i64: 32, 128>}, {pipeline_mode = #tpu.pipeline_mode<synchronous>, transform_indices = @transform_9, window_bounds = array<i64: 1, 256>}, {pipeline_mode = #tpu.pipeline_mode<synchronous>, transform_indices = @transform_10, window_bounds = array<i64: 64, 256>}, {pipeline_mode = #tpu.pipeline_mode<synchronous>, transform_indices = @transform_11, window_bounds = array<i64: 32, 128>}, {pipeline_mode = #tpu.pipeline_mode<synchronous>, transform_indices = @transform_12, window_bounds = array<i64: 32, 128>}, {pipeline_mode = #tpu.pipeline_mode<synchronous>, transform_indices = @transform_13, window_bounds = array<i64: 1, 256>}, {pipeline_mode = #tpu.pipeline_mode<synchronous>, transform_indices = @transform_14, window_bounds = array<i64: 192, 32>}, {pipeline_mode = #tpu.pipeline_mode<synchronous>, transform_indices = @transform_15, window_bounds = array<i64: 1, 32>}, {pipeline_mode = #tpu.pipeline_mode<synchronous>, transform_indices = @transform_16, window_bounds = array<i64: 32, 32>}, {pipeline_mode = #tpu.pipeline_mode<synchronous>, transform_indices = @transform_17, window_bounds = array<i64: 1, 32>}, {pipeline_mode = #tpu.pipeline_mode<synchronous>, transform_indices = @transform_18, window_bounds = array<i64: 1, 32>}, {pipeline_mode = #tpu.pipeline_mode<synchronous>, transform_indices = @transform_19, window_bounds = array<i64: 1, 1>}, {transform_indices = @transform_20, window_bounds = array<i64: 8, 1>}]} {
    %c0 = arith.constant 0 : index
    %c0_0 = arith.constant 0 : index
    %0 = vector.load %arg3[%c0, %c0_0] : memref<128x256xbf16, #tpu.memory_space<vmem>>, vector<128x256xbf16>
    %c0_1 = arith.constant 0 : index
    %c0_2 = arith.constant 0 : index
    %1 = vector.load %arg6[%c0_1, %c0_2] : memref<1x256xf32, #tpu.memory_space<vmem>>, vector<1x256xf32>
    %c0_3 = arith.constant 0 : index
    %c0_4 = arith.constant 0 : index
    %c0_5 = arith.constant 0 : index
    %2 = vector.load %arg1[%c0_3, %c0_4, %c0_5] : memref<8x8x128xbf16, #tpu.memory_space<vmem>>, vector<8x8x128xbf16>
    %3 = vector.shape_cast %2 : vector<8x8x128xbf16> to vector<64x128xbf16>
    %cst = arith.constant dense<0.000000e+00> : vector<64x256xf32>
    %4 = tpu.matmul %3, %0, %cst {dimension_numbers = #tpu.dot_dimension_numbers<[1], [0], [0], [1], [0, 0, 1, 1], [], []>} : vector<64x128xbf16>, vector<128x256xbf16>, vector<64x256xf32> -> vector<64x256xf32>
    %5 = vector.broadcast %1 : vector<1x256xf32> to vector<64x256xf32>
    %6 = arith.addf %4, %5 : vector<64x256xf32>
    %7 = vector.shape_cast %6 : vector<64x256xf32> to vector<8x8x256xf32>
    %c0_6 = arith.constant 0 : index
    %c0_7 = arith.constant 0 : index
    %c0_8 = arith.constant 0 : index
    %8 = vector.load %arg22[%c0_6, %c0_7, %c0_8] : memref<14x8x256xf32, #tpu.memory_space<vmem>>, vector<8x8x256xf32>
    tpu.vector_store %arg22[%c0_6, %c0_7, %c0_8], %7 {strides = array<i32>} : memref<14x8x256xf32, #tpu.memory_space<vmem>>, vector<8x8x256xf32>,
    %c0_9 = arith.constant 0 : index
    %c0_10 = arith.constant 0 : index
    %c0_11 = arith.constant 0 : index
    %9 = vector.load %arg2[%c0_9, %c0_10, %c0_11] : memref<6x8x128xbf16, #tpu.memory_space<vmem>>, vector<6x8x128xbf16>
    %10 = vector.shape_cast %9 : vector<6x8x128xbf16> to vector<48x128xbf16>
    %cst_12 = arith.constant dense<0.000000e+00> : vector<48x256xf32>
    %11 = tpu.matmul %10, %0, %cst_12 {dimension_numbers = #tpu.dot_dimension_numbers<[1], [0], [0], [1], [0, 0, 1, 1], [], []>} : vector<48x128xbf16>, vector<128x256xbf16>, vector<48x256xf32> -> vector<48x256xf32>
    %12 = vector.broadcast %1 : vector<1x256xf32> to vector<48x256xf32>
    %13 = arith.addf %11, %12 : vector<48x256xf32>
    %14 = vector.shape_cast %13 : vector<48x256xf32> to vector<6x8x256xf32>
    %c8 = arith.constant 8 : index
    %c0_13 = arith.constant 0 : index
    %c0_14 = arith.constant 0 : index
    %15 = vector.load %arg22[%c8, %c0_13, %c0_14] : memref<14x8x256xf32, #tpu.memory_space<vmem>>, vector<6x8x256xf32>
    tpu.vector_store %arg22[%c8, %c0_13, %c0_14], %14 {strides = array<i32>} : memref<14x8x256xf32, #tpu.memory_space<vmem>>, vector<6x8x256xf32>,
    %c0_15 = arith.constant 0 : index
    %c0_16 = arith.constant 0 : index
    %16 = vector.load %arg4[%c0_15, %c0_16] : memref<32x128xbf16, #tpu.memory_space<vmem>>, vector<32x128xbf16>
    %c0_17 = arith.constant 0 : index
    %c0_18 = arith.constant 0 : index
    %17 = vector.load %arg5[%c0_17, %c0_18] : memref<32x128xbf16, #tpu.memory_space<vmem>>, vector<32x128xbf16>
    %cst_19 = arith.constant 0.000000e+00 : f32
    %18 = vector.broadcast %cst_19 : f32 to vector<16x32xf32>
    %c0_i32 = arith.constant 0 : i32
    %c8_i32 = arith.constant 8 : i32
    %19 = arith.addi %c0_i32, %c8_i32 : i32
    %c1_i32 = arith.constant 1 : i32
    %20:4 = scf.for %arg26 = %c0_i32 to %19 step %c1_i32 iter_args(%arg27 = %18, %arg28 = %18, %arg29 = %18, %arg30 = %18) -> (vector<16x32xf32>, vector<16x32xf32>, vector<16x32xf32>, vector<16x32xf32>)  : i32 {
      %c7_i32 = arith.constant 7 : i32
      %136 = arith.minsi %arg26, %c7_i32 : i32
      %c5_i32 = arith.constant 5 : i32
      %137 = arith.minsi %arg26, %c5_i32 : i32
      %c7_i32_102 = arith.constant 7 : i32
      %138 = arith.subi %c7_i32_102, %arg26 : i32
      %c0_i32_103 = arith.constant 0 : i32
      %139 = arith.maxsi %138, %c0_i32_103 : i32
      %c5_i32_104 = arith.constant 5 : i32
      %140 = arith.subi %c5_i32_104, %arg26 : i32
      %c0_i32_105 = arith.constant 0 : i32
      %141 = arith.maxsi %140, %c0_i32_105 : i32
      %c0_i32_106 = arith.constant 0 : i32
      %142 = arith.addi %c0_i32_106, %136 : i32
      %143 = arith.index_cast %142 : i32 to index
      %c0_107 = arith.constant 0 : index
      %c0_108 = arith.constant 0 : index
      %144 = vector.load %arg22[%143, %c0_107, %c0_108] : memref<14x8x256xf32, #tpu.memory_space<vmem>>, vector<1x8x128xf32>
      %145 = vector.shape_cast %144 : vector<1x8x128xf32> to vector<8x128xf32>
      %c8_i32_109 = arith.constant 8 : i32
      %146 = arith.addi %c8_i32_109, %137 : i32
      %147 = arith.index_cast %146 : i32 to index
      %c0_110 = arith.constant 0 : index
      %c0_111 = arith.constant 0 : index
      %148 = vector.load %arg22[%147, %c0_110, %c0_111] : memref<14x8x256xf32, #tpu.memory_space<vmem>>, vector<1x8x128xf32>
      %149 = vector.shape_cast %148 : vector<1x8x128xf32> to vector<8x128xf32>
      %c0_i32_112 = arith.constant 0 : i32
      %150 = arith.addi %c0_i32_112, %139 : i32
      %151 = arith.index_cast %150 : i32 to index
      %c0_113 = arith.constant 0 : index
      %c128_114 = arith.constant 128 : index
      %152 = vector.load %arg22[%151, %c0_113, %c128_114] : memref<14x8x256xf32, #tpu.memory_space<vmem>>, vector<1x8x128xf32>
      %153 = vector.shape_cast %152 : vector<1x8x128xf32> to vector<8x128xf32>
      %c8_i32_115 = arith.constant 8 : i32
      %154 = arith.addi %c8_i32_115, %141 : i32
      %155 = arith.index_cast %154 : i32 to index
      %c0_116 = arith.constant 0 : index
      %c128_117 = arith.constant 128 : index
      %156 = vector.load %arg22[%155, %c0_116, %c128_117] : memref<14x8x256xf32, #tpu.memory_space<vmem>>, vector<1x8x128xf32>
      %157 = vector.shape_cast %156 : vector<1x8x128xf32> to vector<8x128xf32>
      %158 = tpu.concatenate %145, %149 in 0 : vector<8x128xf32>, vector<8x128xf32> -> vector<16x128xf32>
      %159 = tpu.concatenate %153, %157 in 0 : vector<8x128xf32>, vector<8x128xf32> -> vector<16x128xf32>
      %160 = arith.truncf %arg27 : vector<16x32xf32> to vector<16x32xbf16>
      %cst_118 = arith.constant dense<0.000000e+00> : vector<16x128xf32>
      %161 = tpu.matmul %160, %16, %cst_118 {dimension_numbers = #tpu.dot_dimension_numbers<[1], [0], [0], [1], [0, 0, 1, 1], [], []>} : vector<16x32xbf16>, vector<32x128xbf16>, vector<16x128xf32> -> vector<16x128xf32>
      %162 = arith.addf %158, %161 : vector<16x128xf32>
      %163 = arith.truncf %arg29 : vector<16x32xf32> to vector<16x32xbf16>
      %cst_119 = arith.constant dense<0.000000e+00> : vector<16x128xf32>
      %164 = tpu.matmul %163, %17, %cst_119 {dimension_numbers = #tpu.dot_dimension_numbers<[1], [0], [0], [1], [0, 0, 1, 1], [], []>} : vector<16x32xbf16>, vector<32x128xbf16>, vector<16x128xf32> -> vector<16x128xf32>
      %165 = arith.addf %159, %164 : vector<16x128xf32>
      %166 = vector.extract_strided_slice %162 {offsets = [0, 0], sizes = [16, 32], strides = [1, 1]} : vector<16x128xf32> to vector<16x32xf32>
      %167 = arith.negf %166 : vector<16x32xf32>
      %168 = math.exp %167 : vector<16x32xf32>
      %cst_120 = arith.constant 1.000000e+00 : f32
      %169 = vector.broadcast %cst_120 : f32 to vector<16x32xf32>
      %170 = arith.addf %169, %168 : vector<16x32xf32>
      %171 = arith.divf %169, %170 : vector<16x32xf32>
      %172 = vector.extract_strided_slice %162 {offsets = [0, 32], sizes = [16, 32], strides = [1, 1]} : vector<16x128xf32> to vector<16x32xf32>
      %173 = arith.negf %172 : vector<16x32xf32>
      %174 = math.exp %173 : vector<16x32xf32>
      %cst_121 = arith.constant 1.000000e+00 : f32
      %175 = vector.broadcast %cst_121 : f32 to vector<16x32xf32>
      %176 = arith.addf %175, %174 : vector<16x32xf32>
      %177 = arith.divf %175, %176 : vector<16x32xf32>
      %178 = vector.extract_strided_slice %162 {offsets = [0, 64], sizes = [16, 32], strides = [1, 1]} : vector<16x128xf32> to vector<16x32xf32>
      %179 = math.tanh %178 : vector<16x32xf32>
      %180 = vector.extract_strided_slice %162 {offsets = [0, 96], sizes = [16, 32], strides = [1, 1]} : vector<16x128xf32> to vector<16x32xf32>
      %181 = arith.negf %180 : vector<16x32xf32>
      %182 = math.exp %181 : vector<16x32xf32>
      %cst_122 = arith.constant 1.000000e+00 : f32
      %183 = vector.broadcast %cst_122 : f32 to vector<16x32xf32>
      %184 = arith.addf %183, %182 : vector<16x32xf32>
      %185 = arith.divf %183, %184 : vector<16x32xf32>
      %186 = arith.mulf %177, %arg28 : vector<16x32xf32>
      %187 = arith.mulf %171, %179 : vector<16x32xf32>
      %188 = arith.addf %186, %187 : vector<16x32xf32>
      %189 = math.tanh %188 : vector<16x32xf32>
      %190 = arith.mulf %185, %189 : vector<16x32xf32>
      %191 = vector.extract_strided_slice %165 {offsets = [0, 0], sizes = [16, 32], strides = [1, 1]} : vector<16x128xf32> to vector<16x32xf32>
      %192 = arith.negf %191 : vector<16x32xf32>
      %193 = math.exp %192 : vector<16x32xf32>
      %cst_123 = arith.constant 1.000000e+00 : f32
      %194 = vector.broadcast %cst_123 : f32 to vector<16x32xf32>
      %195 = arith.addf %194, %193 : vector<16x32xf32>
      %196 = arith.divf %194, %195 : vector<16x32xf32>
      %197 = vector.extract_strided_slice %165 {offsets = [0, 32], sizes = [16, 32], strides = [1, 1]} : vector<16x128xf32> to vector<16x32xf32>
      %198 = arith.negf %197 : vector<16x32xf32>
      %199 = math.exp %198 : vector<16x32xf32>
      %cst_124 = arith.constant 1.000000e+00 : f32
      %200 = vector.broadcast %cst_124 : f32 to vector<16x32xf32>
      %201 = arith.addf %200, %199 : vector<16x32xf32>
      %202 = arith.divf %200, %201 : vector<16x32xf32>
      %203 = vector.extract_strided_slice %165 {offsets = [0, 64], sizes = [16, 32], strides = [1, 1]} : vector<16x128xf32> to vector<16x32xf32>
      %204 = math.tanh %203 : vector<16x32xf32>
      %205 = vector.extract_strided_slice %165 {offsets = [0, 96], sizes = [16, 32], strides = [1, 1]} : vector<16x128xf32> to vector<16x32xf32>
      %206 = arith.negf %205 : vector<16x32xf32>
      %207 = math.exp %206 : vector<16x32xf32>
      %cst_125 = arith.constant 1.000000e+00 : f32
      %208 = vector.broadcast %cst_125 : f32 to vector<16x32xf32>
      %209 = arith.addf %208, %207 : vector<16x32xf32>
      %210 = arith.divf %208, %209 : vector<16x32xf32>
      %211 = arith.mulf %202, %arg30 : vector<16x32xf32>
      %212 = arith.mulf %196, %204 : vector<16x32xf32>
      %213 = arith.addf %211, %212 : vector<16x32xf32>
      %214 = math.tanh %213 : vector<16x32xf32>
      %215 = arith.mulf %210, %214 : vector<16x32xf32>
      %c8_i32_126 = arith.constant 8 : i32
      %216 = arith.cmpi slt, %arg26, %c8_i32_126 : i32
      %217 = vector.broadcast %216 : i1 to vector<8x1xi1>
      %c6_i32 = arith.constant 6 : i32
      %218 = arith.cmpi slt, %arg26, %c6_i32 : i32
      %219 = vector.broadcast %218 : i1 to vector<8x1xi1>
      %220 = tpu.concatenate %217, %219 in 0 : vector<8x1xi1>, vector<8x1xi1> -> vector<16x1xi1>
      %221 = vector.shape_cast %220 : vector<16x1xi1> to vector<16x1xi1>
      %222 = vector.broadcast %221 : vector<16x1xi1> to vector<16x32xi1>
      %223 = arith.select %222, %190, %arg27 : vector<16x32xi1>, vector<16x32xf32>
      %224 = vector.shape_cast %220 : vector<16x1xi1> to vector<16x1xi1>
      %225 = vector.broadcast %224 : vector<16x1xi1> to vector<16x32xi1>
      %226 = arith.select %225, %188, %arg28 : vector<16x32xi1>, vector<16x32xf32>
      %227 = vector.shape_cast %220 : vector<16x1xi1> to vector<16x1xi1>
      %228 = vector.broadcast %227 : vector<16x1xi1> to vector<16x32xi1>
      %229 = arith.select %228, %215, %arg29 : vector<16x32xi1>, vector<16x32xf32>
      %230 = vector.shape_cast %220 : vector<16x1xi1> to vector<16x1xi1>
      %231 = vector.broadcast %230 : vector<16x1xi1> to vector<16x32xi1>
      %232 = arith.select %231, %213, %arg30 : vector<16x32xi1>, vector<16x32xf32>
      %233 = vector.extract_strided_slice %223 {offsets = [0, 0], sizes = [8, 32], strides = [1, 1]} : vector<16x32xf32> to vector<8x32xf32>
      %234 = vector.shape_cast %233 : vector<8x32xf32> to vector<1x8x32xf32>
      %235 = arith.index_cast %136 : i32 to index
      %c0_127 = arith.constant 0 : index
      %c0_128 = arith.constant 0 : index
      %236 = vector.load %arg23[%235, %c0_127, %c0_128] : memref<8x8x64xf32, #tpu.memory_space<vmem>>, vector<1x8x32xf32>
      tpu.vector_store %arg23[%235, %c0_127, %c0_128], %234 {strides = array<i32>} : memref<8x8x64xf32, #tpu.memory_space<vmem>>, vector<1x8x32xf32>,
      %237 = vector.extract_strided_slice %229 {offsets = [0, 0], sizes = [8, 32], strides = [1, 1]} : vector<16x32xf32> to vector<8x32xf32>
      %238 = vector.shape_cast %237 : vector<8x32xf32> to vector<1x8x32xf32>
      %239 = arith.index_cast %139 : i32 to index
      %c0_129 = arith.constant 0 : index
      %c32 = arith.constant 32 : index
      %240 = vector.load %arg23[%239, %c0_129, %c32] : memref<8x8x64xf32, #tpu.memory_space<vmem>>, vector<1x8x32xf32>
      tpu.vector_store %arg23[%239, %c0_129, %c32], %238 {strides = array<i32>} : memref<8x8x64xf32, #tpu.memory_space<vmem>>, vector<1x8x32xf32>,
      %241 = vector.extract_strided_slice %223 {offsets = [8, 0], sizes = [8, 32], strides = [1, 1]} : vector<16x32xf32> to vector<8x32xf32>
      %242 = vector.shape_cast %241 : vector<8x32xf32> to vector<1x8x32xf32>
      %243 = arith.index_cast %137 : i32 to index
      %c0_130 = arith.constant 0 : index
      %c0_131 = arith.constant 0 : index
      %244 = vector.load %arg24[%243, %c0_130, %c0_131] : memref<6x8x64xf32, #tpu.memory_space<vmem>>, vector<1x8x32xf32>
      tpu.vector_store %arg24[%243, %c0_130, %c0_131], %242 {strides = array<i32>} : memref<6x8x64xf32, #tpu.memory_space<vmem>>, vector<1x8x32xf32>,
      %245 = vector.extract_strided_slice %229 {offsets = [8, 0], sizes = [8, 32], strides = [1, 1]} : vector<16x32xf32> to vector<8x32xf32>
      %246 = vector.shape_cast %245 : vector<8x32xf32> to vector<1x8x32xf32>
      %247 = arith.index_cast %141 : i32 to index
      %c0_132 = arith.constant 0 : index
      %c32_133 = arith.constant 32 : index
      %248 = vector.load %arg24[%247, %c0_132, %c32_133] : memref<6x8x64xf32, #tpu.memory_space<vmem>>, vector<1x8x32xf32>
      tpu.vector_store %arg24[%247, %c0_132, %c32_133], %246 {strides = array<i32>} : memref<6x8x64xf32, #tpu.memory_space<vmem>>, vector<1x8x32xf32>,
      scf.yield %223, %226, %229, %232 : vector<16x32xf32>, vector<16x32xf32>, vector<16x32xf32>, vector<16x32xf32>
    }
    %c8_i32_20 = arith.constant 8 : i32
    %c0_21 = arith.constant 0 : index
    %c0_22 = arith.constant 0 : index
    %c0_23 = arith.constant 0 : index
    %21 = vector.load %arg23[%c0_21, %c0_22, %c0_23] : memref<8x8x64xf32, #tpu.memory_space<vmem>>, vector<8x8x64xf32>
    %c0_24 = arith.constant 0 : index
    %c0_25 = arith.constant 0 : index
    %c0_26 = arith.constant 0 : index
    %22 = vector.load %arg24[%c0_24, %c0_25, %c0_26] : memref<6x8x64xf32, #tpu.memory_space<vmem>>, vector<6x8x64xf32>
    %23 = tpu.transpose %21, [1, 0, 2] : vector<8x8x64xf32> -> vector<8x8x64xf32>
    %24 = tpu.transpose %22, [1, 0, 2] : vector<6x8x64xf32> -> vector<8x6x64xf32>
    %25 = arith.truncf %23 : vector<8x8x64xf32> to vector<8x8x64xbf16>
    %26 = arith.truncf %24 : vector<8x6x64xf32> to vector<8x6x64xbf16>
    "tpu.trace_start"() <{level = 10 : i32, message = "btd,bjd->btj"}> : () -> ()
    %cst_27 = arith.constant dense<0.000000e+00> : vector<8x8x6xf32>
    %27 = tpu.matmul %25, %26, %cst_27 {dimension_numbers = #tpu.dot_dimension_numbers<[2], [2], [1], [1], [0, 0, 0, 1, 1, 1], [0], [0]>} : vector<8x8x64xbf16>, vector<8x6x64xbf16>, vector<8x8x6xf32> -> vector<8x8x6xf32>
    "tpu.trace_stop"() : () -> ()
    %cst_28 = arith.constant dense<0xFF800000> : vector<8x8xf32>
    %28 = vector.multi_reduction <maximumf>, %27, %cst_28 [2] : vector<8x8x6xf32> to vector<8x8xf32>
    %29 = vector.shape_cast %28 : vector<8x8xf32> to vector<8x8x1xf32>
    %30 = vector.broadcast %29 : vector<8x8x1xf32> to vector<8x8x6xf32>
    %31 = arith.subf %27, %30 : vector<8x8x6xf32>
    %32 = math.exp %31 : vector<8x8x6xf32>
    %cst_29 = arith.constant dense<0.000000e+00> : vector<8x8xf32>
    %33 = vector.multi_reduction <add>, %32, %cst_29 [2] : vector<8x8x6xf32> to vector<8x8xf32>
    %34 = vector.shape_cast %33 : vector<8x8xf32> to vector<8x8x1xf32>
    %35 = tpu.reciprocal %34 {approx = true} : vector<8x8x1xf32> -> vector<8x8x1xf32>
    %36 = vector.broadcast %35 : vector<8x8x1xf32> to vector<8x8x6xf32>
    %37 = arith.mulf %32, %36 : vector<8x8x6xf32>
    %38 = arith.truncf %37 : vector<8x8x6xf32> to vector<8x8x6xbf16>
    %39 = arith.truncf %24 : vector<8x6x64xf32> to vector<8x6x64xbf16>
    "tpu.trace_start"() <{level = 10 : i32, message = "btj,bjd->btd"}> : () -> ()
    %cst_30 = arith.constant dense<0.000000e+00> : vector<8x8x64xf32>
    %40 = tpu.matmul %38, %39, %cst_30 {dimension_numbers = #tpu.dot_dimension_numbers<[2], [1], [1], [2], [0, 0, 0, 1, 1, 2], [0], [0]>} : vector<8x8x6xbf16>, vector<8x6x64xbf16>, vector<8x8x64xf32> -> vector<8x8x64xf32>
    "tpu.trace_stop"() : () -> ()
    %cst_31 = arith.constant dense<0xFF800000> : vector<8x1xf32>
    %41 = vector.multi_reduction <maximumf>, %29, %cst_31 [1] : vector<8x8x1xf32> to vector<8x1xf32>
    %42 = vector.shape_cast %41 : vector<8x1xf32> to vector<8x1x1xf32>
    %43 = vector.broadcast %42 : vector<8x1x1xf32> to vector<8x8x1xf32>
    %44 = arith.subf %29, %43 : vector<8x8x1xf32>
    %45 = math.exp %44 : vector<8x8x1xf32>
    %cst_32 = arith.constant dense<0.000000e+00> : vector<8x1xf32>
    %46 = vector.multi_reduction <add>, %45, %cst_32 [1] : vector<8x8x1xf32> to vector<8x1xf32>
    %47 = vector.shape_cast %46 : vector<8x1xf32> to vector<8x1x1xf32>
    %48 = tpu.reciprocal %47 {approx = true} : vector<8x1x1xf32> -> vector<8x1x1xf32>
    %49 = vector.broadcast %48 : vector<8x1x1xf32> to vector<8x8x1xf32>
    %50 = arith.mulf %45, %49 : vector<8x8x1xf32>
    %51 = vector.broadcast %50 : vector<8x8x1xf32> to vector<8x8x64xf32>
    %52 = arith.mulf %51, %23 : vector<8x8x64xf32>
    %cst_33 = arith.constant dense<0.000000e+00> : vector<8x64xf32>
    %53 = vector.multi_reduction <add>, %52, %cst_33 [1] : vector<8x8x64xf32> to vector<8x64xf32>
    %54 = tpu.transpose %40, [1, 0, 2] : vector<8x8x64xf32> -> vector<8x8x64xf32>
    %55 = arith.mulf %21, %54 : vector<8x8x64xf32>
    %56 = vector.shape_cast %53 : vector<8x64xf32> to vector<1x8x64xf32>
    %57 = vector.broadcast %56 : vector<1x8x64xf32> to vector<8x8x64xf32>
    %58 = arith.mulf %21, %57 : vector<8x8x64xf32>
    %c0_34 = arith.constant 0 : index
    %c0_35 = arith.constant 0 : index
    %59 = vector.load %arg7[%c0_34, %c0_35] : memref<256x256xbf16, #tpu.memory_space<vmem>>, vector<64x256xbf16>
    %60 = vector.shape_cast %21 : vector<8x8x64xf32> to vector<64x64xf32>
    %61 = arith.truncf %60 : vector<64x64xf32> to vector<64x64xbf16>
    %cst_36 = arith.constant dense<0.000000e+00> : vector<64x256xf32>
    %62 = tpu.matmul %61, %59, %cst_36 {dimension_numbers = #tpu.dot_dimension_numbers<[1], [0], [0], [1], [0, 0, 1, 1], [], []>} : vector<64x64xbf16>, vector<64x256xbf16>, vector<64x256xf32> -> vector<64x256xf32>
    %c64 = arith.constant 64 : index
    %c0_37 = arith.constant 0 : index
    %63 = vector.load %arg7[%c64, %c0_37] : memref<256x256xbf16, #tpu.memory_space<vmem>>, vector<64x256xbf16>
    %64 = vector.shape_cast %54 : vector<8x8x64xf32> to vector<64x64xf32>
    %65 = arith.truncf %64 : vector<64x64xf32> to vector<64x64xbf16>
    %cst_38 = arith.constant dense<0.000000e+00> : vector<64x256xf32>
    %66 = tpu.matmul %65, %63, %cst_38 {dimension_numbers = #tpu.dot_dimension_numbers<[1], [0], [0], [1], [0, 0, 1, 1], [], []>} : vector<64x64xbf16>, vector<64x256xbf16>, vector<64x256xf32> -> vector<64x256xf32>
    %67 = arith.addf %62, %66 : vector<64x256xf32>
    %c128 = arith.constant 128 : index
    %c0_39 = arith.constant 0 : index
    %68 = vector.load %arg7[%c128, %c0_39] : memref<256x256xbf16, #tpu.memory_space<vmem>>, vector<64x256xbf16>
    %69 = vector.shape_cast %55 : vector<8x8x64xf32> to vector<64x64xf32>
    %70 = arith.truncf %69 : vector<64x64xf32> to vector<64x64xbf16>
    %cst_40 = arith.constant dense<0.000000e+00> : vector<64x256xf32>
    %71 = tpu.matmul %70, %68, %cst_40 {dimension_numbers = #tpu.dot_dimension_numbers<[1], [0], [0], [1], [0, 0, 1, 1], [], []>} : vector<64x64xbf16>, vector<64x256xbf16>, vector<64x256xf32> -> vector<64x256xf32>
    %72 = arith.addf %67, %71 : vector<64x256xf32>
    %c192 = arith.constant 192 : index
    %c0_41 = arith.constant 0 : index
    %73 = vector.load %arg7[%c192, %c0_41] : memref<256x256xbf16, #tpu.memory_space<vmem>>, vector<64x256xbf16>
    %74 = vector.shape_cast %58 : vector<8x8x64xf32> to vector<64x64xf32>
    %75 = arith.truncf %74 : vector<64x64xf32> to vector<64x64xbf16>
    %cst_42 = arith.constant dense<0.000000e+00> : vector<64x256xf32>
    %76 = tpu.matmul %75, %73, %cst_42 {dimension_numbers = #tpu.dot_dimension_numbers<[1], [0], [0], [1], [0, 0, 1, 1], [], []>} : vector<64x64xbf16>, vector<64x256xbf16>, vector<64x256xf32> -> vector<64x256xf32>
    %77 = arith.addf %72, %76 : vector<64x256xf32>
    %c0_43 = arith.constant 0 : index
    %c0_44 = arith.constant 0 : index
    %78 = vector.load %arg10[%c0_43, %c0_44] : memref<1x256xf32, #tpu.memory_space<vmem>>, vector<1x256xf32>
    %79 = vector.broadcast %78 : vector<1x256xf32> to vector<64x256xf32>
    %80 = arith.addf %77, %79 : vector<64x256xf32>
    %81 = vector.shape_cast %80 : vector<64x256xf32> to vector<8x8x256xf32>
    %c0_45 = arith.constant 0 : index
    %c0_46 = arith.constant 0 : index
    %c0_47 = arith.constant 0 : index
    %82 = vector.load %arg22[%c0_45, %c0_46, %c0_47] : memref<14x8x256xf32, #tpu.memory_space<vmem>>, vector<8x8x256xf32>
    tpu.vector_store %arg22[%c0_45, %c0_46, %c0_47], %81 {strides = array<i32>} : memref<14x8x256xf32, #tpu.memory_space<vmem>>, vector<8x8x256xf32>,
    %c0_48 = arith.constant 0 : index
    %c0_49 = arith.constant 0 : index
    %83 = vector.load %arg8[%c0_48, %c0_49] : memref<32x128xbf16, #tpu.memory_space<vmem>>, vector<32x128xbf16>
    %c0_50 = arith.constant 0 : index
    %c0_51 = arith.constant 0 : index
    %84 = vector.load %arg9[%c0_50, %c0_51] : memref<32x128xbf16, #tpu.memory_space<vmem>>, vector<32x128xbf16>
    %cst_52 = arith.constant 0.000000e+00 : f32
    %85 = vector.broadcast %cst_52 : f32 to vector<8x32xf32>
    %c0_i32_53 = arith.constant 0 : i32
    %c8_i32_54 = arith.constant 8 : i32
    %86 = arith.addi %c0_i32_53, %c8_i32_54 : i32
    %c1_i32_55 = arith.constant 1 : i32
    %87:4 = scf.for %arg26 = %c0_i32_53 to %86 step %c1_i32_55 iter_args(%arg27 = %85, %arg28 = %85, %arg29 = %85, %arg30 = %85) -> (vector<8x32xf32>, vector<8x32xf32>, vector<8x32xf32>, vector<8x32xf32>)  : i32 {
      %c7_i32 = arith.constant 7 : i32
      %136 = arith.minsi %arg26, %c7_i32 : i32
      %c7_i32_102 = arith.constant 7 : i32
      %137 = arith.subi %c7_i32_102, %arg26 : i32
      %c0_i32_103 = arith.constant 0 : i32
      %138 = arith.maxsi %137, %c0_i32_103 : i32
      %c0_i32_104 = arith.constant 0 : i32
      %139 = arith.addi %c0_i32_104, %136 : i32
      %140 = arith.index_cast %139 : i32 to index
      %c0_105 = arith.constant 0 : index
      %c0_106 = arith.constant 0 : index
      %141 = vector.load %arg22[%140, %c0_105, %c0_106] : memref<14x8x256xf32, #tpu.memory_space<vmem>>, vector<1x8x128xf32>
      %142 = vector.shape_cast %141 : vector<1x8x128xf32> to vector<8x128xf32>
      %c0_i32_107 = arith.constant 0 : i32
      %143 = arith.addi %c0_i32_107, %138 : i32
      %144 = arith.index_cast %143 : i32 to index
      %c0_108 = arith.constant 0 : index
      %c128_109 = arith.constant 128 : index
      %145 = vector.load %arg22[%144, %c0_108, %c128_109] : memref<14x8x256xf32, #tpu.memory_space<vmem>>, vector<1x8x128xf32>
      %146 = vector.shape_cast %145 : vector<1x8x128xf32> to vector<8x128xf32>
      %147 = arith.truncf %arg27 : vector<8x32xf32> to vector<8x32xbf16>
      %cst_110 = arith.constant dense<0.000000e+00> : vector<8x128xf32>
      %148 = tpu.matmul %147, %83, %cst_110 {dimension_numbers = #tpu.dot_dimension_numbers<[1], [0], [0], [1], [0, 0, 1, 1], [], []>} : vector<8x32xbf16>, vector<32x128xbf16>, vector<8x128xf32> -> vector<8x128xf32>
      %149 = arith.addf %142, %148 : vector<8x128xf32>
      %150 = arith.truncf %arg29 : vector<8x32xf32> to vector<8x32xbf16>
      %cst_111 = arith.constant dense<0.000000e+00> : vector<8x128xf32>
      %151 = tpu.matmul %150, %84, %cst_111 {dimension_numbers = #tpu.dot_dimension_numbers<[1], [0], [0], [1], [0, 0, 1, 1], [], []>} : vector<8x32xbf16>, vector<32x128xbf16>, vector<8x128xf32> -> vector<8x128xf32>
      %152 = arith.addf %146, %151 : vector<8x128xf32>
      %153 = vector.extract_strided_slice %149 {offsets = [0, 0], sizes = [8, 32], strides = [1, 1]} : vector<8x128xf32> to vector<8x32xf32>
      %154 = arith.negf %153 : vector<8x32xf32>
      %155 = math.exp %154 : vector<8x32xf32>
      %cst_112 = arith.constant 1.000000e+00 : f32
      %156 = vector.broadcast %cst_112 : f32 to vector<8x32xf32>
      %157 = arith.addf %156, %155 : vector<8x32xf32>
      %158 = arith.divf %156, %157 : vector<8x32xf32>
      %159 = vector.extract_strided_slice %149 {offsets = [0, 32], sizes = [8, 32], strides = [1, 1]} : vector<8x128xf32> to vector<8x32xf32>
      %160 = arith.negf %159 : vector<8x32xf32>
      %161 = math.exp %160 : vector<8x32xf32>
      %cst_113 = arith.constant 1.000000e+00 : f32
      %162 = vector.broadcast %cst_113 : f32 to vector<8x32xf32>
      %163 = arith.addf %162, %161 : vector<8x32xf32>
      %164 = arith.divf %162, %163 : vector<8x32xf32>
      %165 = vector.extract_strided_slice %149 {offsets = [0, 64], sizes = [8, 32], strides = [1, 1]} : vector<8x128xf32> to vector<8x32xf32>
      %166 = math.tanh %165 : vector<8x32xf32>
      %167 = vector.extract_strided_slice %149 {offsets = [0, 96], sizes = [8, 32], strides = [1, 1]} : vector<8x128xf32> to vector<8x32xf32>
      %168 = arith.negf %167 : vector<8x32xf32>
      %169 = math.exp %168 : vector<8x32xf32>
      %cst_114 = arith.constant 1.000000e+00 : f32
      %170 = vector.broadcast %cst_114 : f32 to vector<8x32xf32>
      %171 = arith.addf %170, %169 : vector<8x32xf32>
      %172 = arith.divf %170, %171 : vector<8x32xf32>
      %173 = arith.mulf %164, %arg28 : vector<8x32xf32>
      %174 = arith.mulf %158, %166 : vector<8x32xf32>
      %175 = arith.addf %173, %174 : vector<8x32xf32>
      %176 = math.tanh %175 : vector<8x32xf32>
      %177 = arith.mulf %172, %176 : vector<8x32xf32>
      %178 = vector.extract_strided_slice %152 {offsets = [0, 0], sizes = [8, 32], strides = [1, 1]} : vector<8x128xf32> to vector<8x32xf32>
      %179 = arith.negf %178 : vector<8x32xf32>
      %180 = math.exp %179 : vector<8x32xf32>
      %cst_115 = arith.constant 1.000000e+00 : f32
      %181 = vector.broadcast %cst_115 : f32 to vector<8x32xf32>
      %182 = arith.addf %181, %180 : vector<8x32xf32>
      %183 = arith.divf %181, %182 : vector<8x32xf32>
      %184 = vector.extract_strided_slice %152 {offsets = [0, 32], sizes = [8, 32], strides = [1, 1]} : vector<8x128xf32> to vector<8x32xf32>
      %185 = arith.negf %184 : vector<8x32xf32>
      %186 = math.exp %185 : vector<8x32xf32>
      %cst_116 = arith.constant 1.000000e+00 : f32
      %187 = vector.broadcast %cst_116 : f32 to vector<8x32xf32>
      %188 = arith.addf %187, %186 : vector<8x32xf32>
      %189 = arith.divf %187, %188 : vector<8x32xf32>
      %190 = vector.extract_strided_slice %152 {offsets = [0, 64], sizes = [8, 32], strides = [1, 1]} : vector<8x128xf32> to vector<8x32xf32>
      %191 = math.tanh %190 : vector<8x32xf32>
      %192 = vector.extract_strided_slice %152 {offsets = [0, 96], sizes = [8, 32], strides = [1, 1]} : vector<8x128xf32> to vector<8x32xf32>
      %193 = arith.negf %192 : vector<8x32xf32>
      %194 = math.exp %193 : vector<8x32xf32>
      %cst_117 = arith.constant 1.000000e+00 : f32
      %195 = vector.broadcast %cst_117 : f32 to vector<8x32xf32>
      %196 = arith.addf %195, %194 : vector<8x32xf32>
      %197 = arith.divf %195, %196 : vector<8x32xf32>
      %198 = arith.mulf %189, %arg30 : vector<8x32xf32>
      %199 = arith.mulf %183, %191 : vector<8x32xf32>
      %200 = arith.addf %198, %199 : vector<8x32xf32>
      %201 = math.tanh %200 : vector<8x32xf32>
      %202 = arith.mulf %197, %201 : vector<8x32xf32>
      %203 = vector.shape_cast %177 : vector<8x32xf32> to vector<1x8x32xf32>
      %204 = arith.index_cast %136 : i32 to index
      %c0_118 = arith.constant 0 : index
      %c0_119 = arith.constant 0 : index
      %205 = vector.load %arg25[%204, %c0_118, %c0_119] : memref<8x8x64xf32, #tpu.memory_space<vmem>>, vector<1x8x32xf32>
      tpu.vector_store %arg25[%204, %c0_118, %c0_119], %203 {strides = array<i32>} : memref<8x8x64xf32, #tpu.memory_space<vmem>>, vector<1x8x32xf32>,
      %206 = vector.shape_cast %202 : vector<8x32xf32> to vector<1x8x32xf32>
      %207 = arith.index_cast %138 : i32 to index
      %c0_120 = arith.constant 0 : index
      %c32 = arith.constant 32 : index
      %208 = vector.load %arg25[%207, %c0_120, %c32] : memref<8x8x64xf32, #tpu.memory_space<vmem>>, vector<1x8x32xf32>
      tpu.vector_store %arg25[%207, %c0_120, %c32], %206 {strides = array<i32>} : memref<8x8x64xf32, #tpu.memory_space<vmem>>, vector<1x8x32xf32>,
      scf.yield %177, %175, %202, %200 : vector<8x32xf32>, vector<8x32xf32>, vector<8x32xf32>, vector<8x32xf32>
    }
    %c8_i32_56 = arith.constant 8 : i32
    %c0_57 = arith.constant 0 : index
    %c0_58 = arith.constant 0 : index
    %c0_59 = arith.constant 0 : index
    %88 = vector.load %arg25[%c0_57, %c0_58, %c0_59] : memref<8x8x64xf32, #tpu.memory_space<vmem>>, vector<8x8x64xf32>
    %89 = vector.shape_cast %88 : vector<8x8x64xf32> to vector<64x64xf32>
    %90 = arith.truncf %89 : vector<64x64xf32> to vector<64x64xbf16>
    %c0_60 = arith.constant 0 : index
    %c0_61 = arith.constant 0 : index
    %91 = vector.load %arg11[%c0_60, %c0_61] : memref<64x256xbf16, #tpu.memory_space<vmem>>, vector<64x256xbf16>
    %cst_62 = arith.constant dense<0.000000e+00> : vector<64x256xf32>
    %92 = tpu.matmul %90, %91, %cst_62 {dimension_numbers = #tpu.dot_dimension_numbers<[1], [0], [0], [1], [0, 0, 1, 1], [], []>} : vector<64x64xbf16>, vector<64x256xbf16>, vector<64x256xf32> -> vector<64x256xf32>
    %c0_63 = arith.constant 0 : index
    %c0_64 = arith.constant 0 : index
    %93 = vector.load %arg14[%c0_63, %c0_64] : memref<1x256xf32, #tpu.memory_space<vmem>>, vector<1x256xf32>
    %94 = vector.broadcast %93 : vector<1x256xf32> to vector<64x256xf32>
    %95 = arith.addf %92, %94 : vector<64x256xf32>
    %96 = vector.shape_cast %95 : vector<64x256xf32> to vector<8x8x256xf32>
    %c0_65 = arith.constant 0 : index
    %c0_66 = arith.constant 0 : index
    %c0_67 = arith.constant 0 : index
    %97 = vector.load %arg22[%c0_65, %c0_66, %c0_67] : memref<14x8x256xf32, #tpu.memory_space<vmem>>, vector<8x8x256xf32>
    tpu.vector_store %arg22[%c0_65, %c0_66, %c0_67], %96 {strides = array<i32>} : memref<14x8x256xf32, #tpu.memory_space<vmem>>, vector<8x8x256xf32>,
    %c0_68 = arith.constant 0 : index
    %c0_69 = arith.constant 0 : index
    %98 = vector.load %arg12[%c0_68, %c0_69] : memref<32x128xbf16, #tpu.memory_space<vmem>>, vector<32x128xbf16>
    %c0_70 = arith.constant 0 : index
    %c0_71 = arith.constant 0 : index
    %99 = vector.load %arg13[%c0_70, %c0_71] : memref<32x128xbf16, #tpu.memory_space<vmem>>, vector<32x128xbf16>
    %cst_72 = arith.constant 0.000000e+00 : f32
    %100 = vector.broadcast %cst_72 : f32 to vector<8x32xf32>
    %c0_i32_73 = arith.constant 0 : i32
    %c8_i32_74 = arith.constant 8 : i32
    %101 = arith.addi %c0_i32_73, %c8_i32_74 : i32
    %c1_i32_75 = arith.constant 1 : i32
    %102:4 = scf.for %arg26 = %c0_i32_73 to %101 step %c1_i32_75 iter_args(%arg27 = %100, %arg28 = %100, %arg29 = %100, %arg30 = %100) -> (vector<8x32xf32>, vector<8x32xf32>, vector<8x32xf32>, vector<8x32xf32>)  : i32 {
      %c7_i32 = arith.constant 7 : i32
      %136 = arith.minsi %arg26, %c7_i32 : i32
      %c7_i32_102 = arith.constant 7 : i32
      %137 = arith.subi %c7_i32_102, %arg26 : i32
      %c0_i32_103 = arith.constant 0 : i32
      %138 = arith.maxsi %137, %c0_i32_103 : i32
      %c0_i32_104 = arith.constant 0 : i32
      %139 = arith.addi %c0_i32_104, %136 : i32
      %140 = arith.index_cast %139 : i32 to index
      %c0_105 = arith.constant 0 : index
      %c0_106 = arith.constant 0 : index
      %141 = vector.load %arg22[%140, %c0_105, %c0_106] : memref<14x8x256xf32, #tpu.memory_space<vmem>>, vector<1x8x128xf32>
      %142 = vector.shape_cast %141 : vector<1x8x128xf32> to vector<8x128xf32>
      %c0_i32_107 = arith.constant 0 : i32
      %143 = arith.addi %c0_i32_107, %138 : i32
      %144 = arith.index_cast %143 : i32 to index
      %c0_108 = arith.constant 0 : index
      %c128_109 = arith.constant 128 : index
      %145 = vector.load %arg22[%144, %c0_108, %c128_109] : memref<14x8x256xf32, #tpu.memory_space<vmem>>, vector<1x8x128xf32>
      %146 = vector.shape_cast %145 : vector<1x8x128xf32> to vector<8x128xf32>
      %147 = arith.truncf %arg27 : vector<8x32xf32> to vector<8x32xbf16>
      %cst_110 = arith.constant dense<0.000000e+00> : vector<8x128xf32>
      %148 = tpu.matmul %147, %98, %cst_110 {dimension_numbers = #tpu.dot_dimension_numbers<[1], [0], [0], [1], [0, 0, 1, 1], [], []>} : vector<8x32xbf16>, vector<32x128xbf16>, vector<8x128xf32> -> vector<8x128xf32>
      %149 = arith.addf %142, %148 : vector<8x128xf32>
      %150 = arith.truncf %arg29 : vector<8x32xf32> to vector<8x32xbf16>
      %cst_111 = arith.constant dense<0.000000e+00> : vector<8x128xf32>
      %151 = tpu.matmul %150, %99, %cst_111 {dimension_numbers = #tpu.dot_dimension_numbers<[1], [0], [0], [1], [0, 0, 1, 1], [], []>} : vector<8x32xbf16>, vector<32x128xbf16>, vector<8x128xf32> -> vector<8x128xf32>
      %152 = arith.addf %146, %151 : vector<8x128xf32>
      %153 = vector.extract_strided_slice %149 {offsets = [0, 0], sizes = [8, 32], strides = [1, 1]} : vector<8x128xf32> to vector<8x32xf32>
      %154 = arith.negf %153 : vector<8x32xf32>
      %155 = math.exp %154 : vector<8x32xf32>
      %cst_112 = arith.constant 1.000000e+00 : f32
      %156 = vector.broadcast %cst_112 : f32 to vector<8x32xf32>
      %157 = arith.addf %156, %155 : vector<8x32xf32>
      %158 = arith.divf %156, %157 : vector<8x32xf32>
      %159 = vector.extract_strided_slice %149 {offsets = [0, 32], sizes = [8, 32], strides = [1, 1]} : vector<8x128xf32> to vector<8x32xf32>
      %160 = arith.negf %159 : vector<8x32xf32>
      %161 = math.exp %160 : vector<8x32xf32>
      %cst_113 = arith.constant 1.000000e+00 : f32
      %162 = vector.broadcast %cst_113 : f32 to vector<8x32xf32>
      %163 = arith.addf %162, %161 : vector<8x32xf32>
      %164 = arith.divf %162, %163 : vector<8x32xf32>
      %165 = vector.extract_strided_slice %149 {offsets = [0, 64], sizes = [8, 32], strides = [1, 1]} : vector<8x128xf32> to vector<8x32xf32>
      %166 = math.tanh %165 : vector<8x32xf32>
      %167 = vector.extract_strided_slice %149 {offsets = [0, 96], sizes = [8, 32], strides = [1, 1]} : vector<8x128xf32> to vector<8x32xf32>
      %168 = arith.negf %167 : vector<8x32xf32>
      %169 = math.exp %168 : vector<8x32xf32>
      %cst_114 = arith.constant 1.000000e+00 : f32
      %170 = vector.broadcast %cst_114 : f32 to vector<8x32xf32>
      %171 = arith.addf %170, %169 : vector<8x32xf32>
      %172 = arith.divf %170, %171 : vector<8x32xf32>
      %173 = arith.mulf %164, %arg28 : vector<8x32xf32>
      %174 = arith.mulf %158, %166 : vector<8x32xf32>
      %175 = arith.addf %173, %174 : vector<8x32xf32>
      %176 = math.tanh %175 : vector<8x32xf32>
      %177 = arith.mulf %172, %176 : vector<8x32xf32>
      %178 = vector.extract_strided_slice %152 {offsets = [0, 0], sizes = [8, 32], strides = [1, 1]} : vector<8x128xf32> to vector<8x32xf32>
      %179 = arith.negf %178 : vector<8x32xf32>
      %180 = math.exp %179 : vector<8x32xf32>
      %cst_115 = arith.constant 1.000000e+00 : f32
      %181 = vector.broadcast %cst_115 : f32 to vector<8x32xf32>
      %182 = arith.addf %181, %180 : vector<8x32xf32>
      %183 = arith.divf %181, %182 : vector<8x32xf32>
      %184 = vector.extract_strided_slice %152 {offsets = [0, 32], sizes = [8, 32], strides = [1, 1]} : vector<8x128xf32> to vector<8x32xf32>
      %185 = arith.negf %184 : vector<8x32xf32>
      %186 = math.exp %185 : vector<8x32xf32>
      %cst_116 = arith.constant 1.000000e+00 : f32
      %187 = vector.broadcast %cst_116 : f32 to vector<8x32xf32>
      %188 = arith.addf %187, %186 : vector<8x32xf32>
      %189 = arith.divf %187, %188 : vector<8x32xf32>
      %190 = vector.extract_strided_slice %152 {offsets = [0, 64], sizes = [8, 32], strides = [1, 1]} : vector<8x128xf32> to vector<8x32xf32>
      %191 = math.tanh %190 : vector<8x32xf32>
      %192 = vector.extract_strided_slice %152 {offsets = [0, 96], sizes = [8, 32], strides = [1, 1]} : vector<8x128xf32> to vector<8x32xf32>
      %193 = arith.negf %192 : vector<8x32xf32>
      %194 = math.exp %193 : vector<8x32xf32>
      %cst_117 = arith.constant 1.000000e+00 : f32
      %195 = vector.broadcast %cst_117 : f32 to vector<8x32xf32>
      %196 = arith.addf %195, %194 : vector<8x32xf32>
      %197 = arith.divf %195, %196 : vector<8x32xf32>
      %198 = arith.mulf %189, %arg30 : vector<8x32xf32>
      %199 = arith.mulf %183, %191 : vector<8x32xf32>
      %200 = arith.addf %198, %199 : vector<8x32xf32>
      %201 = math.tanh %200 : vector<8x32xf32>
      %202 = arith.mulf %197, %201 : vector<8x32xf32>
      %203 = vector.shape_cast %177 : vector<8x32xf32> to vector<1x8x32xf32>
      %204 = arith.index_cast %136 : i32 to index
      %c0_118 = arith.constant 0 : index
      %c0_119 = arith.constant 0 : index
      %205 = vector.load %arg23[%204, %c0_118, %c0_119] : memref<8x8x64xf32, #tpu.memory_space<vmem>>, vector<1x8x32xf32>
      tpu.vector_store %arg23[%204, %c0_118, %c0_119], %203 {strides = array<i32>} : memref<8x8x64xf32, #tpu.memory_space<vmem>>, vector<1x8x32xf32>,
      %206 = vector.shape_cast %202 : vector<8x32xf32> to vector<1x8x32xf32>
      %207 = arith.index_cast %138 : i32 to index
      %c0_120 = arith.constant 0 : index
      %c32 = arith.constant 32 : index
      %208 = vector.load %arg23[%207, %c0_120, %c32] : memref<8x8x64xf32, #tpu.memory_space<vmem>>, vector<1x8x32xf32>
      tpu.vector_store %arg23[%207, %c0_120, %c32], %206 {strides = array<i32>} : memref<8x8x64xf32, #tpu.memory_space<vmem>>, vector<1x8x32xf32>,
      scf.yield %177, %175, %202, %200 : vector<8x32xf32>, vector<8x32xf32>, vector<8x32xf32>, vector<8x32xf32>
    }
    %c8_i32_76 = arith.constant 8 : i32
    %c0_77 = arith.constant 0 : index
    %c0_78 = arith.constant 0 : index
    %c0_79 = arith.constant 0 : index
    %103 = vector.load %arg23[%c0_77, %c0_78, %c0_79] : memref<8x8x64xf32, #tpu.memory_space<vmem>>, vector<8x8x64xf32>
    %104 = vector.extract_strided_slice %103 {offsets = [7, 0, 0], sizes = [1, 8, 64], strides = [1, 1, 1]} : vector<8x8x64xf32> to vector<1x8x64xf32>
    %105 = vector.shape_cast %104 : vector<1x8x64xf32> to vector<8x64xf32>
    %cst_80 = arith.constant dense<0xFF800000> : vector<8x64xf32>
    %106 = vector.multi_reduction <maximumf>, %103, %cst_80 [0] : vector<8x8x64xf32> to vector<8x64xf32>
    %cst_81 = arith.constant dense<0.000000e+00> : vector<8x64xf32>
    %107 = vector.multi_reduction <add>, %103, %cst_81 [0] : vector<8x8x64xf32> to vector<8x64xf32>
    %cst_82 = arith.constant 8.000000e+00 : f32
    %108 = vector.broadcast %cst_82 : f32 to vector<8x64xf32>
    %109 = arith.divf %107, %108 : vector<8x64xf32>
    %110 = tpu.concatenate %105, %106, %109 in 1 : vector<8x64xf32>, vector<8x64xf32>, vector<8x64xf32> -> vector<8x192xf32>
    %111 = arith.truncf %110 : vector<8x192xf32> to vector<8x192xbf16>
    %c0_83 = arith.constant 0 : index
    %c0_84 = arith.constant 0 : index
    %112 = vector.load %arg15[%c0_83, %c0_84] : memref<192x32xbf16, #tpu.memory_space<vmem>>, vector<192x32xbf16>
    %cst_85 = arith.constant dense<0.000000e+00> : vector<8x32xf32>
    %113 = tpu.matmul %111, %112, %cst_85 {dimension_numbers = #tpu.dot_dimension_numbers<[1], [0], [0], [1], [0, 0, 1, 1], [], []>} : vector<8x192xbf16>, vector<192x32xbf16>, vector<8x32xf32> -> vector<8x32xf32>
    %c0_86 = arith.constant 0 : index
    %c0_87 = arith.constant 0 : index
    %114 = vector.load %arg16[%c0_86, %c0_87] : memref<1x32xf32, #tpu.memory_space<vmem>>, vector<1x32xf32>
    %115 = vector.broadcast %114 : vector<1x32xf32> to vector<8x32xf32>
    %116 = arith.addf %113, %115 : vector<8x32xf32>
    %cst_88 = arith.constant 0.000000e+00 : f32
    %117 = vector.broadcast %cst_88 : f32 to vector<8x32xf32>
    %118 = arith.maximumf %116, %117 : vector<8x32xf32>
    %119 = arith.truncf %118 : vector<8x32xf32> to vector<8x32xbf16>
    %c0_89 = arith.constant 0 : index
    %c0_90 = arith.constant 0 : index
    %120 = vector.load %arg17[%c0_89, %c0_90] : memref<32x32xbf16, #tpu.memory_space<vmem>>, vector<32x32xbf16>
    %cst_91 = arith.constant dense<0.000000e+00> : vector<8x32xf32>
    %121 = tpu.matmul %119, %120, %cst_91 {dimension_numbers = #tpu.dot_dimension_numbers<[1], [0], [0], [1], [0, 0, 1, 1], [], []>} : vector<8x32xbf16>, vector<32x32xbf16>, vector<8x32xf32> -> vector<8x32xf32>
    %c0_92 = arith.constant 0 : index
    %c0_93 = arith.constant 0 : index
    %122 = vector.load %arg18[%c0_92, %c0_93] : memref<1x32xf32, #tpu.memory_space<vmem>>, vector<1x32xf32>
    %123 = vector.broadcast %122 : vector<1x32xf32> to vector<8x32xf32>
    %124 = arith.addf %121, %123 : vector<8x32xf32>
    %cst_94 = arith.constant 0.000000e+00 : f32
    %125 = vector.broadcast %cst_94 : f32 to vector<8x32xf32>
    %126 = arith.maximumf %124, %125 : vector<8x32xf32>
    %c0_95 = arith.constant 0 : index
    %c0_96 = arith.constant 0 : index
    %127 = vector.load %arg19[%c0_95, %c0_96] : memref<1x32xf32, #tpu.memory_space<vmem>>, vector<1x32xf32>
    %128 = vector.broadcast %127 : vector<1x32xf32> to vector<8x32xf32>
    %129 = arith.mulf %126, %128 : vector<8x32xf32>
    %cst_97 = arith.constant dense<0.000000e+00> : vector<8xf32>
    %130 = vector.multi_reduction <add>, %129, %cst_97 [1] : vector<8x32xf32> to vector<8xf32>
    %131 = vector.shape_cast %130 : vector<8xf32> to vector<8x1xf32>
    %c0_98 = arith.constant 0 : index
    %c0_99 = arith.constant 0 : index
    %132 = vector.load %arg20[%c0_98, %c0_99] : memref<1x1xf32, #tpu.memory_space<vmem>>, vector<1x1xf32>
    %133 = vector.broadcast %132 : vector<1x1xf32> to vector<8x1xf32>
    %134 = arith.addf %131, %133 : vector<8x1xf32>
    %c0_100 = arith.constant 0 : index
    %c0_101 = arith.constant 0 : index
    %135 = vector.load %arg21[%c0_100, %c0_101] : memref<8x1xf32, #tpu.memory_space<vmem>>, vector<8x1xf32>
    tpu.vector_store %arg21[%c0_100, %c0_101], %134 {strides = array<i32>} : memref<8x1xf32, #tpu.memory_space<vmem>>, vector<8x1xf32>,
    return
  }
  func.func @transform_0(%arg0: i32) -> (i32, i32, i32) {
    %c0_i32 = arith.constant 0 : i32
    %c0_i32_0 = arith.constant 0 : i32
    %c0_i32_1 = arith.constant 0 : i32
    return %c0_i32, %arg0, %c0_i32_0 : i32, i32, i32
  }
  func.func @transform_1(%arg0: i32) -> (i32, i32, i32) {
    %c0_i32 = arith.constant 0 : i32
    %c0_i32_0 = arith.constant 0 : i32
    %c0_i32_1 = arith.constant 0 : i32
    return %c0_i32, %arg0, %c0_i32_0 : i32, i32, i32
  }
  func.func @transform_2(%arg0: i32) -> (i32, i32) {
    %c0_i32 = arith.constant 0 : i32
    %c0_i32_0 = arith.constant 0 : i32
    %c0_i32_1 = arith.constant 0 : i32
    return %c0_i32, %c0_i32_0 : i32, i32
  }
  func.func @transform_3(%arg0: i32) -> (i32, i32) {
    %c0_i32 = arith.constant 0 : i32
    %c0_i32_0 = arith.constant 0 : i32
    %c0_i32_1 = arith.constant 0 : i32
    return %c0_i32, %c0_i32_0 : i32, i32
  }
  func.func @transform_4(%arg0: i32) -> (i32, i32) {
    %c0_i32 = arith.constant 0 : i32
    %c0_i32_0 = arith.constant 0 : i32
    %c0_i32_1 = arith.constant 0 : i32
    return %c0_i32, %c0_i32_0 : i32, i32
  }
  func.func @transform_5(%arg0: i32) -> (i32, i32) {
    %c0_i32 = arith.constant 0 : i32
    %c0_i32_0 = arith.constant 0 : i32
    %c0_i32_1 = arith.constant 0 : i32
    return %c0_i32, %c0_i32_0 : i32, i32
  }
  func.func @transform_6(%arg0: i32) -> (i32, i32) {
    %c0_i32 = arith.constant 0 : i32
    %c0_i32_0 = arith.constant 0 : i32
    %c0_i32_1 = arith.constant 0 : i32
    return %c0_i32, %c0_i32_0 : i32, i32
  }
  func.func @transform_7(%arg0: i32) -> (i32, i32) {
    %c0_i32 = arith.constant 0 : i32
    %c0_i32_0 = arith.constant 0 : i32
    %c0_i32_1 = arith.constant 0 : i32
    return %c0_i32, %c0_i32_0 : i32, i32
  }
  func.func @transform_8(%arg0: i32) -> (i32, i32) {
    %c0_i32 = arith.constant 0 : i32
    %c0_i32_0 = arith.constant 0 : i32
    %c0_i32_1 = arith.constant 0 : i32
    return %c0_i32, %c0_i32_0 : i32, i32
  }
  func.func @transform_9(%arg0: i32) -> (i32, i32) {
    %c0_i32 = arith.constant 0 : i32
    %c0_i32_0 = arith.constant 0 : i32
    %c0_i32_1 = arith.constant 0 : i32
    return %c0_i32, %c0_i32_0 : i32, i32
  }
  func.func @transform_10(%arg0: i32) -> (i32, i32) {
    %c0_i32 = arith.constant 0 : i32
    %c0_i32_0 = arith.constant 0 : i32
    %c0_i32_1 = arith.constant 0 : i32
    return %c0_i32, %c0_i32_0 : i32, i32
  }
  func.func @transform_11(%arg0: i32) -> (i32, i32) {
    %c0_i32 = arith.constant 0 : i32
    %c0_i32_0 = arith.constant 0 : i32
    %c0_i32_1 = arith.constant 0 : i32
    return %c0_i32, %c0_i32_0 : i32, i32
  }
  func.func @transform_12(%arg0: i32) -> (i32, i32) {
    %c0_i32 = arith.constant 0 : i32
    %c0_i32_0 = arith.constant 0 : i32
    %c0_i32_1 = arith.constant 0 : i32
    return %c0_i32, %c0_i32_0 : i32, i32
  }
  func.func @transform_13(%arg0: i32) -> (i32, i32) {
    %c0_i32 = arith.constant 0 : i32
    %c0_i32_0 = arith.constant 0 : i32
    %c0_i32_1 = arith.constant 0 : i32
    return %c0_i32, %c0_i32_0 : i32, i32
  }
  func.func @transform_14(%arg0: i32) -> (i32, i32) {
    %c0_i32 = arith.constant 0 : i32
    %c0_i32_0 = arith.constant 0 : i32
    %c0_i32_1 = arith.constant 0 : i32
    return %c0_i32, %c0_i32_0 : i32, i32
  }
  func.func @transform_15(%arg0: i32) -> (i32, i32) {
    %c0_i32 = arith.constant 0 : i32
    %c0_i32_0 = arith.constant 0 : i32
    %c0_i32_1 = arith.constant 0 : i32
    return %c0_i32, %c0_i32_0 : i32, i32
  }
  func.func @transform_16(%arg0: i32) -> (i32, i32) {
    %c0_i32 = arith.constant 0 : i32
    %c0_i32_0 = arith.constant 0 : i32
    %c0_i32_1 = arith.constant 0 : i32
    return %c0_i32, %c0_i32_0 : i32, i32
  }
  func.func @transform_17(%arg0: i32) -> (i32, i32) {
    %c0_i32 = arith.constant 0 : i32
    %c0_i32_0 = arith.constant 0 : i32
    %c0_i32_1 = arith.constant 0 : i32
    return %c0_i32, %c0_i32_0 : i32, i32
  }
  func.func @transform_18(%arg0: i32) -> (i32, i32) {
    %c0_i32 = arith.constant 0 : i32
    %c0_i32_0 = arith.constant 0 : i32
    %c0_i32_1 = arith.constant 0 : i32
    return %c0_i32, %c0_i32_0 : i32, i32
  }
  func.func @transform_19(%arg0: i32) -> (i32, i32) {
    %c0_i32 = arith.constant 0 : i32
    %c0_i32_0 = arith.constant 0 : i32
    %c0_i32_1 = arith.constant 0 : i32
    return %c0_i32, %c0_i32_0 : i32, i32
  }
  func.func @transform_20(%arg0: i32) -> (i32, i32) {
    %c0_i32 = arith.constant 0 : i32
    %c0_i32_0 = arith.constant 0 : i32
    return %arg0, %c0_i32 : i32, i32
  }
}

</mosaic_0001>

<llo_original>
// kernel: bidaf_forward.1
$region0: #{bidaf_forward.1}
  #allocation0 [shape = 'u32[]', space=smem, size = 0x4, offset = 0x4, fixed_abs, tag = 'smem constant byte address 0x4 - core index']
  #allocation1 [shape = 'u32[72,128]{1,0:T(1,128)}', space=vmem, size = 0x9000, scoped, tag = 'internal scratch']
  #allocation2 [shape = 'f32[14,8,256]{2,1,0:T(8,128)}', space=vmem, size = 0x1c000, scoped, tag = 'scratch operand']
  #allocation3 [shape = 'f32[8,8,64]{2,1,0:T(8,128)}', space=vmem, size = 0x8000, scoped, tag = 'scratch operand']
  #allocation4 [shape = 'f32[6,8,64]{2,1,0:T(8,128)}', space=vmem, size = 0x6000, scoped, tag = 'scratch operand']
  #allocation5 [shape = 'f32[8,8,64]{2,1,0:T(8,128)}', space=vmem, size = 0x8000, scoped, tag = 'scratch operand']
  #allocation6 [shape = 'f32[1,1]{1,0:T(1,128)S(1)}', space=vmem, size = 0x200, scoped, tag = 'scoped memory for bidaf_forward.1']
  %s0 = inlined_call_operand.vmem [shape: bf16[8,16,128], index: 0, kind: input, shape index: {}]
  %s1 = inlined_call_operand.vmem [shape: bf16[6,16,128], index: 1, kind: input, shape index: {}]
  %s2 = inlined_call_operand.vmem [shape: bf16[128,256], index: 2, kind: input, shape index: {}]
  %s3 = inlined_call_operand.vmem [shape: bf16[32,128], index: 3, kind: input, shape index: {}]
  %s4 = inlined_call_operand.vmem [shape: bf16[32,128], index: 4, kind: input, shape index: {}]
  %s5 = inlined_call_operand.vmem [shape: f32[1,256], index: 5, kind: input, shape index: {}]
  %s6 = inlined_call_operand.vmem [shape: bf16[256,256], index: 6, kind: input, shape index: {}]
  %s7 = inlined_call_operand.vmem [shape: bf16[32,128], index: 7, kind: input, shape index: {}]
  %s8 = inlined_call_operand.vmem [shape: bf16[32,128], index: 8, kind: input, shape index: {}]
  %s9 = inlined_call_operand.vmem [shape: f32[1,256], index: 9, kind: input, shape index: {}]
  %s10 = inlined_call_operand.vmem [shape: bf16[64,256], index: 10, kind: input, shape index: {}]
  %s11 = inlined_call_operand.vmem [shape: bf16[32,128], index: 11, kind: input, shape index: {}]
  %s12 = inlined_call_operand.vmem [shape: bf16[32,128], index: 12, kind: input, shape index: {}]
  %s13 = inlined_call_operand.vmem [shape: f32[1,256], index: 13, kind: input, shape index: {}]
  %s14 = inlined_call_operand.vmem [shape: bf16[192,32], index: 14, kind: input, shape index: {}]
  %s15 = inlined_call_operand.vmem [shape: f32[1,32], index: 15, kind: input, shape index: {}]
  %s16 = inlined_call_operand.vmem [shape: bf16[32,32], index: 16, kind: input, shape index: {}]
  %s17 = inlined_call_operand.vmem [shape: f32[1,32], index: 17, kind: input, shape index: {}]
  %s18 = inlined_call_operand.vmem [shape: f32[1,32], index: 18, kind: input, shape index: {}]
  %s19 = inlined_call_operand.<no memory space> [shape: f32[1,1], index: 19, kind: input, shape index: {}]
  %s20 = inlined_call_operand.vmem [shape: f32[16,1], index: 20, kind: output, shape index: {}]
  %s21 = sld [smem:[#allocation0]]
  $region216: #{bidaf_forward.1} parent=0
    _
  %s23 = ssub.s32 1, %s21
  %s24 = scalar_select 0, %s23, %s21
  %v25 = vstv %s19
  %26 = vst [vmem:[#allocation6] sm:$0x1] %v25
  $region1: #{bidaf_forward.1} parent=0
    #allocation7 [shape = 'u8[32768]{0}', space=vmem, size = 0x8000, scoped, tag = 'input window, operand 0']
    #allocation8 [shape = 'u8[24576]{0}', space=vmem, size = 0x6000, scoped, tag = 'input window, operand 1']
    loop: start=0, step=1, limit=4
    $region2: #{bidaf_forward.1} parent=1 // loop_pre_header
      _
    $region3: #{bidaf_forward.1} parent=1 // loop_header
      %s28 = sphi 0, %s32
      %p29 = scmp.ge.s32.totalorder %s28, 4
      %s38 = sphi 0, %s40
      %s41 = sphi 0, %s38
      %s42 = sphi 0, %s41
      %s58 = sphi 0, %s42
      %s64 = sphi 0, %s66
      %s67 = sphi 0, %s64
      %s68 = sphi 0, %s67
      %s84 = sphi 0, %s68
      %s88 = sphi 0, %s88
      %s90 = sphi 0, %s88
      %s91 = sphi 0, %s90
      %s105 = sphi 0, %s91
      %s109 = sphi 0, %s109
      %s111 = sphi 0, %s109
      %s112 = sphi 0, %s111
      %s126 = sphi 0, %s112
      %s130 = sphi 0, %s130
      %s132 = sphi 0, %s130
      %s133 = sphi 0, %s132
      %s147 = sphi 0, %s133
      %s151 = sphi 0, %s151
      %s153 = sphi 0, %s151
      %s154 = sphi 0, %s153
      %s168 = sphi 0, %s154
      %s172 = sphi 0, %s172
      %s174 = sphi 0, %s172
      %s175 = sphi 0, %s174
      %s189 = sphi 0, %s175
      %s193 = sphi 0, %s193
      %s195 = sphi 0, %s193
      %s196 = sphi 0, %s195
      %s210 = sphi 0, %s196
      %s214 = sphi 0, %s214
      %s216 = sphi 0, %s214
      %s217 = sphi 0, %s216
      %s231 = sphi 0, %s217
      %s235 = sphi 0, %s235
      %s237 = sphi 0, %s235
      %s238 = sphi 0, %s237
      %s252 = sphi 0, %s238
      %s256 = sphi 0, %s256
      %s258 = sphi 0, %s256
      %s259 = sphi 0, %s258
      %s273 = sphi 0, %s259
      %s277 = sphi 0, %s277
      %s279 = sphi 0, %s277
      %s280 = sphi 0, %s279
      %s294 = sphi 0, %s280
      %s298 = sphi 0, %s298
      %s300 = sphi 0, %s298
      %s301 = sphi 0, %s300
      %s315 = sphi 0, %s301
      %s319 = sphi 0, %s319
      %s321 = sphi 0, %s319
      %s322 = sphi 0, %s321
      %s336 = sphi 0, %s322
      %s340 = sphi 0, %s340
      %s342 = sphi 0, %s340
      %s343 = sphi 0, %s342
      %s357 = sphi 0, %s343
      %s361 = sphi 0, %s361
      %s363 = sphi 0, %s361
      %s364 = sphi 0, %s363
      %s378 = sphi 0, %s364
      %s382 = sphi 0, %s382
      %s384 = sphi 0, %s382
      %s385 = sphi 0, %s384
      %s399 = sphi 0, %s385
      %s403 = sphi 0, %s403
      %s405 = sphi 0, %s403
      %s406 = sphi 0, %s405
      %s420 = sphi 0, %s406
      %s424 = sphi 0, %s424
      %s426 = sphi 0, %s424
      %s427 = sphi 0, %s426
      %s441 = sphi 0, %s427
      %s445 = sphi 0, %s445
      %s447 = sphi 0, %s445
      %s448 = sphi 0, %s447
      %s462 = sphi 0, %s448
      %s468 = sphi 0, %s470
      %s471 = sphi 0, %s468
      %s472 = sphi 0, %s471
      %s488 = sphi 0, %s472
    $region4: #{bidaf_forward.1} parent=1 // loop_header_branch
      %31 = sbr.rel (%p29) target = $region8
    $region5: #{bidaf_forward.1} parent=1 // loop_body
      %s33 = ssub.s32 %s28, 1
      %s34 = ssub.s32 %s28, 2
      %s35 = sadd.s32 %s28, 1
      %s36 = ssub.s32 %s28, %s35
      %p37 = scmp.eq.s32.totalorder %s36, 0
      %s39 = sadd.s32 %s38, 1
      %s40 = scalar_select %p37, %s38, %s39
      %p43 = pneg %p37
      %p44 = scmp.eq.s32.totalorder %s28, 1
      %p45 = por %p43, %p44
      %p46 = scmp.ne.s32.totalorder %s38, %s41
      %p47 = scmp.eq.s32.totalorder %s28, 0
      %p48 = por %p46, %p47
      %p49 = scmp.ne.s32.totalorder %s38, %s41
      %p50 = scmp.eq.s32.totalorder %s33, 1
      %p51 = por %p49, %p50
      %p52 = scmp.ne.s32.totalorder %s41, %s42
      %p53 = scmp.eq.s32.totalorder %s33, 0
      %p54 = por %p52, %p53
      %p55 = scmp.ne.s32.totalorder %s41, %s42
      %p56 = scmp.eq.s32.totalorder %s34, 1
      %p57 = por %p55, %p56
      %p59 = scmp.ne.s32.totalorder %s42, %s58
      %p60 = scmp.eq.s32.totalorder %s34, 0
      %p61 = por %p59, %p60
      %s62 = ssub.s32 %s28, %s35
      %p63 = scmp.eq.s32.totalorder %s62, 0
      %s65 = sadd.s32 %s64, 1
      %s66 = scalar_select %p63, %s64, %s65
      %p69 = pneg %p63
      %p70 = scmp.eq.s32.totalorder %s28, 1
      %p71 = por %p69, %p70
      %p72 = scmp.ne.s32.totalorder %s64, %s67
      %p73 = scmp.eq.s32.totalorder %s28, 0
      %p74 = por %p72, %p73
      %p75 = scmp.ne.s32.totalorder %s64, %s67
      %p76 = scmp.eq.s32.totalorder %s33, 1
      %p77 = por %p75, %p76
      %p78 = scmp.ne.s32.totalorder %s67, %s68
      %p79 = scmp.eq.s32.totalorder %s33, 0
      %p80 = por %p78, %p79
      %p81 = scmp.ne.s32.totalorder %s67, %s68
      %p82 = scmp.eq.s32.totalorder %s34, 1
      %p83 = por %p81, %p82
      %p85 = scmp.ne.s32.totalorder %s68, %s84
      %p86 = scmp.eq.s32.totalorder %s34, 0
      %p87 = por %p85, %p86
      %s89 = sadd.s32 %s88, 1
      %p92 = scmp.eq.s32.totalorder %s28, 1
      %p93 = scmp.ne.s32.totalorder %s88, %s90
      %p94 = scmp.eq.s32.totalorder %s28, 0
      %p95 = por %p93, %p94
      %p96 = scmp.ne.s32.totalorder %s88, %s90
      %p97 = scmp.eq.s32.totalorder %s33, 1
      %p98 = por %p96, %p97
      %p99 = scmp.ne.s32.totalorder %s90, %s91
      %p100 = scmp.eq.s32.totalorder %s33, 0
      %p101 = por %p99, %p100
      %p102 = scmp.ne.s32.totalorder %s90, %s91
      %p103 = scmp.eq.s32.totalorder %s34, 1
      %p104 = por %p102, %p103
      %p106 = scmp.ne.s32.totalorder %s91, %s105
      %p107 = scmp.eq.s32.totalorder %s34, 0
      %p108 = por %p106, %p107
      %s110 = sadd.s32 %s109, 1
      %p113 = scmp.eq.s32.totalorder %s28, 1
      %p114 = scmp.ne.s32.totalorder %s109, %s111
      %p115 = scmp.eq.s32.totalorder %s28, 0
      %p116 = por %p114, %p115
      %p117 = scmp.ne.s32.totalorder %s109, %s111
      %p118 = scmp.eq.s32.totalorder %s33, 1
      %p119 = por %p117, %p118
      %p120 = scmp.ne.s32.totalorder %s111, %s112
      %p121 = scmp.eq.s32.totalorder %s33, 0
      %p122 = por %p120, %p121
      %p123 = scmp.ne.s32.totalorder %s111, %s112
      %p124 = scmp.eq.s32.totalorder %s34, 1
      %p125 = por %p123, %p124
      %p127 = scmp.ne.s32.totalorder %s112, %s126
      %p128 = scmp.eq.s32.totalorder %s34, 0
      %p129 = por %p127, %p128
      %s131 = sadd.s32 %s130, 1
      %p134 = scmp.eq.s32.totalorder %s28, 1
      %p135 = scmp.ne.s32.totalorder %s130, %s132
      %p136 = scmp.eq.s32.totalorder %s28, 0
      %p137 = por %p135, %p136
      %p138 = scmp.ne.s32.totalorder %s130, %s132
      %p139 = scmp.eq.s32.totalorder %s33, 1
      %p140 = por %p138, %p139
      %p141 = scmp.ne.s32.totalorder %s132, %s133
      %p142 = scmp.eq.s32.totalorder %s33, 0
      %p143 = por %p141, %p142
      %p144 = scmp.ne.s32.totalorder %s132, %s133
      %p145 = scmp.eq.s32.totalorder %s34, 1
      %p146 = por %p144, %p145
      %p148 = scmp.ne.s32.totalorder %s133, %s147
      %p149 = scmp.eq.s32.totalorder %s34, 0
      %p150 = por %p148, %p149
      %s152 = sadd.s32 %s151, 1
      %p155 = scmp.eq.s32.totalorder %s28, 1
      %p156 = scmp.ne.s32.totalorder %s151, %s153
      %p157 = scmp.eq.s32.totalorder %s28, 0
      %p158 = por %p156, %p157
      %p159 = scmp.ne.s32.totalorder %s151, %s153
      %p160 = scmp.eq.s32.totalorder %s33, 1
      %p161 = por %p159, %p160
      %p162 = scmp.ne.s32.totalorder %s153, %s154
      %p163 = scmp.eq.s32.totalorder %s33, 0
      %p164 = por %p162, %p163
      %p165 = scmp.ne.s32.totalorder %s153, %s154
      %p166 = scmp.eq.s32.totalorder %s34, 1
      %p167 = por %p165, %p166
      %p169 = scmp.ne.s32.totalorder %s154, %s168
      %p170 = scmp.eq.s32.totalorder %s34, 0
      %p171 = por %p169, %p170
      %s173 = sadd.s32 %s172, 1
      %p176 = scmp.eq.s32.totalorder %s28, 1
      %p177 = scmp.ne.s32.totalorder %s172, %s174
      %p178 = scmp.eq.s32.totalorder %s28, 0
      %p179 = por %p177, %p178
      %p180 = scmp.ne.s32.totalorder %s172, %s174
      %p181 = scmp.eq.s32.totalorder %s33, 1
      %p182 = por %p180, %p181
      %p183 = scmp.ne.s32.totalorder %s174, %s175
      %p184 = scmp.eq.s32.totalorder %s33, 0
      %p185 = por %p183, %p184
      %p186 = scmp.ne.s32.totalorder %s174, %s175
      %p187 = scmp.eq.s32.totalorder %s34, 1
      %p188 = por %p186, %p187
      %p190 = scmp.ne.s32.totalorder %s175, %s189
      %p191 = scmp.eq.s32.totalorder %s34, 0
      %p192 = por %p190, %p191
      %s194 = sadd.s32 %s193, 1
      %p197 = scmp.eq.s32.totalorder %s28, 1
      %p198 = scmp.ne.s32.totalorder %s193, %s195
      %p199 = scmp.eq.s32.totalorder %s28, 0
      %p200 = por %p198, %p199
      %p201 = scmp.ne.s32.totalorder %s193, %s195
      %p202 = scmp.eq.s32.totalorder %s33, 1
      %p203 = por %p201, %p202
      %p204 = scmp.ne.s32.totalorder %s195, %s196
      %p205 = scmp.eq.s32.totalorder %s33, 0
      %p206 = por %p204, %p205
      %p207 = scmp.ne.s32.totalorder %s195, %s196
      %p208 = scmp.eq.s32.totalorder %s34, 1
      %p209 = por %p207, %p208
      %p211 = scmp.ne.s32.totalorder %s196, %s210
      %p212 = scmp.eq.s32.totalorder %s34, 0
      %p213 = por %p211, %p212
      %s215 = sadd.s32 %s214, 1
      %p218 = scmp.eq.s32.totalorder %s28, 1
      %p219 = scmp.ne.s32.totalorder %s214, %s216
      %p220 = scmp.eq.s32.totalorder %s28, 0
      %p221 = por %p219, %p220
      %p222 = scmp.ne.s32.totalorder %s214, %s216
      %p223 = scmp.eq.s32.totalorder %s33, 1
      %p224 = por %p222, %p223
      %p225 = scmp.ne.s32.totalorder %s216, %s217
      %p226 = scmp.eq.s32.totalorder %s33, 0
      %p227 = por %p225, %p226
      %p228 = scmp.ne.s32.totalorder %s216, %s217
      %p229 = scmp.eq.s32.totalorder %s34, 1
      %p230 = por %p228, %p229
      %p232 = scmp.ne.s32.totalorder %s217, %s231
      %p233 = scmp.eq.s32.totalorder %s34, 0
      %p234 = por %p232, %p233
      %s236 = sadd.s32 %s235, 1
      %p239 = scmp.eq.s32.totalorder %s28, 1
      %p240 = scmp.ne.s32.totalorder %s235, %s237
      %p241 = scmp.eq.s32.totalorder %s28, 0
      %p242 = por %p240, %p241
      %p243 = scmp.ne.s32.totalorder %s235, %s237
      %p244 = scmp.eq.s32.totalorder %s33, 1
      %p245 = por %p243, %p244
      %p246 = scmp.ne.s32.totalorder %s237, %s238
      %p247 = scmp.eq.s32.totalorder %s33, 0
      %p248 = por %p246, %p247
      %p249 = scmp.ne.s32.totalorder %s237, %s238
      %p250 = scmp.eq.s32.totalorder %s34, 1
      %p251 = por %p249, %p250
      %p253 = scmp.ne.s32.totalorder %s238, %s252
      %p254 = scmp.eq.s32.totalorder %s34, 0
      %p255 = por %p253, %p254
      %s257 = sadd.s32 %s256, 1
      %p260 = scmp.eq.s32.totalorder %s28, 1
      %p261 = scmp.ne.s32.totalorder %s256, %s258
      %p262 = scmp.eq.s32.totalorder %s28, 0
      %p263 = por %p261, %p262
      %p264 = scmp.ne.s32.totalorder %s256, %s258
      %p265 = scmp.eq.s32.totalorder %s33, 1
      %p266 = por %p264, %p265
      %p267 = scmp.ne.s32.totalorder %s258, %s259
      %p268 = scmp.eq.s32.totalorder %s33, 0
      %p269 = por %p267, %p268
      %p270 = scmp.ne.s32.totalorder %s258, %s259
      %p271 = scmp.eq.s32.totalorder %s34, 1
      %p272 = por %p270, %p271
      %p274 = scmp.ne.s32.totalorder %s259, %s273
      %p275 = scmp.eq.s32.totalorder %s34, 0
      %p276 = por %p274, %p275
      %s278 = sadd.s32 %s277, 1
      %p281 = scmp.eq.s32.totalorder %s28, 1
      %p282 = scmp.ne.s32.totalorder %s277, %s279
      %p283 = scmp.eq.s32.totalorder %s28, 0
      %p284 = por %p282, %p283
      %p285 = scmp.ne.s32.totalorder %s277, %s279
      %p286 = scmp.eq.s32.totalorder %s33, 1
      %p287 = por %p285, %p286
      %p288 = scmp.ne.s32.totalorder %s279, %s280
      %p289 = scmp.eq.s32.totalorder %s33, 0
      %p290 = por %p288, %p289
      %p291 = scmp.ne.s32.totalorder %s279, %s280
      %p292 = scmp.eq.s32.totalorder %s34, 1
      %p293 = por %p291, %p292
      %p295 = scmp.ne.s32.totalorder %s280, %s294
      %p296 = scmp.eq.s32.totalorder %s34, 0
      %p297 = por %p295, %p296
      %s299 = sadd.s32 %s298, 1
      %p302 = scmp.eq.s32.totalorder %s28, 1
      %p303 = scmp.ne.s32.totalorder %s298, %s300
      %p304 = scmp.eq.s32.totalorder %s28, 0
      %p305 = por %p303, %p304
      %p306 = scmp.ne.s32.totalorder %s298, %s300
      %p307 = scmp.eq.s32.totalorder %s33, 1
      %p308 = por %p306, %p307
      %p309 = scmp.ne.s32.totalorder %s300, %s301
      %p310 = scmp.eq.s32.totalorder %s33, 0
      %p311 = por %p309, %p310
      %p312 = scmp.ne.s32.totalorder %s300, %s301
      %p313 = scmp.eq.s32.totalorder %s34, 1
      %p314 = por %p312, %p313
      %p316 = scmp.ne.s32.totalorder %s301, %s315
      %p317 = scmp.eq.s32.totalorder %s34, 0
      %p318 = por %p316, %p317
      %s320 = sadd.s32 %s319, 1
      %p323 = scmp.eq.s32.totalorder %s28, 1
      %p324 = scmp.ne.s32.totalorder %s319, %s321
      %p325 = scmp.eq.s32.totalorder %s28, 0
      %p326 = por %p324, %p325
      %p327 = scmp.ne.s32.totalorder %s319, %s321
      %p328 = scmp.eq.s32.totalorder %s33, 1
      %p329 = por %p327, %p328
      %p330 = scmp.ne.s32.totalorder %s321, %s322
      %p331 = scmp.eq.s32.totalorder %s33, 0
      %p332 = por %p330, %p331
      %p333 = scmp.ne.s32.totalorder %s321, %s322
      %p334 = scmp.eq.s32.totalorder %s34, 1
      %p335 = por %p333, %p334
      %p337 = scmp.ne.s32.totalorder %s322, %s336
      %p338 = scmp.eq.s32.totalorder %s34, 0
      %p339 = por %p337, %p338
      %s341 = sadd.s32 %s340, 1
      %p344 = scmp.eq.s32.totalorder %s28, 1
      %p345 = scmp.ne.s32.totalorder %s340, %s342
      %p346 = scmp.eq.s32.totalorder %s28, 0
      %p347 = por %p345, %p346
      %p348 = scmp.ne.s32.totalorder %s340, %s342
      %p349 = scmp.eq.s32.totalorder %s33, 1
      %p350 = por %p348, %p349
      %p351 = scmp.ne.s32.totalorder %s342, %s343
      %p352 = scmp.eq.s32.totalorder %s33, 0
      %p353 = por %p351, %p352
      %p354 = scmp.ne.s32.totalorder %s342, %s343
      %p355 = scmp.eq.s32.totalorder %s34, 1
      %p356 = por %p354, %p355
      %p358 = scmp.ne.s32.totalorder %s343, %s357
      %p359 = scmp.eq.s32.totalorder %s34, 0
      %p360 = por %p358, %p359
      %s362 = sadd.s32 %s361, 1
      %p365 = scmp.eq.s32.totalorder %s28, 1
      %p366 = scmp.ne.s32.totalorder %s361, %s363
      %p367 = scmp.eq.s32.totalorder %s28, 0
      %p368 = por %p366, %p367
      %p369 = scmp.ne.s32.totalorder %s361, %s363
      %p370 = scmp.eq.s32.totalorder %s33, 1
      %p371 = por %p369, %p370
      %p372 = scmp.ne.s32.totalorder %s363, %s364
      %p373 = scmp.eq.s32.totalorder %s33, 0
      %p374 = por %p372, %p373
      %p375 = scmp.ne.s32.totalorder %s363, %s364
      %p376 = scmp.eq.s32.totalorder %s34, 1
      %p377 = por %p375, %p376
      %p379 = scmp.ne.s32.totalorder %s364, %s378
      %p380 = scmp.eq.s32.totalorder %s34, 0
      %p381 = por %p379, %p380
      %s383 = sadd.s32 %s382, 1
      %p386 = scmp.eq.s32.totalorder %s28, 1
      %p387 = scmp.ne.s32.totalorder %s382, %s384
      %p388 = scmp.eq.s32.totalorder %s28, 0
      %p389 = por %p387, %p388
      %p390 = scmp.ne.s32.totalorder %s382, %s384
      %p391 = scmp.eq.s32.totalorder %s33, 1
      %p392 = por %p390, %p391
      %p393 = scmp.ne.s32.totalorder %s384, %s385
      %p394 = scmp.eq.s32.totalorder %s33, 0
      %p395 = por %p393, %p394
      %p396 = scmp.ne.s32.totalorder %s384, %s385
      %p397 = scmp.eq.s32.totalorder %s34, 1
      %p398 = por %p396, %p397
      %p400 = scmp.ne.s32.totalorder %s385, %s399
      %p401 = scmp.eq.s32.totalorder %s34, 0
      %p402 = por %p400, %p401
      %s404 = sadd.s32 %s403, 1
      %p407 = scmp.eq.s32.totalorder %s28, 1
      %p408 = scmp.ne.s32.totalorder %s403, %s405
      %p409 = scmp.eq.s32.totalorder %s28, 0
      %p410 = por %p408, %p409
      %p411 = scmp.ne.s32.totalorder %s403, %s405
      %p412 = scmp.eq.s32.totalorder %s33, 1
      %p413 = por %p411, %p412
      %p414 = scmp.ne.s32.totalorder %s405, %s406
      %p415 = scmp.eq.s32.totalorder %s33, 0
      %p416 = por %p414, %p415
      %p417 = scmp.ne.s32.totalorder %s405, %s406
      %p418 = scmp.eq.s32.totalorder %s34, 1
      %p419 = por %p417, %p418
      %p421 = scmp.ne.s32.totalorder %s406, %s420
      %p422 = scmp.eq.s32.totalorder %s34, 0
      %p423 = por %p421, %p422
      %s425 = sadd.s32 %s424, 1
      %p428 = scmp.eq.s32.totalorder %s28, 1
      %p429 = scmp.ne.s32.totalorder %s424, %s426
      %p430 = scmp.eq.s32.totalorder %s28, 0
      %p431 = por %p429, %p430
      %p432 = scmp.ne.s32.totalorder %s424, %s426
      %p433 = scmp.eq.s32.totalorder %s33, 1
      %p434 = por %p432, %p433
      %p435 = scmp.ne.s32.totalorder %s426, %s427
      %p436 = scmp.eq.s32.totalorder %s33, 0
      %p437 = por %p435, %p436
      %p438 = scmp.ne.s32.totalorder %s426, %s427
      %p439 = scmp.eq.s32.totalorder %s34, 1
      %p440 = por %p438, %p439
      %p442 = scmp.ne.s32.totalorder %s427, %s441
      %p443 = scmp.eq.s32.totalorder %s34, 0
      %p444 = por %p442, %p443
      %s446 = sadd.s32 %s445, 1
      %p449 = scmp.eq.s32.totalorder %s28, 1
      %p450 = scmp.ne.s32.totalorder %s445, %s447
      %p451 = scmp.eq.s32.totalorder %s28, 0
      %p452 = por %p450, %p451
      %p453 = scmp.ne.s32.totalorder %s445, %s447
      %p454 = scmp.eq.s32.totalorder %s33, 1
      %p455 = por %p453, %p454
      %p456 = scmp.ne.s32.totalorder %s447, %s448
      %p457 = scmp.eq.s32.totalorder %s33, 0
      %p458 = por %p456, %p457
      %p459 = scmp.ne.s32.totalorder %s447, %s448
      %p460 = scmp.eq.s32.totalorder %s34, 1
      %p461 = por %p459, %p460
      %p463 = scmp.ne.s32.totalorder %s448, %s462
      %p464 = scmp.eq.s32.totalorder %s34, 0
      %p465 = por %p463, %p464
      %s466 = ssub.s32 %s28, %s35
      %p467 = scmp.eq.s32.totalorder %s466, 0
      %s469 = sadd.s32 %s468, 1
      %s470 = scalar_select %p467, %s468, %s469
      %p473 = pneg %p467
      %p474 = scmp.eq.s32.totalorder %s28, 1
      %p475 = por %p473, %p474
      %p476 = scmp.ne.s32.totalorder %s468, %s471
      %p477 = scmp.eq.s32.totalorder %s28, 0
      %p478 = por %p476, %p477
      %p479 = scmp.ne.s32.totalorder %s468, %s471
      %p480 = scmp.eq.s32.totalorder %s33, 1
      %p481 = por %p479, %p480
      %p482 = scmp.ne.s32.totalorder %s471, %s472
      %p483 = scmp.eq.s32.totalorder %s33, 0
      %p484 = por %p482, %p483
      %p485 = scmp.ne.s32.totalorder %s471, %s472
      %p486 = scmp.eq.s32.totalorder %s34, 1
      %p487 = por %p485, %p486
      %p489 = scmp.ne.s32.totalorder %s472, %s488
      %p490 = scmp.eq.s32.totalorder %s34, 0
      %p491 = por %p489, %p490
      %p492 = scmp.le.s32.totalorder 1, %s28
      %p493 = scmp.lt.s32.totalorder %s28, 3
      %p494 = pnand %p492, %p493
      %p495 = pneg %p494
      // Predicated region
      $region9: #{bidaf_forward.1} parent=5 // pred_check
        _
      $region10: #{bidaf_forward.1} parent=5 // pred_check_branch
        %497 = sbr.rel (%p494) target = $region12
      $region11: #{bidaf_forward.1} parent=5 // pred_region
        %s498 = ssub.s32 %s28, 1
        // Predicated region
        $region13: #{bidaf_forward.1} parent=11 // pred_check
          %p499 = pneg %p101
        $region14: #{bidaf_forward.1} parent=11 // pred_check_branch
          %501 = sbr.rel (%p499) target = $region16
        $region15: #{bidaf_forward.1} parent=11 // pred_region
          _
        $region16: #{bidaf_forward.1} parent=11 // pred_fallthru
          _
        // Predicated region
        $region17: #{bidaf_forward.1} parent=11 // pred_check
          %p502 = pneg %p122
        $region18: #{bidaf_forward.1} parent=11 // pred_check_branch
          %504 = sbr.rel (%p502) target = $region20
        $region19: #{bidaf_forward.1} parent=11 // pred_region
          _
        $region20: #{bidaf_forward.1} parent=11 // pred_fallthru
          _
        // Predicated region
        $region21: #{bidaf_forward.1} parent=11 // pred_check
          %p505 = pneg %p143
        $region22: #{bidaf_forward.1} parent=11 // pred_check_branch
          %507 = sbr.rel (%p505) target = $region24
        $region23: #{bidaf_forward.1} parent=11 // pred_region
          _
        $region24: #{bidaf_forward.1} parent=11 // pred_fallthru
          _
        // Predicated region
        $region25: #{bidaf_forward.1} parent=11 // pred_check
          %p508 = pneg %p164
        $region26: #{bidaf_forward.1} parent=11 // pred_check_branch
          %510 = sbr.rel (%p508) target = $region28
        $region27: #{bidaf_forward.1} parent=11 // pred_region
          _
        $region28: #{bidaf_forward.1} parent=11 // pred_fallthru
          _
        // Predicated region
        $region29: #{bidaf_forward.1} parent=11 // pred_check
          %p511 = pneg %p185
        $region30: #{bidaf_forward.1} parent=11 // pred_check_branch
          %513 = sbr.rel (%p511) target = $region32
        $region31: #{bidaf_forward.1} parent=11 // pred_region
          _
        $region32: #{bidaf_forward.1} parent=11 // pred_fallthru
          _
        // Predicated region
        $region33: #{bidaf_forward.1} parent=11 // pred_check
          %p514 = pneg %p206
        $region34: #{bidaf_forward.1} parent=11 // pred_check_branch
          %516 = sbr.rel (%p514) target = $region36
        $region35: #{bidaf_forward.1} parent=11 // pred_region
          _
        $region36: #{bidaf_forward.1} parent=11 // pred_fallthru
          _
        // Predicated region
        $region37: #{bidaf_forward.1} parent=11 // pred_check
          %p517 = pneg %p227
        $region38: #{bidaf_forward.1} parent=11 // pred_check_branch
          %519 = sbr.rel (%p517) target = $region40
        $region39: #{bidaf_forward.1} parent=11 // pred_region
          _
        $region40: #{bidaf_forward.1} parent=11 // pred_fallthru
          _
        // Predicated region
        $region41: #{bidaf_forward.1} parent=11 // pred_check
          %p520 = pneg %p248
        $region42: #{bidaf_forward.1} parent=11 // pred_check_branch
          %522 = sbr.rel (%p520) target = $region44
        $region43: #{bidaf_forward.1} parent=11 // pred_region
          _
        $region44: #{bidaf_forward.1} parent=11 // pred_fallthru
          _
        // Predicated region
        $region45: #{bidaf_forward.1} parent=11 // pred_check
          %p523 = pneg %p269
        $region46: #{bidaf_forward.1} parent=11 // pred_check_branch
          %525 = sbr.rel (%p523) target = $region48
        $region47: #{bidaf_forward.1} parent=11 // pred_region
          _
        $region48: #{bidaf_forward.1} parent=11 // pred_fallthru
          _
        // Predicated region
        $region49: #{bidaf_forward.1} parent=11 // pred_check
          %p526 = pneg %p290
        $region50: #{bidaf_forward.1} parent=11 // pred_check_branch
          %528 = sbr.rel (%p526) target = $region52
        $region51: #{bidaf_forward.1} parent=11 // pred_region
          _
        $region52: #{bidaf_forward.1} parent=11 // pred_fallthru
          _
        // Predicated region
        $region53: #{bidaf_forward.1} parent=11 // pred_check
          %p529 = pneg %p311
        $region54: #{bidaf_forward.1} parent=11 // pred_check_branch
          %531 = sbr.rel (%p529) target = $region56
        $region55: #{bidaf_forward.1} parent=11 // pred_region
          _
        $region56: #{bidaf_forward.1} parent=11 // pred_fallthru
          _
        // Predicated region
        $region57: #{bidaf_forward.1} parent=11 // pred_check
          %p532 = pneg %p332
        $region58: #{bidaf_forward.1} parent=11 // pred_check_branch
          %534 = sbr.rel (%p532) target = $region60
        $region59: #{bidaf_forward.1} parent=11 // pred_region
          _
        $region60: #{bidaf_forward.1} parent=11 // pred_fallthru
          _
        // Predicated region
        $region61: #{bidaf_forward.1} parent=11 // pred_check
          %p535 = pneg %p353
        $region62: #{bidaf_forward.1} parent=11 // pred_check_branch
          %537 = sbr.rel (%p535) target = $region64
        $region63: #{bidaf_forward.1} parent=11 // pred_region
          _
        $region64: #{bidaf_forward.1} parent=11 // pred_fallthru
          _
        // Predicated region
        $region65: #{bidaf_forward.1} parent=11 // pred_check
          %p538 = pneg %p374
        $region66: #{bidaf_forward.1} parent=11 // pred_check_branch
          %540 = sbr.rel (%p538) target = $region68
        $region67: #{bidaf_forward.1} parent=11 // pred_region
          _
        $region68: #{bidaf_forward.1} parent=11 // pred_fallthru
          _
        // Predicated region
        $region69: #{bidaf_forward.1} parent=11 // pred_check
          %p541 = pneg %p395
        $region70: #{bidaf_forward.1} parent=11 // pred_check_branch
          %543 = sbr.rel (%p541) target = $region72
        $region71: #{bidaf_forward.1} parent=11 // pred_region
          _
        $region72: #{bidaf_forward.1} parent=11 // pred_fallthru
          _
        // Predicated region
        $region73: #{bidaf_forward.1} parent=11 // pred_check
          %p544 = pneg %p416
        $region74: #{bidaf_forward.1} parent=11 // pred_check_branch
          %546 = sbr.rel (%p544) target = $region76
        $region75: #{bidaf_forward.1} parent=11 // pred_region
          _
        $region76: #{bidaf_forward.1} parent=11 // pred_fallthru
          _
        // Predicated region
        $region77: #{bidaf_forward.1} parent=11 // pred_check
          %p547 = pneg %p437
        $region78: #{bidaf_forward.1} parent=11 // pred_check_branch
          %549 = sbr.rel (%p547) target = $region80
        $region79: #{bidaf_forward.1} parent=11 // pred_region
          _
        $region80: #{bidaf_forward.1} parent=11 // pred_fallthru
          _
        // Predicated region
        $region81: #{bidaf_forward.1} parent=11 // pred_check
          %p550 = pneg %p458
        $region82: #{bidaf_forward.1} parent=11 // pred_check_branch
          %552 = sbr.rel (%p550) target = $region84
        $region83: #{bidaf_forward.1} parent=11 // pred_region
          _
        $region84: #{bidaf_forward.1} parent=11 // pred_fallthru
          _
      $region12: #{bidaf_forward.1} parent=5 // pred_fallthru
        _
      %p553 = scmp.lt.s32.totalorder %s28, 2
      // Predicated region
      $region85: #{bidaf_forward.1} parent=5 // pred_check
        %p554 = pneg %p553
      $region86: #{bidaf_forward.1} parent=5 // pred_check_branch
        %556 = sbr.rel (%p554) target = $region88
      $region87: #{bidaf_forward.1} parent=5 // pred_region
        // Predicated region
        $region89: #{bidaf_forward.1} parent=87 // pred_check
          %p557 = pneg %p48
        $region90: #{bidaf_forward.1} parent=87 // pred_check_branch
          %559 = sbr.rel (%p557) target = $region92
        $region91: #{bidaf_forward.1} parent=87 // pred_region
          %s560 = sand.u32 %s38, 1
          %s561 = sand.u32 %s38, 1
          %s562 = smul.addr %s561, 32
          %s563 = scalar_lea.vmem [#allocation7], %s562
          %s564 = smul.addr %s28, 4
          %s565 = scalar_lea.vmem %s0, %s564
          // Predicated region
          $region93: #{bidaf_forward.1} parent=91 // pred_check
            _
          $region94: #{bidaf_forward.1} parent=91 // pred_check_branch
            %567 = sbr.rel (0) target = $region96
          $region95: #{bidaf_forward.1} parent=91 // pred_region
            // Predicated region
            $region97: #{bidaf_forward.1} parent=95 // pred_check
              _
            $region98: #{bidaf_forward.1} parent=95 // pred_check_branch
              %569 = sbr.rel target = $region100
            $region99: #{bidaf_forward.1} parent=95 // pred_region
              // Predicated region
              $region112: #{bidaf_forward.1} parent=99 // pred_check
                _
              $region113: #{bidaf_forward.1} parent=99 // pred_check_branch
                %599 = sbr.rel (0) target = $region115
              $region114: #{bidaf_forward.1} parent=99 // pred_region
                loop: start=0, step=1, limit=1
                $region116: #{bidaf_forward.1} parent=114 // loop_pre_header
                  _
                $region117: #{bidaf_forward.1} parent=114 // loop_header
                  %s601 = sphi 0, %s605
                  %p602 = scmp.ge.s32.totalorder %s601, 1
                  %s606 = sphi %s565, %s565
                  %s607 = sphi %s563, %s563
                $region118: #{bidaf_forward.1} parent=114 // loop_header_branch
                  %604 = sbr.rel (%p602) target = $region122
                $region119: #{bidaf_forward.1} parent=114 // loop_body
                  _
                $region120: #{bidaf_forward.1} parent=114 // loop_footer
                  %s605 = sadd.s32 1, %s601
                $region121: #{bidaf_forward.1} parent=114 // loop_footer_branch
                  %600 = sbr.rel target = $region117
                $region122: #{bidaf_forward.1} parent=114 // loop_exit
                  _
                %s609 = ssub.s32 16, 1
                loop: start=0, step=1, limit=1
                $region123: #{bidaf_forward.1} parent=114 // loop_pre_header
                  _
                $region124: #{bidaf_forward.1} parent=114 // loop_header
                  %s611 = sphi 0, %s615
                  %p612 = scmp.ge.s32.totalorder %s611, 1
                  %s616 = sphi %s565, %s565
                  %s617 = sphi %s563, %s563
                $region125: #{bidaf_forward.1} parent=114 // loop_header_branch
                  %614 = sbr.rel (%p612) target = $region129
                $region126: #{bidaf_forward.1} parent=114 // loop_body
                  %v618 = vld [vmem:[%s616] sm:%s609]
                  %619 = vst [vmem:[%s617] sm:%s609] %v618
                  %v620 = vld [vmem:[%s616 + $0x8] sm:%s609]
                  %621 = vst [vmem:[%s617 + $0x4] sm:%s609] %v620
                  %v622 = vld [vmem:[%s616 + $0x10] sm:%s609]
                  %623 = vst [vmem:[%s617 + $0x8] sm:%s609] %v622
                  %v624 = vld [vmem:[%s616 + $0x18] sm:%s609]
                  %625 = vst [vmem:[%s617 + $0xc] sm:%s609] %v624
                  %v626 = vld [vmem:[%s616 + $0x20] sm:%s609]
                  %627 = vst [vmem:[%s617 + $0x10] sm:%s609] %v626
                  %v628 = vld [vmem:[%s616 + $0x28] sm:%s609]
                  %629 = vst [vmem:[%s617 + $0x14] sm:%s609] %v628
                  %v630 = vld [vmem:[%s616 + $0x30] sm:%s609]
                  %631 = vst [vmem:[%s617 + $0x18] sm:%s609] %v630
                  %v632 = vld [vmem:[%s616 + $0x38] sm:%s609]
                  %633 = vst [vmem:[%s617 + $0x1c] sm:%s609] %v632
                $region127: #{bidaf_forward.1} parent=114 // loop_footer
                  %s615 = sadd.s32 1, %s611
                $region128: #{bidaf_forward.1} parent=114 // loop_footer_branch
                  %610 = sbr.rel target = $region124
                $region129: #{bidaf_forward.1} parent=114 // loop_exit
                  _
              $region115: #{bidaf_forward.1} parent=99 // pred_fallthru
                _
            $region100: #{bidaf_forward.1} parent=95 // pred_fallthru
              _
            // Predicated region
            $region101: #{bidaf_forward.1} parent=95 // pred_check
              _
            $region102: #{bidaf_forward.1} parent=95 // pred_check_branch
              %571 = sbr.rel (0) target = $region104
            $region103: #{bidaf_forward.1} parent=95 // pred_region
              %s573 = ssub.s32 16, 1
              loop: start=0, step=1, limit=1
              $region105: #{bidaf_forward.1} parent=103 // loop_pre_header
                _
              $region106: #{bidaf_forward.1} parent=103 // loop_header
                %s575 = sphi 0, %s579
                %p576 = scmp.ge.s32.totalorder %s575, 1
                %s580 = sphi %s565, %s565
                %s581 = sphi %s563, %s563
              $region107: #{bidaf_forward.1} parent=103 // loop_header_branch
                %578 = sbr.rel (%p576) target = $region111
              $region108: #{bidaf_forward.1} parent=103 // loop_body
                %v582 = vld [vmem:[%s580] sm:%s573]
                %583 = vst [vmem:[%s581] sm:%s573] %v582
                %v584 = vld [vmem:[%s580 + $0x8] sm:%s573]
                %585 = vst [vmem:[%s581 + $0x4] sm:%s573] %v584
                %v586 = vld [vmem:[%s580 + $0x10] sm:%s573]
                %587 = vst [vmem:[%s581 + $0x8] sm:%s573] %v586
                %v588 = vld [vmem:[%s580 + $0x18] sm:%s573]
                %589 = vst [vmem:[%s581 + $0xc] sm:%s573] %v588
                %v590 = vld [vmem:[%s580 + $0x20] sm:%s573]
                %591 = vst [vmem:[%s581 + $0x10] sm:%s573] %v590
                %v592 = vld [vmem:[%s580 + $0x28] sm:%s573]
                %593 = vst [vmem:[%s581 + $0x14] sm:%s573] %v592
                %v594 = vld [vmem:[%s580 + $0x30] sm:%s573]
                %595 = vst [vmem:[%s581 + $0x18] sm:%s573] %v594
                %v596 = vld [vmem:[%s580 + $0x38] sm:%s573]
                %597 = vst [vmem:[%s581 + $0x1c] sm:%s573] %v596
              $region109: #{bidaf_forward.1} parent=103 // loop_footer
                %s579 = sadd.s32 1, %s575
              $region110: #{bidaf_forward.1} parent=103 // loop_footer_branch
                %574 = sbr.rel target = $region106
              $region111: #{bidaf_forward.1} parent=103 // loop_exit
                _
            $region104: #{bidaf_forward.1} parent=95 // pred_fallthru
              _
          $region96: #{bidaf_forward.1} parent=91 // pred_fallthru
            _
          %634 = vnop
        $region92: #{bidaf_forward.1} parent=87 // pred_fallthru
          _
        // Predicated region
        $region130: #{bidaf_forward.1} parent=87 // pred_check
          %p635 = pneg %p74
        $region131: #{bidaf_forward.1} parent=87 // pred_check_branch
          %637 = sbr.rel (%p635) target = $region133
        $region132: #{bidaf_forward.1} parent=87 // pred_region
          %s638 = sand.u32 %s64, 1
          %s639 = sand.u32 %s64, 1
          %s640 = smul.addr %s639, 24
          %s641 = scalar_lea.vmem [#allocation8], %s640
          %s642 = smul.addr %s28, 4
          %s643 = scalar_lea.vmem %s1, %s642
          // Predicated region
          $region134: #{bidaf_forward.1} parent=132 // pred_check
            _
          $region135: #{bidaf_forward.1} parent=132 // pred_check_branch
            %645 = sbr.rel (0) target = $region137
          $region136: #{bidaf_forward.1} parent=132 // pred_region
            // Predicated region
            $region138: #{bidaf_forward.1} parent=136 // pred_check
              _
            $region139: #{bidaf_forward.1} parent=136 // pred_check_branch
              %647 = sbr.rel target = $region141
            $region140: #{bidaf_forward.1} parent=136 // pred_region
              // Predicated region
              $region153: #{bidaf_forward.1} parent=140 // pred_check
                _
              $region154: #{bidaf_forward.1} parent=140 // pred_check_branch
                %673 = sbr.rel (0) target = $region156
              $region155: #{bidaf_forward.1} parent=140 // pred_region
                loop: start=0, step=1, limit=1
                $region157: #{bidaf_forward.1} parent=155 // loop_pre_header
                  _
                $region158: #{bidaf_forward.1} parent=155 // loop_header
                  %s675 = sphi 0, %s679
                  %p676 = scmp.ge.s32.totalorder %s675, 1
                  %s680 = sphi %s643, %s643
                  %s681 = sphi %s641, %s641
                $region159: #{bidaf_forward.1} parent=155 // loop_header_branch
                  %678 = sbr.rel (%p676) target = $region163
                $region160: #{bidaf_forward.1} parent=155 // loop_body
                  _
                $region161: #{bidaf_forward.1} parent=155 // loop_footer
                  %s679 = sadd.s32 1, %s675
                $region162: #{bidaf_forward.1} parent=155 // loop_footer_branch
                  %674 = sbr.rel target = $region158
                $region163: #{bidaf_forward.1} parent=155 // loop_exit
                  _
                %s683 = ssub.s32 16, 1
                loop: start=0, step=1, limit=1
                $region164: #{bidaf_forward.1} parent=155 // loop_pre_header
                  _
                $region165: #{bidaf_forward.1} parent=155 // loop_header
                  %s685 = sphi 0, %s689
                  %p686 = scmp.ge.s32.totalorder %s685, 1
                  %s690 = sphi %s643, %s643
                  %s691 = sphi %s641, %s641
                $region166: #{bidaf_forward.1} parent=155 // loop_header_branch
                  %688 = sbr.rel (%p686) target = $region170
                $region167: #{bidaf_forward.1} parent=155 // loop_body
                  %v692 = vld [vmem:[%s690] sm:%s683]
                  %693 = vst [vmem:[%s691] sm:%s683] %v692
                  %v694 = vld [vmem:[%s690 + $0x8] sm:%s683]
                  %695 = vst [vmem:[%s691 + $0x4] sm:%s683] %v694
                  %v696 = vld [vmem:[%s690 + $0x10] sm:%s683]
                  %697 = vst [vmem:[%s691 + $0x8] sm:%s683] %v696
                  %v698 = vld [vmem:[%s690 + $0x18] sm:%s683]
                  %699 = vst [vmem:[%s691 + $0xc] sm:%s683] %v698
                  %v700 = vld [vmem:[%s690 + $0x20] sm:%s683]
                  %701 = vst [vmem:[%s691 + $0x10] sm:%s683] %v700
                  %v702 = vld [vmem:[%s690 + $0x28] sm:%s683]
                  %703 = vst [vmem:[%s691 + $0x14] sm:%s683] %v702
                $region168: #{bidaf_forward.1} parent=155 // loop_footer
                  %s689 = sadd.s32 1, %s685
                $region169: #{bidaf_forward.1} parent=155 // loop_footer_branch
                  %684 = sbr.rel target = $region165
                $region170: #{bidaf_forward.1} parent=155 // loop_exit
                  _
              $region156: #{bidaf_forward.1} parent=140 // pred_fallthru
                _
            $region141: #{bidaf_forward.1} parent=136 // pred_fallthru
              _
            // Predicated region
            $region142: #{bidaf_forward.1} parent=136 // pred_check
              _
            $region143: #{bidaf_forward.1} parent=136 // pred_check_branch
              %649 = sbr.rel (0) target = $region145
            $region144: #{bidaf_forward.1} parent=136 // pred_region
              %s651 = ssub.s32 16, 1
              loop: start=0, step=1, limit=1
              $region146: #{bidaf_forward.1} parent=144 // loop_pre_header
                _
              $region147: #{bidaf_forward.1} parent=144 // loop_header
                %s653 = sphi 0, %s657
                %p654 = scmp.ge.s32.totalorder %s653, 1
                %s658 = sphi %s643, %s643
                %s659 = sphi %s641, %s641
              $region148: #{bidaf_forward.1} parent=144 // loop_header_branch
                %656 = sbr.rel (%p654) target = $region152
              $region149: #{bidaf_forward.1} parent=144 // loop_body
                %v660 = vld [vmem:[%s658] sm:%s651]
                %661 = vst [vmem:[%s659] sm:%s651] %v660
                %v662 = vld [vmem:[%s658 + $0x8] sm:%s651]
                %663 = vst [vmem:[%s659 + $0x4] sm:%s651] %v662
                %v664 = vld [vmem:[%s658 + $0x10] sm:%s651]
                %665 = vst [vmem:[%s659 + $0x8] sm:%s651] %v664
                %v666 = vld [vmem:[%s658 + $0x18] sm:%s651]
                %667 = vst [vmem:[%s659 + $0xc] sm:%s651] %v666
                %v668 = vld [vmem:[%s658 + $0x20] sm:%s651]
                %669 = vst [vmem:[%s659 + $0x10] sm:%s651] %v668
                %v670 = vld [vmem:[%s658 + $0x28] sm:%s651]
                %671 = vst [vmem:[%s659 + $0x14] sm:%s651] %v670
              $region150: #{bidaf_forward.1} parent=144 // loop_footer
                %s657 = sadd.s32 1, %s653
              $region151: #{bidaf_forward.1} parent=144 // loop_footer_branch
                %652 = sbr.rel target = $region147
              $region152: #{bidaf_forward.1} parent=144 // loop_exit
                _
            $region145: #{bidaf_forward.1} parent=136 // pred_fallthru
              _
          $region137: #{bidaf_forward.1} parent=132 // pred_fallthru
            _
          %704 = vnop
        $region133: #{bidaf_forward.1} parent=87 // pred_fallthru
          _
      $region88: #{bidaf_forward.1} parent=5 // pred_fallthru
        _
      %p705 = scmp.le.s32.totalorder 1, %s28
      %p706 = scmp.lt.s32.totalorder %s28, 3
      %p707 = pnand %p705, %p706
      %p708 = pneg %p707
      // Predicated region
      $region171: #{bidaf_forward.1} parent=5 // pred_check
        _
      $region172: #{bidaf_forward.1} parent=5 // pred_check_branch
        %710 = sbr.rel (%p707) target = $region174
      $region173: #{bidaf_forward.1} parent=5 // pred_region
        %s711 = ssub.s32 %s28, 1
        %s712 = sand.u32 %s41, 1
        %s713 = sand.u32 %s41, 1
        %s714 = smul.addr %s713, 32
        %s715 = scalar_lea.vmem [#allocation7], %s714
        // Predicated region
        $region175: #{bidaf_forward.1} parent=173 // pred_check
          %p716 = pneg %p54
        $region176: #{bidaf_forward.1} parent=173 // pred_check_branch
          %718 = sbr.rel (%p716) target = $region178
        $region177: #{bidaf_forward.1} parent=173 // pred_region
          _
        $region178: #{bidaf_forward.1} parent=173 // pred_fallthru
          _
        %s719 = sand.u32 %s67, 1
        %s720 = sand.u32 %s67, 1
        %s721 = smul.addr %s720, 24
        %s722 = scalar_lea.vmem [#allocation8], %s721
        // Predicated region
        $region179: #{bidaf_forward.1} parent=173 // pred_check
          %p723 = pneg %p80
        $region180: #{bidaf_forward.1} parent=173 // pred_check_branch
          %725 = sbr.rel (%p723) target = $region182
        $region181: #{bidaf_forward.1} parent=173 // pred_region
          _
        $region182: #{bidaf_forward.1} parent=173 // pred_fallthru
          _
        %s726 = sand.u32 %s41, 1
        %s727 = sand.u32 %s41, 1
        %s728 = smul.addr %s727, 32
        %s729 = scalar_lea.vmem [#allocation7], %s728
        %p730 = pneg %p54
        %p731 = pneg %p51
        %s732 = sand.u32 %s67, 1
        %s733 = sand.u32 %s67, 1
        %s734 = smul.addr %s733, 24
        %s735 = scalar_lea.vmem [#allocation8], %s734
        %p736 = pneg %p80
        %p737 = pneg %p77
        %p738 = pneg %p101
        %p739 = pneg %p98
        %p740 = pneg %p122
        %p741 = pneg %p119
        %p742 = pneg %p143
        %p743 = pneg %p140
        %p744 = pneg %p164
        %p745 = pneg %p161
        %p746 = pneg %p185
        %p747 = pneg %p182
        %p748 = pneg %p206
        %p749 = pneg %p203
        %p750 = pneg %p227
        %p751 = pneg %p224
        %p752 = pneg %p248
        %p753 = pneg %p245
        %p754 = pneg %p269
        %p755 = pneg %p266
        %p756 = pneg %p290
        %p757 = pneg %p287
        %p758 = pneg %p311
        %p759 = pneg %p308
        %p760 = pneg %p332
        %p761 = pneg %p329
        %p762 = pneg %p353
        %p763 = pneg %p350
        %p764 = pneg %p374
        %p765 = pneg %p371
        %p766 = pneg %p395
        %p767 = pneg %p392
        %p768 = pneg %p416
        %p769 = pneg %p413
        %p770 = pneg %p437
        %p771 = pneg %p434
        %p772 = pneg %p458
        %p773 = pneg %p455
        %p774 = pneg %p484
        %p775 = pneg %p481
        %p776 = scmp.lt.s32.totalorder %s33, 1
        %s777 = scalar_select %p776, %s33, 1
        %s778 = smul.addr %s777, 8
        %s779 = scalar_lea.vmem %s20, %s778
        %p780 = scmp.lt.s32.totalorder %s33, 1
        %s781 = scalar_select %p780, %s33, 1
        %s782 = smul.addr %s781, 8
        %s783 = scalar_lea.vmem %s20, %s782
        %v785 = vld [vmem:[%s2] sm:$0xff]
        %v786 = vld [vmem:[%s2 + $0x8] sm:$0xff]
        %v787 = vld [vmem:[%s2 + $0x10] sm:$0xff]
        %v788 = vld [vmem:[%s2 + $0x18] sm:$0xff]
        %v789 = vld [vmem:[%s2 + $0x20] sm:$0xff]
        %v790 = vld [vmem:[%s2 + $0x28] sm:$0xff]
        %v791 = vld [vmem:[%s2 + $0x30] sm:$0xff]
        %v792 = vld [vmem:[%s2 + $0x38] sm:$0xff]
        %v793 = vld [vmem:[%s2 + $0x40] sm:$0xff]
        %v794 = vld [vmem:[%s2 + $0x48] sm:$0xff]
        %v795 = vld [vmem:[%s2 + $0x50] sm:$0xff]
        %v796 = vld [vmem:[%s2 + $0x58] sm:$0xff]
        %v797 = vld [vmem:[%s2 + $0x60] sm:$0xff]
        %v798 = vld [vmem:[%s2 + $0x68] sm:$0xff]
        %v799 = vld [vmem:[%s2 + $0x70] sm:$0xff]
        %v800 = vld [vmem:[%s2 + $0x78] sm:$0xff]
        %v801 = vld [vmem:[%s5] sm:$0x3]
        %v802 = vld [vmem:[%s715] sm:$0xf]
        %v803 = vld [vmem:[%s715 + $0x4] sm:$0xf]
        %v804 = vld [vmem:[%s715 + $0x8] sm:$0xf]
        %v805 = vld [vmem:[%s715 + $0xc] sm:$0xf]
        %v806 = vld [vmem:[%s715 + $0x10] sm:$0xf]
        %v807 = vld [vmem:[%s715 + $0x14] sm:$0xf]
        %v808 = vld [vmem:[%s715 + $0x18] sm:$0xf]
        %v809 = vld [vmem:[%s715 + $0x1c] sm:$0xf]
        %v811 = vperm.slane %v801, 0
        %v812 = vperm.slane %v801, 1
        %v823 = vunpack.c.l.b16 %v802
        %v824 = vunpack.c.l.b16 %v803
        %v825 = vunpack.c.l.b16 %v804
        %v826 = vunpack.c.l.b16 %v805
        %v827 = vunpack.c.l.b16 %v806
        %v828 = vunpack.c.l.b16 %v807
        %v829 = vunpack.c.l.b16 %v808
        %v830 = vunpack.c.l.b16 %v809
        %v831 = vpack.c.b16 %v824, %v823
        %v832 = vpack.c.b16 %v826, %v825
        %v833 = vpack.c.b16 %v828, %v827
        %v834 = vpack.c.b16 %v830, %v829
        %v855 = vunpack.c.l.b16 %v785
        %v856 = vunpack.c.h.b16 %v785
        %v857 = vunpack.c.l.b16 %v786
        %v858 = vunpack.c.h.b16 %v786
        %v859 = vunpack.c.l.b16 %v787
        %v860 = vunpack.c.h.b16 %v787
        %v861 = vunpack.c.l.b16 %v788
        %v862 = vunpack.c.h.b16 %v788
        %v863 = vunpack.c.l.b16 %v789
        %v864 = vunpack.c.h.b16 %v789
        %v865 = vunpack.c.l.b16 %v790
        %v866 = vunpack.c.h.b16 %v790
        %v867 = vunpack.c.l.b16 %v791
        %v868 = vunpack.c.h.b16 %v791
        %v869 = vunpack.c.l.b16 %v792
        %v870 = vunpack.c.h.b16 %v792
        %v871 = vunpack.c.l.b16 %v793
        %v872 = vunpack.c.h.b16 %v793
        %v873 = vunpack.c.l.b16 %v794
        %v874 = vunpack.c.h.b16 %v794
        %v875 = vunpack.c.l.b16 %v795
        %v876 = vunpack.c.h.b16 %v795
        %v877 = vunpack.c.l.b16 %v796
        %v878 = vunpack.c.h.b16 %v796
        %v879 = vunpack.c.l.b16 %v797
        %v880 = vunpack.c.h.b16 %v797
        %v881 = vunpack.c.l.b16 %v798
        %v882 = vunpack.c.h.b16 %v798
        %v883 = vunpack.c.l.b16 %v799
        %v884 = vunpack.c.h.b16 %v799
        %v885 = vunpack.c.l.b16 %v800
        %v886 = vunpack.c.h.b16 %v800
        %v887 = vpack.c.b16 %v857, %v855
        %v888 = vpack.c.b16 %v858, %v856
        %v889 = vpack.c.b16 %v861, %v859
        %v890 = vpack.c.b16 %v862, %v860
        %v891 = vpack.c.b16 %v865, %v863
        %v892 = vpack.c.b16 %v866, %v864
        %v893 = vpack.c.b16 %v869, %v867
        %v894 = vpack.c.b16 %v870, %v868
        %v895 = vpack.c.b16 %v873, %v871
        %v896 = vpack.c.b16 %v874, %v872
        %v897 = vpack.c.b16 %v877, %v875
        %v898 = vpack.c.b16 %v878, %v876
        %v899 = vpack.c.b16 %v881, %v879
        %v900 = vpack.c.b16 %v882, %v880
        %v901 = vpack.c.b16 %v885, %v883
        %v902 = vpack.c.b16 %v886, %v884
        %919 = vmatpush.bf16.msra.mxu0 %v901
        %920 = vmatpush.bf16.msra.mxu0 %v899
        %921 = vmatpush.bf16.msra.mxu0 %v897
        %922 = vmatpush.bf16.msra.mxu0 %v895
        %923 = vmatpush.bf16.msra.mxu0 %v893
        %924 = vmatpush.bf16.msra.mxu0 %v891
        %925 = vmatpush.bf16.msra.mxu0 %v889
        %926 = vmatpush.bf16.msra.mxu0 %v887
        %927 = vmatmul.bf16.gmra.mxu0 %v831
        %v928 = vpop.f32.mrf.mxu0
        %v929 = vadd.f32 %v811, %v928
        %v930 = vpop.f32.mrf.mxu0
        %v931 = vadd.f32 %v811, %v930
        %932 = vmatmul.bf16.gmra.mxu0 %v832
        %v933 = vpop.f32.mrf.mxu0
        %v934 = vadd.f32 %v811, %v933
        %v935 = vpop.f32.mrf.mxu0
        %v936 = vadd.f32 %v811, %v935
        %937 = vmatmul.bf16.gmra.mxu0 %v833
        %v938 = vpop.f32.mrf.mxu0
        %v939 = vadd.f32 %v811, %v938
        %v940 = vpop.f32.mrf.mxu0
        %v941 = vadd.f32 %v811, %v940
        %942 = vmatmul.bf16.gmra.mxu0 %v834
        %v943 = vpop.f32.mrf.mxu0
        %v944 = vadd.f32 %v811, %v943
        %v945 = vpop.f32.mrf.mxu0
        %v946 = vadd.f32 %v811, %v945
        %947 = vdwg.mxu0
        %948 = vmatpush.bf16.msra.mxu0 %v902
        %949 = vmatpush.bf16.msra.mxu0 %v900
        %950 = vmatpush.bf16.msra.mxu0 %v898
        %951 = vmatpush.bf16.msra.mxu0 %v896
        %952 = vmatpush.bf16.msra.mxu0 %v894
        %953 = vmatpush.bf16.msra.mxu0 %v892
        %954 = vmatpush.bf16.msra.mxu0 %v890
        %955 = vmatpush.bf16.msra.mxu0 %v888
        %956 = vmatmul.bf16.gmra.mxu0 %v831
        %v957 = vpop.f32.mrf.mxu0
        %v958 = vadd.f32 %v812, %v957
        %v959 = vpop.f32.mrf.mxu0
        %v960 = vadd.f32 %v812, %v959
        %961 = vmatmul.bf16.gmra.mxu0 %v832
        %v962 = vpop.f32.mrf.mxu0
        %v963 = vadd.f32 %v812, %v962
        %v964 = vpop.f32.mrf.mxu0
        %v965 = vadd.f32 %v812, %v964
        %966 = vmatmul.bf16.gmra.mxu0 %v833
        %v967 = vpop.f32.mrf.mxu0
        %v968 = vadd.f32 %v812, %v967
        %v969 = vpop.f32.mrf.mxu0
        %v970 = vadd.f32 %v812, %v969
        %971 = vmatmul.bf16.gmra.mxu0 %v834
        %v972 = vpop.f32.mrf.mxu0
        %v973 = vadd.f32 %v812, %v972
        %v974 = vpop.f32.mrf.mxu0
        %v975 = vadd.f32 %v812, %v974
        %976 = vdwg.mxu0
        %977 = vst [vmem:[#allocation2] sm:$0xff] %v929
        %978 = vst [vmem:[#allocation2 + $0x8] sm:$0xff] %v958
        %979 = vst [vmem:[#allocation2 + $0x10] sm:$0xff] %v931
        %980 = vst [vmem:[#allocation2 + $0x18] sm:$0xff] %v960
        %981 = vst [vmem:[#allocation2 + $0x20] sm:$0xff] %v934
        %982 = vst [vmem:[#allocation2 + $0x28] sm:$0xff] %v963
        %983 = vst [vmem:[#allocation2 + $0x30] sm:$0xff] %v936
        %984 = vst [vmem:[#allocation2 + $0x38] sm:$0xff] %v965
        %985 = vst [vmem:[#allocation2 + $0x40] sm:$0xff] %v939
        %986 = vst [vmem:[#allocation2 + $0x48] sm:$0xff] %v968
        %987 = vst [vmem:[#allocation2 + $0x50] sm:$0xff] %v941
        %988 = vst [vmem:[#allocation2 + $0x58] sm:$0xff] %v970
        %989 = vst [vmem:[#allocation2 + $0x60] sm:$0xff] %v944
        %990 = vst [vmem:[#allocation2 + $0x68] sm:$0xff] %v973
        %991 = vst [vmem:[#allocation2 + $0x70] sm:$0xff] %v946
        %992 = vst [vmem:[#allocation2 + $0x78] sm:$0xff] %v975
        %v993 = vld [vmem:[%s722] sm:$0xf]
        %v994 = vld [vmem:[%s722 + $0x4] sm:$0xf]
        %v995 = vld [vmem:[%s722 + $0x8] sm:$0xf]
        %v996 = vld [vmem:[%s722 + $0xc] sm:$0xf]
        %v997 = vld [vmem:[%s722 + $0x10] sm:$0xf]
        %v998 = vld [vmem:[%s722 + $0x14] sm:$0xf]
        %v1005 = vunpack.c.l.b16 %v993
        %v1006 = vunpack.c.l.b16 %v994
        %v1007 = vunpack.c.l.b16 %v995
        %v1008 = vunpack.c.l.b16 %v996
        %v1009 = vunpack.c.l.b16 %v997
        %v1010 = vunpack.c.l.b16 %v998
        %v1011 = vpack.c.b16 %v1006, %v1005
        %v1012 = vpack.c.b16 %v1008, %v1007
        %v1013 = vpack.c.b16 %v1010, %v1009
        %1017 = vmatpush.bf16.msra.mxu0 %v901
        %1018 = vmatpush.bf16.msra.mxu0 %v899
        %1019 = vmatpush.bf16.msra.mxu0 %v897
        %1020 = vmatpush.bf16.msra.mxu0 %v895
        %1021 = vmatpush.bf16.msra.mxu0 %v893
        %1022 = vmatpush.bf16.msra.mxu0 %v891
        %1023 = vmatpush.bf16.msra.mxu0 %v889
        %1024 = vmatpush.bf16.msra.mxu0 %v887
        %1025 = vmatmul.bf16.gmra.mxu0 %v1011
        %v1026 = vpop.f32.mrf.mxu0
        %v1027 = vadd.f32 %v811, %v1026
        %v1028 = vpop.f32.mrf.mxu0
        %v1029 = vadd.f32 %v811, %v1028
        %1030 = vmatmul.bf16.gmra.mxu0 %v1012
        %v1031 = vpop.f32.mrf.mxu0
        %v1032 = vadd.f32 %v811, %v1031
        %v1033 = vpop.f32.mrf.mxu0
        %v1034 = vadd.f32 %v811, %v1033
        %1035 = vmatmul.bf16.gmra.mxu0 %v1013
        %v1036 = vpop.f32.mrf.mxu0
        %v1037 = vadd.f32 %v811, %v1036
        %v1038 = vpop.f32.mrf.mxu0
        %v1039 = vadd.f32 %v811, %v1038
        %1040 = vdwg.mxu0
        %1041 = vmatpush.bf16.msra.mxu0 %v902
        %1042 = vmatpush.bf16.msra.mxu0 %v900
        %1043 = vmatpush.bf16.msra.mxu0 %v898
        %1044 = vmatpush.bf16.msra.mxu0 %v896
        %1045 = vmatpush.bf16.msra.mxu0 %v894
        %1046 = vmatpush.bf16.msra.mxu0 %v892
        %1047 = vmatpush.bf16.msra.mxu0 %v890
        %1048 = vmatpush.bf16.msra.mxu0 %v888
        %1049 = vmatmul.bf16.gmra.mxu0 %v1011
        %v1050 = vpop.f32.mrf.mxu0
        %v1051 = vadd.f32 %v812, %v1050
        %v1052 = vpop.f32.mrf.mxu0
        %v1053 = vadd.f32 %v812, %v1052
        %1054 = vmatmul.bf16.gmra.mxu0 %v1012
        %v1055 = vpop.f32.mrf.mxu0
        %v1056 = vadd.f32 %v812, %v1055
        %v1057 = vpop.f32.mrf.mxu0
        %v1058 = vadd.f32 %v812, %v1057
        %1059 = vmatmul.bf16.gmra.mxu0 %v1013
        %v1060 = vpop.f32.mrf.mxu0
        %v1061 = vadd.f32 %v812, %v1060
        %v1062 = vpop.f32.mrf.mxu0
        %v1063 = vadd.f32 %v812, %v1062
        %1064 = vdwg.mxu0
        %s1065 = scalar_lea.vmem [#allocation2], 128
        %1066 = vst [vmem:[%s1065] sm:$0xff] %v1027
        %1067 = vst [vmem:[%s1065 + $0x8] sm:$0xff] %v1051
        %1068 = vst [vmem:[%s1065 + $0x10] sm:$0xff] %v1029
        %1069 = vst [vmem:[%s1065 + $0x18] sm:$0xff] %v1053
        %1070 = vst [vmem:[%s1065 + $0x20] sm:$0xff] %v1032
        %1071 = vst [vmem:[%s1065 + $0x28] sm:$0xff] %v1056
        %1072 = vst [vmem:[%s1065 + $0x30] sm:$0xff] %v1034
        %1073 = vst [vmem:[%s1065 + $0x38] sm:$0xff] %v1058
        %1074 = vst [vmem:[%s1065 + $0x40] sm:$0xff] %v1037
        %1075 = vst [vmem:[%s1065 + $0x48] sm:$0xff] %v1061
        %1076 = vst [vmem:[%s1065 + $0x50] sm:$0xff] %v1039
        %1077 = vst [vmem:[%s1065 + $0x58] sm:$0xff] %v1063
        %v1078 = vld [vmem:[%s3] sm:$0xf]
        %v1079 = vld [vmem:[%s3 + $0x4] sm:$0xf]
        %v1080 = vld [vmem:[%s3 + $0x8] sm:$0xf]
        %v1081 = vld [vmem:[%s3 + $0xc] sm:$0xf]
        %v1082 = vld [vmem:[%s4] sm:$0xf]
        %v1083 = vld [vmem:[%s4 + $0x4] sm:$0xf]
        %v1084 = vld [vmem:[%s4 + $0x8] sm:$0xf]
        %v1085 = vld [vmem:[%s4 + $0xc] sm:$0xf]
        loop: start=0, step=1, limit=8
        $region183: #{bidaf_forward.1} parent=173 // loop_pre_header
          _
        $region184: #{bidaf_forward.1} parent=173 // loop_header
          %s1087 = sphi 0, %s1091
          %p1088 = scmp.ge.s32.totalorder %s1087, 8
          %v1092 = vphi 0.0, %v1365
          %v1093 = vphi 0.0, %v1366
          %v1094 = vphi 0.0, %v1367
          %v1095 = vphi 0.0, %v1368
          %v1096 = vphi 0.0, %v1369
          %v1097 = vphi 0.0, %v1370
          %v1098 = vphi 0.0, %v1371
          %v1099 = vphi 0.0, %v1372
        $region185: #{bidaf_forward.1} parent=173 // loop_header_branch
          %1090 = sbr.rel (%p1088) target = $region189
        $region186: #{bidaf_forward.1} parent=173 // loop_body
          %p1100 = scmp.lt.s32.totalorder %s1087, 7
          %s1101 = scalar_select %p1100, %s1087, 7
          %p1102 = scmp.lt.s32.totalorder %s1087, 5
          %s1103 = scalar_select %p1102, %s1087, 5
          %s1104 = ssub.s32 7, %s1087
          %p1105 = scmp.gt.s32.totalorder %s1104, 0
          %s1106 = scalar_select %p1105, %s1104, 0
          %s1107 = ssub.s32 5, %s1087
          %p1108 = scmp.gt.s32.totalorder %s1107, 0
          %s1109 = scalar_select %p1108, %s1107, 0
          %s1110 = smul.u32 %s1101, 2
          %s1111 = smul.addr %s1110, 8
          %s1112 = scalar_lea.vmem [#allocation2], %s1111
          %v1113 = vld [vmem:[%s1112] sm:$0xff]
          %s1114 = sadd.s32 %s1103, 8
          %s1115 = smul.u32 %s1114, 2
          %s1116 = smul.addr %s1115, 8
          %s1117 = scalar_lea.vmem [#allocation2], %s1116
          %v1118 = vld [vmem:[%s1117] sm:$0xff]
          %s1119 = smul.u32 %s1106, 2
          %s1120 = smul.addr %s1119, 8
          %s1121 = scalar_lea.vmem [#allocation2], %s1120
          %v1122 = vld [vmem:[%s1121 + $0x8] sm:$0xff]
          %s1123 = sadd.s32 %s1109, 8
          %s1124 = smul.u32 %s1123, 2
          %s1125 = smul.addr %s1124, 8
          %s1126 = scalar_lea.vmem [#allocation2], %s1125
          %v1127 = vld [vmem:[%s1126 + $0x8] sm:$0xff]
          %v1128 = vpack.c.bf16 %v1093, %v1092
          %1130 = vrot.lane.b32.xlu0 %v1128, 32
          %v1131 = vpop.permute.xlu0 %1130
          %v1136 = vunpack.c.l.b16 %v1078
          %v1137 = vunpack.c.l.b16 %v1079
          %v1138 = vunpack.c.l.b16 %v1080
          %v1139 = vunpack.c.l.b16 %v1081
          %v1140 = vpack.c.b16 %v1137, %v1136
          %v1141 = vpack.c.b16 %v1139, %v1138
          %vm1144 = vcmask 261120
          %v1146 = vsel %vm1144, %v1131, 0
          %1148 = vmatpush.bf16.msra.mxu0 0
          %1149 = vmatpush.bf16.msra.mxu0 0
          %1150 = vmatpush.bf16.msra.mxu0 0
          %1151 = vmatpush.bf16.msra.mxu0 0
          %1152 = vmatpush.bf16.msra.mxu0 0
          %1153 = vmatpush.bf16.msra.mxu0 0
          %1154 = vmatpush.bf16.msra.mxu0 %v1141
          %1155 = vmatpush.bf16.msra.mxu0 %v1140
          %1156 = vmatmul.bf16.gmra.mxu0 %v1146
          %v1157 = vpop.f32.mrf.mxu0
          %v1158 = vadd.f32 0.0, %v1157
          %v1159 = vpop.f32.mrf.mxu0
          %v1160 = vadd.f32 0.0, %v1159
          %1161 = vdwg.mxu0
          %v1162 = vadd.f32 %v1113, %v1158
          %v1163 = vadd.f32 %v1118, %v1160
          %v1164 = vpack.c.bf16 %v1097, %v1096
          %1166 = vrot.lane.b32.xlu0 %v1164, 32
          %v1167 = vpop.permute.xlu0 %1166
          %v1172 = vunpack.c.l.b16 %v1082
          %v1173 = vunpack.c.l.b16 %v1083
          %v1174 = vunpack.c.l.b16 %v1084
          %v1175 = vunpack.c.l.b16 %v1085
          %v1176 = vpack.c.b16 %v1173, %v1172
          %v1177 = vpack.c.b16 %v1175, %v1174
          %v1181 = vsel %vm1144, %v1167, 0
          %1183 = vmatpush.bf16.msra.mxu0 0
          %1184 = vmatpush.bf16.msra.mxu0 0
          %1185 = vmatpush.bf16.msra.mxu0 0
          %1186 = vmatpush.bf16.msra.mxu0 0
          %1187 = vmatpush.bf16.msra.mxu0 0
          %1188 = vmatpush.bf16.msra.mxu0 0
          %1189 = vmatpush.bf16.msra.mxu0 %v1177
          %1190 = vmatpush.bf16.msra.mxu0 %v1176
          %1191 = vmatmul.bf16.gmra.mxu0 %v1181
          %v1192 = vpop.f32.mrf.mxu0
          %v1193 = vadd.f32 0.0, %v1192
          %v1194 = vpop.f32.mrf.mxu0
          %v1195 = vadd.f32 0.0, %v1194
          %1196 = vdwg.mxu0
          %v1197 = vadd.f32 %v1122, %v1193
          %v1198 = vadd.f32 %v1127, %v1195
          %v1199 = vxor.u32 %v1162, 2147483648
          %v1200 = vxor.u32 %v1163, 2147483648
          %v1201 = vmul.f32 %v1199, 1.442695
          %v1202 = vpow.pop %v1201
          %v1203 = vmul.f32 %v1200, 1.442695
          %v1204 = vpow.pop %v1203
          %v1205 = vadd.f32 %v1202, 1.0
          %v1206 = vadd.f32 %v1204, 1.0
          %v1207 = vrcp.pop %v1205
          %v1208 = vmul.f32 %v1205, %v1207
          %v1209 = vsub.f32 1.0, %v1208
          %v1210 = vmul.f32 %v1207, %v1209
          %v1211 = vadd.f32 %v1207, %v1210
          %vm1212 = vweird.f32 %v1205
          %vm1213 = vweird.f32 %v1207
          %vm1214 = vmor %vm1212, %vm1213
          %v1215 = vsel %vm1214, %v1207, %v1211
          %v1216 = vand.u32 2147483647, %v1205
          %vm1217 = vcmp.eq.f32.partialorder %v1216, 8.507059e+37
          %v1218 = vand.u32 %v1205, 2147483648
          %v1219 = vor.u32 1.1754944e-38, %v1218
          %v1220 = vsel %vm1217, %v1219, %v1215
          %v1221 = vmul.f32 1.0, %v1220
          %v1222 = vrcp.pop %v1206
          %v1223 = vmul.f32 %v1206, %v1222
          %v1224 = vsub.f32 1.0, %v1223
          %v1225 = vmul.f32 %v1222, %v1224
          %v1226 = vadd.f32 %v1222, %v1225
          %vm1227 = vweird.f32 %v1206
          %vm1228 = vweird.f32 %v1222
          %vm1229 = vmor %vm1227, %vm1228
          %v1230 = vsel %vm1229, %v1222, %v1226
          %v1231 = vand.u32 2147483647, %v1206
          %vm1232 = vcmp.eq.f32.partialorder %v1231, 8.507059e+37
          %v1233 = vand.u32 %v1206, 2147483648
          %v1234 = vor.u32 1.1754944e-38, %v1233
          %v1235 = vsel %vm1232, %v1234, %v1230
          %v1236 = vmul.f32 1.0, %v1235
          %v1237 = vtanh.pop %v1162
          %v1238 = vtanh.pop %v1163
          %v1239 = vmul.f32 %v1221, %v1094
          %v1240 = vmul.f32 %v1236, %v1095
          %1243 = vrot.lane.b32.xlu0 %v1237, 64
          %v1244 = vpop.permute.xlu0 %1243
          %1245 = vrot.lane.b32.xlu0 %v1238, 64
          %v1246 = vpop.permute.xlu0 %1245
          %v1249 = vmul.f32 %v1221, %v1244
          %v1250 = vmul.f32 %v1236, %v1246
          %1253 = vrot.lane.b32.xlu0 %v1249, 32
          %v1254 = vpop.permute.xlu0 %1253
          %1255 = vrot.lane.b32.xlu0 %v1250, 32
          %v1256 = vpop.permute.xlu0 %1255
          %v1259 = vadd.f32 %v1239, %v1254
          %v1260 = vadd.f32 %v1240, %v1256
          %v1261 = vtanh.pop %v1259
          %v1262 = vtanh.pop %v1260
          %1265 = vrot.lane.b32.xlu0 %v1261, 64
          %v1266 = vpop.permute.xlu0 %1265
          %1267 = vrot.lane.b32.xlu0 %v1262, 64
          %v1268 = vpop.permute.xlu0 %1267
          %v1271 = vmul.f32 %v1221, %v1266
          %v1272 = vmul.f32 %v1236, %v1268
          %v1273 = vxor.u32 %v1197, 2147483648
          %v1274 = vxor.u32 %v1198, 2147483648
          %v1275 = vmul.f32 %v1273, 1.442695
          %v1276 = vpow.pop %v1275
          %v1277 = vmul.f32 %v1274, 1.442695
          %v1278 = vpow.pop %v1277
          %v1279 = vadd.f32 %v1276, 1.0
          %v1280 = vadd.f32 %v1278, 1.0
          %v1281 = vrcp.pop %v1279
          %v1282 = vmul.f32 %v1279, %v1281
          %v1283 = vsub.f32 1.0, %v1282
          %v1284 = vmul.f32 %v1281, %v1283
          %v1285 = vadd.f32 %v1281, %v1284
          %vm1286 = vweird.f32 %v1279
          %vm1287 = vweird.f32 %v1281
          %vm1288 = vmor %vm1286, %vm1287
          %v1289 = vsel %vm1288, %v1281, %v1285
          %v1290 = vand.u32 2147483647, %v1279
          %vm1291 = vcmp.eq.f32.partialorder %v1290, 8.507059e+37
          %v1292 = vand.u32 %v1279, 2147483648
          %v1293 = vor.u32 1.1754944e-38, %v1292
          %v1294 = vsel %vm1291, %v1293, %v1289
          %v1295 = vmul.f32 1.0, %v1294
          %v1296 = vrcp.pop %v1280
          %v1297 = vmul.f32 %v1280, %v1296
          %v1298 = vsub.f32 1.0, %v1297
          %v1299 = vmul.f32 %v1296, %v1298
          %v1300 = vadd.f32 %v1296, %v1299
          %vm1301 = vweird.f32 %v1280
          %vm1302 = vweird.f32 %v1296
          %vm1303 = vmor %vm1301, %vm1302
          %v1304 = vsel %vm1303, %v1296, %v1300
          %v1305 = vand.u32 2147483647, %v1280
          %vm1306 = vcmp.eq.f32.partialorder %v1305, 8.507059e+37
          %v1307 = vand.u32 %v1280, 2147483648
          %v1308 = vor.u32 1.1754944e-38, %v1307
          %v1309 = vsel %vm1306, %v1308, %v1304
          %v1310 = vmul.f32 1.0, %v1309
          %v1311 = vtanh.pop %v1197
          %v1312 = vtanh.pop %v1198
          %v1313 = vmul.f32 %v1295, %v1098
          %v1314 = vmul.f32 %v1310, %v1099
          %1317 = vrot.lane.b32.xlu0 %v1311, 64
          %v1318 = vpop.permute.xlu0 %1317
          %1319 = vrot.lane.b32.xlu0 %v1312, 64
          %v1320 = vpop.permute.xlu0 %1319
          %v1323 = vmul.f32 %v1295, %v1318
          %v1324 = vmul.f32 %v1310, %v1320
          %1327 = vrot.lane.b32.xlu0 %v1323, 32
          %v1328 = vpop.permute.xlu0 %1327
          %1329 = vrot.lane.b32.xlu0 %v1324, 32
          %v1330 = vpop.permute.xlu0 %1329
          %v1333 = vadd.f32 %v1313, %v1328
          %v1334 = vadd.f32 %v1314, %v1330
          %v1335 = vtanh.pop %v1333
          %v1336 = vtanh.pop %v1334
          %1339 = vrot.lane.b32.xlu0 %v1335, 64
          %v1340 = vpop.permute.xlu0 %1339
          %1341 = vrot.lane.b32.xlu0 %v1336, 64
          %v1342 = vpop.permute.xlu0 %1341
          %v1345 = vmul.f32 %v1295, %v1340
          %v1346 = vmul.f32 %v1310, %v1342
          %p1347 = scmp.lt.s32.totalorder %s1087, 8
          %s1348 = scalar_select %p1347, 1, 0
          %v1349 = vstv %s1348
          %vm1350 = vcmp.eq.s32.totalorder %v1349, 1
          %p1351 = scmp.lt.s32.totalorder %s1087, 6
          %s1352 = scalar_select %p1351, 1, 0
          %v1353 = vstv %s1352
          %vm1354 = vcmp.eq.s32.totalorder %v1353, 1
          %v1355 = vsel %vm1350, 1, 0
          %v1356 = vsel %vm1354, 1, 0
          %1357 = vset.pattern.permute.xlu0 0
          %1358 = vperm.xlu0 %1357, %v1355
          %v1359 = vpop.permute.xlu0 %1358
          %1360 = vset.pattern.permute.xlu0 0
          %1361 = vperm.xlu0 %1360, %v1356
          %v1362 = vpop.permute.xlu0 %1361
          %vm1363 = vcmp.eq.s32.totalorder %v1359, 1
          %vm1364 = vcmp.eq.s32.totalorder %v1362, 1
          %v1365 = vsel %vm1363, %v1271, %v1092
          %v1366 = vsel %vm1364, %v1272, %v1093
          %v1367 = vsel %vm1363, %v1259, %v1094
          %v1368 = vsel %vm1364, %v1260, %v1095
          %v1369 = vsel %vm1363, %v1345, %v1096
          %v1370 = vsel %vm1364, %v1346, %v1097
          %v1371 = vsel %vm1363, %v1333, %v1098
          %v1372 = vsel %vm1364, %v1334, %v1099
          %1374 = vrot.lane.b32.xlu0 %v1365, 32
          %v1375 = vpop.permute.xlu0 %1374
          %s1377 = smul.u32 %s1101, 8
          %s1378 = scalar_lea.vmem [#allocation3], %s1377
          %1379 = vst.msk [vmem:[%s1378] sm:$0xff] %vm1144, %v1375
          %1381 = vrot.lane.b32.xlu0 %v1369, 64
          %v1382 = vpop.permute.xlu0 %1381
          %s1384 = smul.u32 %s1106, 8
          %s1385 = scalar_lea.vmem [#allocation3], %s1384
          %vm1386 = vcmask 523520
          %1387 = vst.msk [vmem:[%s1385] sm:$0xff] %vm1386, %v1382
          %1389 = vrot.lane.b32.xlu0 %v1366, 32
          %v1390 = vpop.permute.xlu0 %1389
          %s1392 = smul.u32 %s1103, 8
          %s1393 = scalar_lea.vmem [#allocation4], %s1392
          %1394 = vst.msk [vmem:[%s1393] sm:$0xff] %vm1144, %v1390
          %1396 = vrot.lane.b32.xlu0 %v1370, 64
          %v1397 = vpop.permute.xlu0 %1396
          %s1399 = smul.u32 %s1109, 8
          %s1400 = scalar_lea.vmem [#allocation4], %s1399
          %1401 = vst.msk [vmem:[%s1400] sm:$0xff] %vm1386, %v1397
        $region187: #{bidaf_forward.1} parent=173 // loop_footer
          %s1091 = sadd.s32 1, %s1087
        $region188: #{bidaf_forward.1} parent=173 // loop_footer_branch
          %1086 = sbr.rel target = $region184
        $region189: #{bidaf_forward.1} parent=173 // loop_exit
          _
        %v1402 = vld [vmem:[#allocation3] sm:$0xff]
        %v1403 = vld [vmem:[#allocation3 + $0x8] sm:$0xff]
        %v1404 = vld [vmem:[#allocation3 + $0x10] sm:$0xff]
        %v1405 = vld [vmem:[#allocation3 + $0x18] sm:$0xff]
        %v1406 = vld [vmem:[#allocation3 + $0x20] sm:$0xff]
        %v1407 = vld [vmem:[#allocation3 + $0x28] sm:$0xff]
        %v1408 = vld [vmem:[#allocation3 + $0x30] sm:$0xff]
        %v1409 = vld [vmem:[#allocation3 + $0x38] sm:$0xff]
        %v1410 = vld [vmem:[#allocation4] sm:$0xff]
        %v1411 = vld [vmem:[#allocation4 + $0x8] sm:$0xff]
        %v1412 = vld [vmem:[#allocation4 + $0x10] sm:$0xff]
        %v1413 = vld [vmem:[#allocation4 + $0x18] sm:$0xff]
        %v1414 = vld [vmem:[#allocation4 + $0x20] sm:$0xff]
        %v1415 = vld [vmem:[#allocation4 + $0x28] sm:$0xff]
        %v1416 = vrot.slane %v1404, 4
        %vm1417 = vcmask 1047556
        %v1418 = vsel %vm1417, %v1416, %v1402
        %v1419 = vrot.slane %v1402, 4
        %v1420 = vsel %vm1417, %v1404, %v1419
        %v1422 = vunpack.c.l.s4 1983009808
        %v1423 = vunpack.c.0.s8 %v1422
        %v1424 = vperm.slane %v1418, %v1423
        %v1426 = vunpack.c.l.s4 1983009808
        %v1427 = vunpack.c.0.s8 %v1426
        %v1428 = vperm.slane %v1420, %v1427
        %v1429 = vrot.slane %v1405, 4
        %v1430 = vsel %vm1417, %v1429, %v1403
        %v1431 = vrot.slane %v1403, 4
        %v1432 = vsel %vm1417, %v1405, %v1431
        %v1434 = vunpack.c.l.s4 1983009808
        %v1435 = vunpack.c.0.s8 %v1434
        %v1436 = vperm.slane %v1430, %v1435
        %v1438 = vunpack.c.l.s4 1983009808
        %v1439 = vunpack.c.0.s8 %v1438
        %v1440 = vperm.slane %v1432, %v1439
        %v1441 = vrot.slane %v1408, 4
        %v1442 = vsel %vm1417, %v1441, %v1406
        %v1443 = vrot.slane %v1406, 4
        %v1444 = vsel %vm1417, %v1408, %v1443
        %v1446 = vunpack.c.l.s4 1983009808
        %v1447 = vunpack.c.0.s8 %v1446
        %v1448 = vperm.slane %v1442, %v1447
        %v1450 = vunpack.c.l.s4 1983009808
        %v1451 = vunpack.c.0.s8 %v1450
        %v1452 = vperm.slane %v1444, %v1451
        %v1453 = vrot.slane %v1409, 4
        %v1454 = vsel %vm1417, %v1453, %v1407
        %v1455 = vrot.slane %v1407, 4
        %v1456 = vsel %vm1417, %v1409, %v1455
        %v1458 = vunpack.c.l.s4 1983009808
        %v1459 = vunpack.c.0.s8 %v1458
        %v1460 = vperm.slane %v1454, %v1459
        %v1462 = vunpack.c.l.s4 1983009808
        %v1463 = vunpack.c.0.s8 %v1462
        %v1464 = vperm.slane %v1456, %v1463
        %v1465 = vrot.slane %v1436, 4
        %v1466 = vsel %vm1417, %v1465, %v1424
        %v1467 = vrot.slane %v1424, 4
        %v1468 = vsel %vm1417, %v1436, %v1467
        %v1470 = vunpack.c.l.s4 1934713408
        %v1471 = vunpack.c.0.s8 %v1470
        %v1472 = vperm.slane %v1466, %v1471
        %v1474 = vunpack.c.l.s4 1934713408
        %v1475 = vunpack.c.0.s8 %v1474
        %v1476 = vperm.slane %v1468, %v1475
        %v1477 = vrot.slane %v1440, 4
        %v1478 = vsel %vm1417, %v1477, %v1428
        %v1479 = vrot.slane %v1428, 4
        %v1480 = vsel %vm1417, %v1440, %v1479
        %v1482 = vunpack.c.l.s4 1934713408
        %v1483 = vunpack.c.0.s8 %v1482
        %v1484 = vperm.slane %v1478, %v1483
        %v1486 = vunpack.c.l.s4 1934713408
        %v1487 = vunpack.c.0.s8 %v1486
        %v1488 = vperm.slane %v1480, %v1487
        %v1489 = vrot.slane %v1460, 4
        %v1490 = vsel %vm1417, %v1489, %v1448
        %v1491 = vrot.slane %v1448, 4
        %v1492 = vsel %vm1417, %v1460, %v1491
        %v1494 = vunpack.c.l.s4 1934713408
        %v1495 = vunpack.c.0.s8 %v1494
        %v1496 = vperm.slane %v1490, %v1495
        %v1498 = vunpack.c.l.s4 1934713408
        %v1499 = vunpack.c.0.s8 %v1498
        %v1500 = vperm.slane %v1492, %v1499
        %v1501 = vrot.slane %v1464, 4
        %v1502 = vsel %vm1417, %v1501, %v1452
        %v1503 = vrot.slane %v1452, 4
        %v1504 = vsel %vm1417, %v1464, %v1503
        %v1506 = vunpack.c.l.s4 1934713408
        %v1507 = vunpack.c.0.s8 %v1506
        %v1508 = vperm.slane %v1502, %v1507
        %v1510 = vunpack.c.l.s4 1934713408
        %v1511 = vunpack.c.0.s8 %v1510
        %v1512 = vperm.slane %v1504, %v1511
        %v1513 = vrot.slane %v1496, 4
        %v1514 = vsel %vm1417, %v1513, %v1472
        %v1515 = vrot.slane %v1472, 4
        %v1516 = vsel %vm1417, %v1496, %v1515
        %v1517 = vrot.slane %v1500, 4
        %v1518 = vsel %vm1417, %v1517, %v1476
        %v1519 = vrot.slane %v1476, 4
        %v1520 = vsel %vm1417, %v1500, %v1519
        %v1521 = vrot.slane %v1508, 4
        %v1522 = vsel %vm1417, %v1521, %v1484
        %v1523 = vrot.slane %v1484, 4
        %v1524 = vsel %vm1417, %v1508, %v1523
        %v1525 = vrot.slane %v1512, 4
        %v1526 = vsel %vm1417, %v1525, %v1488
        %v1527 = vrot.slane %v1488, 4
        %v1528 = vsel %vm1417, %v1512, %v1527
        %v1529 = vrot.slane %v1412, 4
        %v1530 = vsel %vm1417, %v1529, %v1410
        %v1531 = vrot.slane %v1410, 4
        %v1532 = vsel %vm1417, %v1412, %v1531
        %v1534 = vunpack.c.l.s4 1983009808
        %v1535 = vunpack.c.0.s8 %v1534
        %v1536 = vperm.slane %v1530, %v1535
        %v1538 = vunpack.c.l.s4 1983009808
        %v1539 = vunpack.c.0.s8 %v1538
        %v1540 = vperm.slane %v1532, %v1539
        %v1541 = vrot.slane %v1413, 4
        %v1542 = vsel %vm1417, %v1541, %v1411
        %v1543 = vrot.slane %v1411, 4
        %v1544 = vsel %vm1417, %v1413, %v1543
        %v1546 = vunpack.c.l.s4 1983009808
        %v1547 = vunpack.c.0.s8 %v1546
        %v1548 = vperm.slane %v1542, %v1547
        %v1550 = vunpack.c.l.s4 1983009808
        %v1551 = vunpack.c.0.s8 %v1550
        %v1552 = vperm.slane %v1544, %v1551
        %v1553 = vrot.slane %v1414, 4
        %v1554 = vsel %vm1417, 0.0, %v1553
        %v1556 = vunpack.c.l.s4 1983009808
        %v1557 = vunpack.c.0.s8 %v1556
        %v1558 = vperm.slane %v1414, %v1557
        %v1560 = vunpack.c.l.s4 1983009808
        %v1561 = vunpack.c.0.s8 %v1560
        %v1562 = vperm.slane %v1554, %v1561
        %v1563 = vrot.slane %v1415, 4
        %v1564 = vsel %vm1417, 0.0, %v1563
        %v1566 = vunpack.c.l.s4 1983009808
        %v1567 = vunpack.c.0.s8 %v1566
        %v1568 = vperm.slane %v1415, %v1567
        %v1570 = vunpack.c.l.s4 1983009808
        %v1571 = vunpack.c.0.s8 %v1570
        %v1572 = vperm.slane %v1564, %v1571
        %v1573 = vrot.slane %v1548, 4
        %v1574 = vsel %vm1417, %v1573, %v1536
        %v1575 = vrot.slane %v1536, 4
        %v1576 = vsel %vm1417, %v1548, %v1575
        %v1578 = vunpack.c.l.s4 1934713408
        %v1579 = vunpack.c.0.s8 %v1578
        %v1580 = vperm.slane %v1574, %v1579
        %v1582 = vunpack.c.l.s4 1934713408
        %v1583 = vunpack.c.0.s8 %v1582
        %v1584 = vperm.slane %v1576, %v1583
        %v1585 = vrot.slane %v1552, 4
        %v1586 = vsel %vm1417, %v1585, %v1540
        %v1587 = vrot.slane %v1540, 4
        %v1588 = vsel %vm1417, %v1552, %v1587
        %v1590 = vunpack.c.l.s4 1934713408
        %v1591 = vunpack.c.0.s8 %v1590
        %v1592 = vperm.slane %v1586, %v1591
        %v1594 = vunpack.c.l.s4 1934713408
        %v1595 = vunpack.c.0.s8 %v1594
        %v1596 = vperm.slane %v1588, %v1595
        %v1597 = vrot.slane %v1568, 4
        %v1598 = vsel %vm1417, %v1597, %v1558
        %v1599 = vrot.slane %v1558, 4
        %v1600 = vsel %vm1417, %v1568, %v1599
        %v1602 = vunpack.c.l.s4 1934713408
        %v1603 = vunpack.c.0.s8 %v1602
        %v1604 = vperm.slane %v1598, %v1603
        %v1606 = vunpack.c.l.s4 1934713408
        %v1607 = vunpack.c.0.s8 %v1606
        %v1608 = vperm.slane %v1600, %v1607
        %v1609 = vrot.slane %v1572, 4
        %v1610 = vsel %vm1417, %v1609, %v1562
        %v1611 = vrot.slane %v1562, 4
        %v1612 = vsel %vm1417, %v1572, %v1611
        %v1614 = vunpack.c.l.s4 1934713408
        %v1615 = vunpack.c.0.s8 %v1614
        %v1616 = vperm.slane %v1610, %v1615
        %v1618 = vunpack.c.l.s4 1934713408
        %v1619 = vunpack.c.0.s8 %v1618
        %v1620 = vperm.slane %v1612, %v1619
        %v1621 = vrot.slane %v1604, 4
        %v1622 = vsel %vm1417, %v1621, %v1580
        %v1623 = vrot.slane %v1580, 4
        %v1624 = vsel %vm1417, %v1604, %v1623
        %v1625 = vrot.slane %v1608, 4
        %v1626 = vsel %vm1417, %v1625, %v1584
        %v1627 = vrot.slane %v1584, 4
        %v1628 = vsel %vm1417, %v1608, %v1627
        %v1629 = vrot.slane %v1616, 4
        %v1630 = vsel %vm1417, %v1629, %v1592
        %v1631 = vrot.slane %v1592, 4
        %v1632 = vsel %vm1417, %v1616, %v1631
        %v1633 = vrot.slane %v1620, 4
        %v1634 = vsel %vm1417, %v1633, %v1596
        %v1635 = vrot.slane %v1596, 4
        %v1636 = vsel %vm1417, %v1620, %v1635
        %v1637 = vpack.c.bf16 %v1514, %v1514
        %v1638 = vpack.c.bf16 %v1516, %v1516
        %v1639 = vpack.c.bf16 %v1518, %v1518
        %v1640 = vpack.c.bf16 %v1520, %v1520
        %v1641 = vpack.c.bf16 %v1522, %v1522
        %v1642 = vpack.c.bf16 %v1524, %v1524
        %v1643 = vpack.c.bf16 %v1526, %v1526
        %v1644 = vpack.c.bf16 %v1528, %v1528
        %v1645 = vpack.c.bf16 %v1622, %v1622
        %v1646 = vpack.c.bf16 %v1624, %v1624
        %v1647 = vpack.c.bf16 %v1626, %v1626
        %v1648 = vpack.c.bf16 %v1628, %v1628
        %v1649 = vpack.c.bf16 %v1630, %v1630
        %v1650 = vpack.c.bf16 %v1632, %v1632
        %v1651 = vpack.c.bf16 %v1634, %v1634
        %v1652 = vpack.c.bf16 %v1636, %v1636
        %vm1653 = vcmask 523264
        %v1655 = vsel %vm1653, %v1637, 0
        %v1658 = vsel %vm1653, %v1645, 0
        %1660 = vmatpush.bf16.xpose.msra.mxu0 0
        %1661 = vmatpush.bf16.xpose.msra.mxu0 0
        %1662 = vmatpush.bf16.xpose.msra.mxu0 0
        %1663 = vmatpush.bf16.xpose.msra.mxu0 0
        %1664 = vmatpush.bf16.xpose.msra.mxu0 0
        %1665 = vmatpush.bf16.xpose.msra.mxu0 0
        %1666 = vmatpush.bf16.xpose.msra.mxu0 0
        %1667 = vmatpush.bf16.xpose.msra.mxu0 %v1658
        %1668 = vmatmul.bf16.gmra.mxu0 %v1655
        %v1669 = vpop.f32.mrf.mxu0
        %v1670 = vadd.f32 0.0, %v1669
        %v1671 = vpop.f32.mrf.mxu0
        %1672 = vdwg.mxu0
        %v1674 = vsel %vm1653, %v1638, 0
        %v1677 = vsel %vm1653, %v1646, 0
        %1679 = vmatpush.bf16.xpose.msra.mxu0 0
        %1680 = vmatpush.bf16.xpose.msra.mxu0 0
        %1681 = vmatpush.bf16.xpose.msra.mxu0 0
        %1682 = vmatpush.bf16.xpose.msra.mxu0 0
        %1683 = vmatpush.bf16.xpose.msra.mxu0 0
        %1684 = vmatpush.bf16.xpose.msra.mxu0 0
        %1685 = vmatpush.bf16.xpose.msra.mxu0 0
        %1686 = vmatpush.bf16.xpose.msra.mxu0 %v1677
        %1687 = vmatmul.bf16.gmra.mxu0 %v1674
        %v1688 = vpop.f32.mrf.mxu0
        %v1689 = vadd.f32 0.0, %v1688
        %v1690 = vpop.f32.mrf.mxu0
        %1691 = vdwg.mxu0
        %v1693 = vsel %vm1653, %v1639, 0
        %v1696 = vsel %vm1653, %v1647, 0
        %1698 = vmatpush.bf16.xpose.msra.mxu0 0
        %1699 = vmatpush.bf16.xpose.msra.mxu0 0
        %1700 = vmatpush.bf16.xpose.msra.mxu0 0
        %1701 = vmatpush.bf16.xpose.msra.mxu0 0
        %1702 = vmatpush.bf16.xpose.msra.mxu0 0
        %1703 = vmatpush.bf16.xpose.msra.mxu0 0
        %1704 = vmatpush.bf16.xpose.msra.mxu0 0
        %1705 = vmatpush.bf16.xpose.msra.mxu0 %v1696
        %1706 = vmatmul.bf16.gmra.mxu0 %v1693
        %v1707 = vpop.f32.mrf.mxu0
        %v1708 = vadd.f32 0.0, %v1707
        %v1709 = vpop.f32.mrf.mxu0
        %1710 = vdwg.mxu0
        %v1712 = vsel %vm1653, %v1640, 0
        %v1715 = vsel %vm1653, %v1648, 0
        %1717 = vmatpush.bf16.xpose.msra.mxu0 0
        %1718 = vmatpush.bf16.xpose.msra.mxu0 0
        %1719 = vmatpush.bf16.xpose.msra.mxu0 0
        %1720 = vmatpush.bf16.xpose.msra.mxu0 0
        %1721 = vmatpush.bf16.xpose.msra.mxu0 0
        %1722 = vmatpush.bf16.xpose.msra.mxu0 0
        %1723 = vmatpush.bf16.xpose.msra.mxu0 0
        %1724 = vmatpush.bf16.xpose.msra.mxu0 %v1715
        %1725 = vmatmul.bf16.gmra.mxu0 %v1712
        %v1726 = vpop.f32.mrf.mxu0
        %v1727 = vadd.f32 0.0, %v1726
        %v1728 = vpop.f32.mrf.mxu0
        %1729 = vdwg.mxu0
        %v1731 = vsel %vm1653, %v1641, 0
        %v1734 = vsel %vm1653, %v1649, 0
        %1736 = vmatpush.bf16.xpose.msra.mxu0 0
        %1737 = vmatpush.bf16.xpose.msra.mxu0 0
        %1738 = vmatpush.bf16.xpose.msra.mxu0 0
        %1739 = vmatpush.bf16.xpose.msra.mxu0 0
        %1740 = vmatpush.bf16.xpose.msra.mxu0 0
        %1741 = vmatpush.bf16.xpose.msra.mxu0 0
        %1742 = vmatpush.bf16.xpose.msra.mxu0 0
        %1743 = vmatpush.bf16.xpose.msra.mxu0 %v1734
        %1744 = vmatmul.bf16.gmra.mxu0 %v1731
        %v1745 = vpop.f32.mrf.mxu0
        %v1746 = vadd.f32 0.0, %v1745
        %v1747 = vpop.f32.mrf.mxu0
        %1748 = vdwg.mxu0
        %v1750 = vsel %vm1653, %v1642, 0
        %v1753 = vsel %vm1653, %v1650, 0
        %1755 = vmatpush.bf16.xpose.msra.mxu0 0
        %1756 = vmatpush.bf16.xpose.msra.mxu0 0
        %1757 = vmatpush.bf16.xpose.msra.mxu0 0
        %1758 = vmatpush.bf16.xpose.msra.mxu0 0
        %1759 = vmatpush.bf16.xpose.msra.mxu0 0
        %1760 = vmatpush.bf16.xpose.msra.mxu0 0
        %1761 = vmatpush.bf16.xpose.msra.mxu0 0
        %1762 = vmatpush.bf16.xpose.msra.mxu0 %v1753
        %1763 = vmatmul.bf16.gmra.mxu0 %v1750
        %v1764 = vpop.f32.mrf.mxu0
        %v1765 = vadd.f32 0.0, %v1764
        %v1766 = vpop.f32.mrf.mxu0
        %1767 = vdwg.mxu0
        %v1769 = vsel %vm1653, %v1643, 0
        %v1772 = vsel %vm1653, %v1651, 0
        %1774 = vmatpush.bf16.xpose.msra.mxu0 0
        %1775 = vmatpush.bf16.xpose.msra.mxu0 0
        %1776 = vmatpush.bf16.xpose.msra.mxu0 0
        %1777 = vmatpush.bf16.xpose.msra.mxu0 0
        %1778 = vmatpush.bf16.xpose.msra.mxu0 0
        %1779 = vmatpush.bf16.xpose.msra.mxu0 0
        %1780 = vmatpush.bf16.xpose.msra.mxu0 0
        %1781 = vmatpush.bf16.xpose.msra.mxu0 %v1772
        %1782 = vmatmul.bf16.gmra.mxu0 %v1769
        %v1783 = vpop.f32.mrf.mxu0
        %v1784 = vadd.f32 0.0, %v1783
        %v1785 = vpop.f32.mrf.mxu0
        %1786 = vdwg.mxu0
        %v1788 = vsel %vm1653, %v1644, 0
        %v1791 = vsel %vm1653, %v1652, 0
        %1793 = vmatpush.bf16.xpose.msra.mxu0 0
        %1794 = vmatpush.bf16.xpose.msra.mxu0 0
        %1795 = vmatpush.bf16.xpose.msra.mxu0 0
        %1796 = vmatpush.bf16.xpose.msra.mxu0 0
        %1797 = vmatpush.bf16.xpose.msra.mxu0 0
        %1798 = vmatpush.bf16.xpose.msra.mxu0 0
        %1799 = vmatpush.bf16.xpose.msra.mxu0 0
        %1800 = vmatpush.bf16.xpose.msra.mxu0 %v1791
        %1801 = vmatmul.bf16.gmra.mxu0 %v1788
        %v1802 = vpop.f32.mrf.mxu0
        %v1803 = vadd.f32 0.0, %v1802
        %v1804 = vpop.f32.mrf.mxu0
        %1805 = vdwg.mxu0
        %vm1806 = vcmask 48128
        %v1807 = vsel %vm1806, %v1670, -inf
        %1808 = vmax.xlane.f32.xlu0 %v1807
        %v1809 = vpop.xlane.xlu0 %1808
        %v1810 = vsel %vm1806, %v1689, -inf
        %1811 = vmax.xlane.f32.xlu0 %v1810
        %v1812 = vpop.xlane.xlu0 %1811
        %v1813 = vsel %vm1806, %v1708, -inf
        %1814 = vmax.xlane.f32.xlu0 %v1813
        %v1815 = vpop.xlane.xlu0 %1814
        %v1816 = vsel %vm1806, %v1727, -inf
        %1817 = vmax.xlane.f32.xlu0 %v1816
        %v1818 = vpop.xlane.xlu0 %1817
        %v1819 = vsel %vm1806, %v1746, -inf
        %1820 = vmax.xlane.f32.xlu0 %v1819
        %v1821 = vpop.xlane.xlu0 %1820
        %v1822 = vsel %vm1806, %v1765, -inf
        %1823 = vmax.xlane.f32.xlu0 %v1822
        %v1824 = vpop.xlane.xlu0 %1823
        %v1825 = vsel %vm1806, %v1784, -inf
        %1826 = vmax.xlane.f32.xlu0 %v1825
        %v1827 = vpop.xlane.xlu0 %1826
        %v1828 = vsel %vm1806, %v1803, -inf
        %1829 = vmax.xlane.f32.xlu0 %v1828
        %v1830 = vpop.xlane.xlu0 %1829
        %v1831 = vsub.f32 %v1670, %v1809
        %v1832 = vsub.f32 %v1689, %v1812
        %v1833 = vsub.f32 %v1708, %v1815
        %v1834 = vsub.f32 %v1727, %v1818
        %v1835 = vsub.f32 %v1746, %v1821
        %v1836 = vsub.f32 %v1765, %v1824
        %v1837 = vsub.f32 %v1784, %v1827
        %v1838 = vsub.f32 %v1803, %v1830
        %v1839 = vmul.f32 %v1831, 1.442695
        %v1840 = vpow.pop %v1839
        %v1841 = vmul.f32 %v1832, 1.442695
        %v1842 = vpow.pop %v1841
        %v1843 = vmul.f32 %v1833, 1.442695
        %v1844 = vpow.pop %v1843
        %v1845 = vmul.f32 %v1834, 1.442695
        %v1846 = vpow.pop %v1845
        %v1847 = vmul.f32 %v1835, 1.442695
        %v1848 = vpow.pop %v1847
        %v1849 = vmul.f32 %v1836, 1.442695
        %v1850 = vpow.pop %v1849
        %v1851 = vmul.f32 %v1837, 1.442695
        %v1852 = vpow.pop %v1851
        %v1853 = vmul.f32 %v1838, 1.442695
        %v1854 = vpow.pop %v1853
        %v1855 = vsel %vm1806, %v1840, 0.0
        %1856 = vadd.xlane.f32.xlu0 %v1855
        %v1857 = vpop.xlane.xlu0 %1856
        %v1858 = vsel %vm1806, %v1842, 0.0
        %1859 = vadd.xlane.f32.xlu0 %v1858
        %v1860 = vpop.xlane.xlu0 %1859
        %v1861 = vsel %vm1806, %v1844, 0.0
        %1862 = vadd.xlane.f32.xlu0 %v1861
        %v1863 = vpop.xlane.xlu0 %1862
        %v1864 = vsel %vm1806, %v1846, 0.0
        %1865 = vadd.xlane.f32.xlu0 %v1864
        %v1866 = vpop.xlane.xlu0 %1865
        %v1867 = vsel %vm1806, %v1848, 0.0
        %1868 = vadd.xlane.f32.xlu0 %v1867
        %v1869 = vpop.xlane.xlu0 %1868
        %v1870 = vsel %vm1806, %v1850, 0.0
        %1871 = vadd.xlane.f32.xlu0 %v1870
        %v1872 = vpop.xlane.xlu0 %1871
        %v1873 = vsel %vm1806, %v1852, 0.0
        %1874 = vadd.xlane.f32.xlu0 %v1873
        %v1875 = vpop.xlane.xlu0 %1874
        %v1876 = vsel %vm1806, %v1854, 0.0
        %1877 = vadd.xlane.f32.xlu0 %v1876
        %v1878 = vpop.xlane.xlu0 %1877
        %v1879 = vrcp.pop %v1857
        %v1880 = vrcp.pop %v1860
        %v1881 = vrcp.pop %v1863
        %v1882 = vrcp.pop %v1866
        %v1883 = vrcp.pop %v1869
        %v1884 = vrcp.pop %v1872
        %v1885 = vrcp.pop %v1875
        %v1886 = vrcp.pop %v1878
        %v1887 = vmul.f32 %v1840, %v1879
        %v1888 = vmul.f32 %v1842, %v1880
        %v1889 = vmul.f32 %v1844, %v1881
        %v1890 = vmul.f32 %v1846, %v1882
        %v1891 = vmul.f32 %v1848, %v1883
        %v1892 = vmul.f32 %v1850, %v1884
        %v1893 = vmul.f32 %v1852, %v1885
        %v1894 = vmul.f32 %v1854, %v1886
        %v1895 = vpack.c.bf16 %v1887, %v1887
        %v1896 = vpack.c.bf16 %v1888, %v1888
        %v1897 = vpack.c.bf16 %v1889, %v1889
        %v1898 = vpack.c.bf16 %v1890, %v1890
        %v1899 = vpack.c.bf16 %v1891, %v1891
        %v1900 = vpack.c.bf16 %v1892, %v1892
        %v1901 = vpack.c.bf16 %v1893, %v1893
        %v1902 = vpack.c.bf16 %v1894, %v1894
        %v1904 = vsel %vm1806, %v1895, 0
        %vm1906 = vcmask 1042432
        %v1907 = vsel %vm1906, %v1645, 0
        %1909 = vmatpush.bf16.msra.mxu0 0
        %1910 = vmatpush.bf16.msra.mxu0 0
        %1911 = vmatpush.bf16.msra.mxu0 0
        %1912 = vmatpush.bf16.msra.mxu0 0
        %1913 = vmatpush.bf16.msra.mxu0 0
        %1914 = vmatpush.bf16.msra.mxu0 0
        %1915 = vmatpush.bf16.msra.mxu0 0
        %1916 = vmatpush.bf16.msra.mxu0 %v1907
        %1917 = vmatmul.bf16.gmra.mxu0 %v1904
        %v1918 = vpop.f32.mrf.mxu0
        %v1919 = vadd.f32 0.0, %v1918
        %v1920 = vpop.f32.mrf.mxu0
        %1921 = vdwg.mxu0
        %v1923 = vsel %vm1806, %v1896, 0
        %v1925 = vsel %vm1906, %v1646, 0
        %1927 = vmatpush.bf16.msra.mxu0 0
        %1928 = vmatpush.bf16.msra.mxu0 0
        %1929 = vmatpush.bf16.msra.mxu0 0
        %1930 = vmatpush.bf16.msra.mxu0 0
        %1931 = vmatpush.bf16.msra.mxu0 0
        %1932 = vmatpush.bf16.msra.mxu0 0
        %1933 = vmatpush.bf16.msra.mxu0 0
        %1934 = vmatpush.bf16.msra.mxu0 %v1925
        %1935 = vmatmul.bf16.gmra.mxu0 %v1923
        %v1936 = vpop.f32.mrf.mxu0
        %v1937 = vadd.f32 0.0, %v1936
        %v1938 = vpop.f32.mrf.mxu0
        %1939 = vdwg.mxu0
        %v1941 = vsel %vm1806, %v1897, 0
        %v1943 = vsel %vm1906, %v1647, 0
        %1945 = vmatpush.bf16.msra.mxu0 0
        %1946 = vmatpush.bf16.msra.mxu0 0
        %1947 = vmatpush.bf16.msra.mxu0 0
        %1948 = vmatpush.bf16.msra.mxu0 0
        %1949 = vmatpush.bf16.msra.mxu0 0
        %1950 = vmatpush.bf16.msra.mxu0 0
        %1951 = vmatpush.bf16.msra.mxu0 0
        %1952 = vmatpush.bf16.msra.mxu0 %v1943
        %1953 = vmatmul.bf16.gmra.mxu0 %v1941
        %v1954 = vpop.f32.mrf.mxu0
        %v1955 = vadd.f32 0.0, %v1954
        %v1956 = vpop.f32.mrf.mxu0
        %1957 = vdwg.mxu0
        %v1959 = vsel %vm1806, %v1898, 0
        %v1961 = vsel %vm1906, %v1648, 0
        %1963 = vmatpush.bf16.msra.mxu0 0
        %1964 = vmatpush.bf16.msra.mxu0 0
        %1965 = vmatpush.bf16.msra.mxu0 0
        %1966 = vmatpush.bf16.msra.mxu0 0
        %1967 = vmatpush.bf16.msra.mxu0 0
        %1968 = vmatpush.bf16.msra.mxu0 0
        %1969 = vmatpush.bf16.msra.mxu0 0
        %1970 = vmatpush.bf16.msra.mxu0 %v1961
        %1971 = vmatmul.bf16.gmra.mxu0 %v1959
        %v1972 = vpop.f32.mrf.mxu0
        %v1973 = vadd.f32 0.0, %v1972
        %v1974 = vpop.f32.mrf.mxu0
        %1975 = vdwg.mxu0
        %v1977 = vsel %vm1806, %v1899, 0
        %v1979 = vsel %vm1906, %v1649, 0
        %1981 = vmatpush.bf16.msra.mxu0 0
        %1982 = vmatpush.bf16.msra.mxu0 0
        %1983 = vmatpush.bf16.msra.mxu0 0
        %1984 = vmatpush.bf16.msra.mxu0 0
        %1985 = vmatpush.bf16.msra.mxu0 0
        %1986 = vmatpush.bf16.msra.mxu0 0
        %1987 = vmatpush.bf16.msra.mxu0 0
        %1988 = vmatpush.bf16.msra.mxu0 %v1979
        %1989 = vmatmul.bf16.gmra.mxu0 %v1977
        %v1990 = vpop.f32.mrf.mxu0
        %v1991 = vadd.f32 0.0, %v1990
        %v1992 = vpop.f32.mrf.mxu0
        %1993 = vdwg.mxu0
        %v1995 = vsel %vm1806, %v1900, 0
        %v1997 = vsel %vm1906, %v1650, 0
        %1999 = vmatpush.bf16.msra.mxu0 0
        %2000 = vmatpush.bf16.msra.mxu0 0
        %2001 = vmatpush.bf16.msra.mxu0 0
        %2002 = vmatpush.bf16.msra.mxu0 0
        %2003 = vmatpush.bf16.msra.mxu0 0
        %2004 = vmatpush.bf16.msra.mxu0 0
        %2005 = vmatpush.bf16.msra.mxu0 0
        %2006 = vmatpush.bf16.msra.mxu0 %v1997
        %2007 = vmatmul.bf16.gmra.mxu0 %v1995
        %v2008 = vpop.f32.mrf.mxu0
        %v2009 = vadd.f32 0.0, %v2008
        %v2010 = vpop.f32.mrf.mxu0
        %2011 = vdwg.mxu0
        %v2013 = vsel %vm1806, %v1901, 0
        %v2015 = vsel %vm1906, %v1651, 0
        %2017 = vmatpush.bf16.msra.mxu0 0
        %2018 = vmatpush.bf16.msra.mxu0 0
        %2019 = vmatpush.bf16.msra.mxu0 0
        %2020 = vmatpush.bf16.msra.mxu0 0
        %2021 = vmatpush.bf16.msra.mxu0 0
        %2022 = vmatpush.bf16.msra.mxu0 0
        %2023 = vmatpush.bf16.msra.mxu0 0
        %2024 = vmatpush.bf16.msra.mxu0 %v2015
        %2025 = vmatmul.bf16.gmra.mxu0 %v2013
        %v2026 = vpop.f32.mrf.mxu0
        %v2027 = vadd.f32 0.0, %v2026
        %v2028 = vpop.f32.mrf.mxu0
        %2029 = vdwg.mxu0
        %v2031 = vsel %vm1806, %v1902, 0
        %v2033 = vsel %vm1906, %v1652, 0
        %2035 = vmatpush.bf16.msra.mxu0 0
        %2036 = vmatpush.bf16.msra.mxu0 0
        %2037 = vmatpush.bf16.msra.mxu0 0
        %2038 = vmatpush.bf16.msra.mxu0 0
        %2039 = vmatpush.bf16.msra.mxu0 0
        %2040 = vmatpush.bf16.msra.mxu0 0
        %2041 = vmatpush.bf16.msra.mxu0 0
        %2042 = vmatpush.bf16.msra.mxu0 %v2033
        %2043 = vmatmul.bf16.gmra.mxu0 %v2031
        %v2044 = vpop.f32.mrf.mxu0
        %v2045 = vadd.f32 0.0, %v2044
        %v2046 = vpop.f32.mrf.mxu0
        %2047 = vdwg.mxu0
        %v2048 = vrot.slane %v1809, 4
        %v2049 = vmax.f32 %v1809, %v2048
        %v2050 = vrot.slane %v2049, 2
        %v2051 = vmax.f32 %v2049, %v2050
        %v2052 = vrot.slane %v2051, 1
        %v2053 = vmax.f32 %v2051, %v2052
        %v2054 = vrot.slane %v1812, 4
        %v2055 = vmax.f32 %v1812, %v2054
        %v2056 = vrot.slane %v2055, 2
        %v2057 = vmax.f32 %v2055, %v2056
        %v2058 = vrot.slane %v2057, 1
        %v2059 = vmax.f32 %v2057, %v2058
        %v2060 = vrot.slane %v1815, 4
        %v2061 = vmax.f32 %v1815, %v2060
        %v2062 = vrot.slane %v2061, 2
        %v2063 = vmax.f32 %v2061, %v2062
        %v2064 = vrot.slane %v2063, 1
        %v2065 = vmax.f32 %v2063, %v2064
        %v2066 = vrot.slane %v1818, 4
        %v2067 = vmax.f32 %v1818, %v2066
        %v2068 = vrot.slane %v2067, 2
        %v2069 = vmax.f32 %v2067, %v2068
        %v2070 = vrot.slane %v2069, 1
        %v2071 = vmax.f32 %v2069, %v2070
        %v2072 = vrot.slane %v1821, 4
        %v2073 = vmax.f32 %v1821, %v2072
        %v2074 = vrot.slane %v2073, 2
        %v2075 = vmax.f32 %v2073, %v2074
        %v2076 = vrot.slane %v2075, 1
        %v2077 = vmax.f32 %v2075, %v2076
        %v2078 = vrot.slane %v1824, 4
        %v2079 = vmax.f32 %v1824, %v2078
        %v2080 = vrot.slane %v2079, 2
        %v2081 = vmax.f32 %v2079, %v2080
        %v2082 = vrot.slane %v2081, 1
        %v2083 = vmax.f32 %v2081, %v2082
        %v2084 = vrot.slane %v1827, 4
        %v2085 = vmax.f32 %v1827, %v2084
        %v2086 = vrot.slane %v2085, 2
        %v2087 = vmax.f32 %v2085, %v2086
        %v2088 = vrot.slane %v2087, 1
        %v2089 = vmax.f32 %v2087, %v2088
        %v2090 = vrot.slane %v1830, 4
        %v2091 = vmax.f32 %v1830, %v2090
        %v2092 = vrot.slane %v2091, 2
        %v2093 = vmax.f32 %v2091, %v2092
        %v2094 = vrot.slane %v2093, 1
        %v2095 = vmax.f32 %v2093, %v2094
        %v2096 = vsub.f32 %v1809, %v2053
        %v2097 = vsub.f32 %v1812, %v2059
        %v2098 = vsub.f32 %v1815, %v2065
        %v2099 = vsub.f32 %v1818, %v2071
        %v2100 = vsub.f32 %v1821, %v2077
        %v2101 = vsub.f32 %v1824, %v2083
        %v2102 = vsub.f32 %v1827, %v2089
        %v2103 = vsub.f32 %v1830, %v2095
        %v2104 = vmul.f32 %v2096, 1.442695
        %v2105 = vpow.pop %v2104
        %v2106 = vmul.f32 %v2097, 1.442695
        %v2107 = vpow.pop %v2106
        %v2108 = vmul.f32 %v2098, 1.442695
        %v2109 = vpow.pop %v2108
        %v2110 = vmul.f32 %v2099, 1.442695
        %v2111 = vpow.pop %v2110
        %v2112 = vmul.f32 %v2100, 1.442695
        %v2113 = vpow.pop %v2112
        %v2114 = vmul.f32 %v2101, 1.442695
        %v2115 = vpow.pop %v2114
        %v2116 = vmul.f32 %v2102, 1.442695
        %v2117 = vpow.pop %v2116
        %v2118 = vmul.f32 %v2103, 1.442695
        %v2119 = vpow.pop %v2118
        %v2120 = vrot.slane %v2105, 4
        %v2121 = vadd.f32 %v2105, %v2120
        %v2122 = vrot.slane %v2121, 2
        %v2123 = vadd.f32 %v2121, %v2122
        %v2124 = vrot.slane %v2123, 1
        %v2125 = vadd.f32 %v2123, %v2124
        %v2126 = vrot.slane %v2107, 4
        %v2127 = vadd.f32 %v2107, %v2126
        %v2128 = vrot.slane %v2127, 2
        %v2129 = vadd.f32 %v2127, %v2128
        %v2130 = vrot.slane %v2129, 1
        %v2131 = vadd.f32 %v2129, %v2130
        %v2132 = vrot.slane %v2109, 4
        %v2133 = vadd.f32 %v2109, %v2132
        %v2134 = vrot.slane %v2133, 2
        %v2135 = vadd.f32 %v2133, %v2134
        %v2136 = vrot.slane %v2135, 1
        %v2137 = vadd.f32 %v2135, %v2136
        %v2138 = vrot.slane %v2111, 4
        %v2139 = vadd.f32 %v2111, %v2138
        %v2140 = vrot.slane %v2139, 2
        %v2141 = vadd.f32 %v2139, %v2140
        %v2142 = vrot.slane %v2141, 1
        %v2143 = vadd.f32 %v2141, %v2142
        %v2144 = vrot.slane %v2113, 4
        %v2145 = vadd.f32 %v2113, %v2144
        %v2146 = vrot.slane %v2145, 2
        %v2147 = vadd.f32 %v2145, %v2146
        %v2148 = vrot.slane %v2147, 1
        %v2149 = vadd.f32 %v2147, %v2148
        %v2150 = vrot.slane %v2115, 4
        %v2151 = vadd.f32 %v2115, %v2150
        %v2152 = vrot.slane %v2151, 2
        %v2153 = vadd.f32 %v2151, %v2152
        %v2154 = vrot.slane %v2153, 1
        %v2155 = vadd.f32 %v2153, %v2154
        %v2156 = vrot.slane %v2117, 4
        %v2157 = vadd.f32 %v2117, %v2156
        %v2158 = vrot.slane %v2157, 2
        %v2159 = vadd.f32 %v2157, %v2158
        %v2160 = vrot.slane %v2159, 1
        %v2161 = vadd.f32 %v2159, %v2160
        %v2162 = vrot.slane %v2119, 4
        %v2163 = vadd.f32 %v2119, %v2162
        %v2164 = vrot.slane %v2163, 2
        %v2165 = vadd.f32 %v2163, %v2164
        %v2166 = vrot.slane %v2165, 1
        %v2167 = vadd.f32 %v2165, %v2166
        %v2168 = vrcp.pop %v2125
        %v2169 = vrcp.pop %v2131
        %v2170 = vrcp.pop %v2137
        %v2171 = vrcp.pop %v2143
        %v2172 = vrcp.pop %v2149
        %v2173 = vrcp.pop %v2155
        %v2174 = vrcp.pop %v2161
        %v2175 = vrcp.pop %v2167
        %v2176 = vmul.f32 %v2105, %v2168
        %v2177 = vmul.f32 %v2107, %v2169
        %v2178 = vmul.f32 %v2109, %v2170
        %v2179 = vmul.f32 %v2111, %v2171
        %v2180 = vmul.f32 %v2113, %v2172
        %v2181 = vmul.f32 %v2115, %v2173
        %v2182 = vmul.f32 %v2117, %v2174
        %v2183 = vmul.f32 %v2119, %v2175
        %v2184 = vmul.f32 %v2176, %v1514
        %v2185 = vmul.f32 %v2177, %v1516
        %v2186 = vmul.f32 %v2178, %v1518
        %v2187 = vmul.f32 %v2179, %v1520
        %v2188 = vmul.f32 %v2180, %v1522
        %v2189 = vmul.f32 %v2181, %v1524
        %v2190 = vmul.f32 %v2182, %v1526
        %v2191 = vmul.f32 %v2183, %v1528
        %v2192 = vsel %vm1653, %v2184, 0.0
        %v2193 = vrot.slane %v2192, 4
        %v2194 = vadd.f32 %v2192, %v2193
        %v2195 = vrot.slane %v2194, 2
        %v2196 = vadd.f32 %v2194, %v2195
        %v2197 = vrot.slane %v2196, 1
        %v2198 = vadd.f32 %v2196, %v2197
        %v2199 = vsel %vm1653, %v2185, 0.0
        %v2200 = vrot.slane %v2199, 4
        %v2201 = vadd.f32 %v2199, %v2200
        %v2202 = vrot.slane %v2201, 2
        %v2203 = vadd.f32 %v2201, %v2202
        %v2204 = vrot.slane %v2203, 1
        %v2205 = vadd.f32 %v2203, %v2204
        %v2206 = vsel %vm1653, %v2186, 0.0
        %v2207 = vrot.slane %v2206, 4
        %v2208 = vadd.f32 %v2206, %v2207
        %v2209 = vrot.slane %v2208, 2
        %v2210 = vadd.f32 %v2208, %v2209
        %v2211 = vrot.slane %v2210, 1
        %v2212 = vadd.f32 %v2210, %v2211
        %v2213 = vsel %vm1653, %v2187, 0.0
        %v2214 = vrot.slane %v2213, 4
        %v2215 = vadd.f32 %v2213, %v2214
        %v2216 = vrot.slane %v2215, 2
        %v2217 = vadd.f32 %v2215, %v2216
        %v2218 = vrot.slane %v2217, 1
        %v2219 = vadd.f32 %v2217, %v2218
        %v2220 = vsel %vm1653, %v2188, 0.0
        %v2221 = vrot.slane %v2220, 4
        %v2222 = vadd.f32 %v2220, %v2221
        %v2223 = vrot.slane %v2222, 2
        %v2224 = vadd.f32 %v2222, %v2223
        %v2225 = vrot.slane %v2224, 1
        %v2226 = vadd.f32 %v2224, %v2225
        %v2227 = vsel %vm1653, %v2189, 0.0
        %v2228 = vrot.slane %v2227, 4
        %v2229 = vadd.f32 %v2227, %v2228
        %v2230 = vrot.slane %v2229, 2
        %v2231 = vadd.f32 %v2229, %v2230
        %v2232 = vrot.slane %v2231, 1
        %v2233 = vadd.f32 %v2231, %v2232
        %v2234 = vsel %vm1653, %v2190, 0.0
        %v2235 = vrot.slane %v2234, 4
        %v2236 = vadd.f32 %v2234, %v2235
        %v2237 = vrot.slane %v2236, 2
        %v2238 = vadd.f32 %v2236, %v2237
        %v2239 = vrot.slane %v2238, 1
        %v2240 = vadd.f32 %v2238, %v2239
        %v2241 = vsel %vm1653, %v2191, 0.0
        %v2242 = vrot.slane %v2241, 4
        %v2243 = vadd.f32 %v2241, %v2242
        %v2244 = vrot.slane %v2243, 2
        %v2245 = vadd.f32 %v2243, %v2244
        %v2246 = vrot.slane %v2245, 1
        %v2247 = vadd.f32 %v2245, %v2246
        %v2248 = vrot.slane %v1955, 4
        %v2249 = vsel %vm1417, %v2248, %v1919
        %v2250 = vrot.slane %v1919, 4
        %v2251 = vsel %vm1417, %v1955, %v2250
        %v2253 = vunpack.c.l.s4 1983009808
        %v2254 = vunpack.c.0.s8 %v2253
        %v2255 = vperm.slane %v2249, %v2254
        %v2257 = vunpack.c.l.s4 1983009808
        %v2258 = vunpack.c.0.s8 %v2257
        %v2259 = vperm.slane %v2251, %v2258
        %v2260 = vrot.slane %v1973, 4
        %v2261 = vsel %vm1417, %v2260, %v1937
        %v2262 = vrot.slane %v1937, 4
        %v2263 = vsel %vm1417, %v1973, %v2262
        %v2265 = vunpack.c.l.s4 1983009808
        %v2266 = vunpack.c.0.s8 %v2265
        %v2267 = vperm.slane %v2261, %v2266
        %v2269 = vunpack.c.l.s4 1983009808
        %v2270 = vunpack.c.0.s8 %v2269
        %v2271 = vperm.slane %v2263, %v2270
        %v2272 = vrot.slane %v2027, 4
        %v2273 = vsel %vm1417, %v2272, %v1991
        %v2274 = vrot.slane %v1991, 4
        %v2275 = vsel %vm1417, %v2027, %v2274
        %v2277 = vunpack.c.l.s4 1983009808
        %v2278 = vunpack.c.0.s8 %v2277
        %v2279 = vperm.slane %v2273, %v2278
        %v2281 = vunpack.c.l.s4 1983009808
        %v2282 = vunpack.c.0.s8 %v2281
        %v2283 = vperm.slane %v2275, %v2282
        %v2284 = vrot.slane %v2045, 4
        %v2285 = vsel %vm1417, %v2284, %v2009
        %v2286 = vrot.slane %v2009, 4
        %v2287 = vsel %vm1417, %v2045, %v2286
        %v2289 = vunpack.c.l.s4 1983009808
        %v2290 = vunpack.c.0.s8 %v2289
        %v2291 = vperm.slane %v2285, %v2290
        %v2293 = vunpack.c.l.s4 1983009808
        %v2294 = vunpack.c.0.s8 %v2293
        %v2295 = vperm.slane %v2287, %v2294
        %v2296 = vrot.slane %v2267, 4
        %v2297 = vsel %vm1417, %v2296, %v2255
        %v2298 = vrot.slane %v2255, 4
        %v2299 = vsel %vm1417, %v2267, %v2298
        %v2301 = vunpack.c.l.s4 1934713408
        %v2302 = vunpack.c.0.s8 %v2301
        %v2303 = vperm.slane %v2297, %v2302
        %v2305 = vunpack.c.l.s4 1934713408
        %v2306 = vunpack.c.0.s8 %v2305
        %v2307 = vperm.slane %v2299, %v2306
        %v2308 = vrot.slane %v2271, 4
        %v2309 = vsel %vm1417, %v2308, %v2259
        %v2310 = vrot.slane %v2259, 4
        %v2311 = vsel %vm1417, %v2271, %v2310
        %v2313 = vunpack.c.l.s4 1934713408
        %v2314 = vunpack.c.0.s8 %v2313
        %v2315 = vperm.slane %v2309, %v2314
        %v2317 = vunpack.c.l.s4 1934713408
        %v2318 = vunpack.c.0.s8 %v2317
        %v2319 = vperm.slane %v2311, %v2318
        %v2320 = vrot.slane %v2291, 4
        %v2321 = vsel %vm1417, %v2320, %v2279
        %v2322 = vrot.slane %v2279, 4
        %v2323 = vsel %vm1417, %v2291, %v2322
        %v2325 = vunpack.c.l.s4 1934713408
        %v2326 = vunpack.c.0.s8 %v2325
        %v2327 = vperm.slane %v2321, %v2326
        %v2329 = vunpack.c.l.s4 1934713408
        %v2330 = vunpack.c.0.s8 %v2329
        %v2331 = vperm.slane %v2323, %v2330
        %v2332 = vrot.slane %v2295, 4
        %v2333 = vsel %vm1417, %v2332, %v2283
        %v2334 = vrot.slane %v2283, 4
        %v2335 = vsel %vm1417, %v2295, %v2334
        %v2337 = vunpack.c.l.s4 1934713408
        %v2338 = vunpack.c.0.s8 %v2337
        %v2339 = vperm.slane %v2333, %v2338
        %v2341 = vunpack.c.l.s4 1934713408
        %v2342 = vunpack.c.0.s8 %v2341
        %v2343 = vperm.slane %v2335, %v2342
        %v2344 = vrot.slane %v2327, 4
        %v2345 = vsel %vm1417, %v2344, %v2303
        %v2346 = vrot.slane %v2303, 4
        %v2347 = vsel %vm1417, %v2327, %v2346
        %v2348 = vrot.slane %v2331, 4
        %v2349 = vsel %vm1417, %v2348, %v2307
        %v2350 = vrot.slane %v2307, 4
        %v2351 = vsel %vm1417, %v2331, %v2350
        %v2352 = vrot.slane %v2339, 4
        %v2353 = vsel %vm1417, %v2352, %v2315
        %v2354 = vrot.slane %v2315, 4
        %v2355 = vsel %vm1417, %v2339, %v2354
        %v2356 = vrot.slane %v2343, 4
        %v2357 = vsel %vm1417, %v2356, %v2319
        %v2358 = vrot.slane %v2319, 4
        %v2359 = vsel %vm1417, %v2343, %v2358
        %v2360 = vmul.f32 %v1402, %v2345
        %v2361 = vmul.f32 %v1403, %v2347
        %v2362 = vmul.f32 %v1404, %v2349
        %v2363 = vmul.f32 %v1405, %v2351
        %v2364 = vmul.f32 %v1406, %v2353
        %v2365 = vmul.f32 %v1407, %v2355
        %v2366 = vmul.f32 %v1408, %v2357
        %v2367 = vmul.f32 %v1409, %v2359
        %vm2376 = vcmask 1041409
        %v2377 = vsel %vm2376, %v2205, %v2198
        %vm2378 = vcmask 1042434
        %v2379 = vsel %vm2378, %v2212, %v2377
        %vm2380 = vcmask 1043459
        %v2381 = vsel %vm2380, %v2219, %v2379
        %vm2382 = vcmask 1044484
        %v2383 = vsel %vm2382, %v2226, %v2381
        %vm2384 = vcmask 1045509
        %v2385 = vsel %vm2384, %v2233, %v2383
        %vm2386 = vcmask 1046534
        %v2387 = vsel %vm2386, %v2240, %v2385
        %vm2388 = vcmask 1047559
        %v2389 = vsel %vm2388, %v2247, %v2387
        %v2391 = vmul.f32 %v1402, %v2389
        %v2392 = vmul.f32 %v1403, %v2389
        %v2393 = vmul.f32 %v1404, %v2389
        %v2394 = vmul.f32 %v1405, %v2389
        %v2395 = vmul.f32 %v1406, %v2389
        %v2396 = vmul.f32 %v1407, %v2389
        %v2397 = vmul.f32 %v1408, %v2389
        %v2398 = vmul.f32 %v1409, %v2389
        %v2399 = vld [vmem:[%s6] sm:$0xff]
        %v2400 = vld [vmem:[%s6 + $0x8] sm:$0xff]
        %v2401 = vld [vmem:[%s6 + $0x10] sm:$0xff]
        %v2402 = vld [vmem:[%s6 + $0x18] sm:$0xff]
        %v2403 = vld [vmem:[%s6 + $0x20] sm:$0xff]
        %v2404 = vld [vmem:[%s6 + $0x28] sm:$0xff]
        %v2405 = vld [vmem:[%s6 + $0x30] sm:$0xff]
        %v2406 = vld [vmem:[%s6 + $0x38] sm:$0xff]
        %v2407 = vpack.c.bf16 %v1403, %v1402
        %v2408 = vpack.c.bf16 %v1405, %v1404
        %v2409 = vpack.c.bf16 %v1407, %v1406
        %v2410 = vpack.c.bf16 %v1409, %v1408
        %v2411 = vld [vmem:[%s6 + $0x40] sm:$0xff]
        %v2412 = vld [vmem:[%s6 + $0x48] sm:$0xff]
        %v2413 = vld [vmem:[%s6 + $0x50] sm:$0xff]
        %v2414 = vld [vmem:[%s6 + $0x58] sm:$0xff]
        %v2415 = vld [vmem:[%s6 + $0x60] sm:$0xff]
        %v2416 = vld [vmem:[%s6 + $0x68] sm:$0xff]
        %v2417 = vld [vmem:[%s6 + $0x70] sm:$0xff]
        %v2418 = vld [vmem:[%s6 + $0x78] sm:$0xff]
        %v2419 = vpack.c.bf16 %v2347, %v2345
        %v2420 = vpack.c.bf16 %v2351, %v2349
        %v2421 = vpack.c.bf16 %v2355, %v2353
        %v2422 = vpack.c.bf16 %v2359, %v2357
        %v2431 = vunpack.c.l.b16 %v2411
        %v2432 = vunpack.c.h.b16 %v2411
        %v2433 = vunpack.c.l.b16 %v2412
        %v2434 = vunpack.c.h.b16 %v2412
        %v2435 = vunpack.c.l.b16 %v2413
        %v2436 = vunpack.c.h.b16 %v2413
        %v2437 = vunpack.c.l.b16 %v2414
        %v2438 = vunpack.c.h.b16 %v2414
        %v2439 = vunpack.c.l.b16 %v2415
        %v2440 = vunpack.c.h.b16 %v2415
        %v2441 = vunpack.c.l.b16 %v2416
        %v2442 = vunpack.c.h.b16 %v2416
        %v2443 = vunpack.c.l.b16 %v2417
        %v2444 = vunpack.c.h.b16 %v2417
        %v2445 = vunpack.c.l.b16 %v2418
        %v2446 = vunpack.c.h.b16 %v2418
        %v2447 = vpack.c.b16 %v2433, %v2431
        %v2448 = vpack.c.b16 %v2434, %v2432
        %v2449 = vpack.c.b16 %v2437, %v2435
        %v2450 = vpack.c.b16 %v2438, %v2436
        %v2451 = vpack.c.b16 %v2441, %v2439
        %v2452 = vpack.c.b16 %v2442, %v2440
        %v2453 = vpack.c.b16 %v2445, %v2443
        %v2454 = vpack.c.b16 %v2446, %v2444
        %v2464 = vsel %vm1653, %v2419, 0
        %v2467 = vsel %vm1653, %v2420, 0
        %v2470 = vsel %vm1653, %v2421, 0
        %v2473 = vsel %vm1653, %v2422, 0
        %2475 = vmatpush.bf16.msra.mxu0 0
        %2476 = vmatpush.bf16.msra.mxu0 0
        %2477 = vmatpush.bf16.msra.mxu0 0
        %2478 = vmatpush.bf16.msra.mxu0 0
        %2479 = vmatpush.bf16.msra.mxu0 %v2453
        %2480 = vmatpush.bf16.msra.mxu0 %v2451
        %2481 = vmatpush.bf16.msra.mxu0 %v2449
        %2482 = vmatpush.bf16.msra.mxu0 %v2447
        %2483 = vmatmul.bf16.gmra.mxu0 %v2464
        %v2484 = vpop.f32.mrf.mxu0
        %v2485 = vadd.f32 0.0, %v2484
        %v2486 = vpop.f32.mrf.mxu0
        %v2487 = vadd.f32 0.0, %v2486
        %2488 = vmatmul.bf16.gmra.mxu0 %v2467
        %v2489 = vpop.f32.mrf.mxu0
        %v2490 = vadd.f32 0.0, %v2489
        %v2491 = vpop.f32.mrf.mxu0
        %v2492 = vadd.f32 0.0, %v2491
        %2493 = vmatmul.bf16.gmra.mxu0 %v2470
        %v2494 = vpop.f32.mrf.mxu0
        %v2495 = vadd.f32 0.0, %v2494
        %v2496 = vpop.f32.mrf.mxu0
        %v2497 = vadd.f32 0.0, %v2496
        %2498 = vmatmul.bf16.gmra.mxu0 %v2473
        %v2499 = vpop.f32.mrf.mxu0
        %v2500 = vadd.f32 0.0, %v2499
        %v2501 = vpop.f32.mrf.mxu0
        %v2502 = vadd.f32 0.0, %v2501
        %2503 = vdwg.mxu0
        %2504 = vmatpush.bf16.msra.mxu0 0
        %2505 = vmatpush.bf16.msra.mxu0 0
        %2506 = vmatpush.bf16.msra.mxu0 0
        %2507 = vmatpush.bf16.msra.mxu0 0
        %2508 = vmatpush.bf16.msra.mxu0 %v2454
        %2509 = vmatpush.bf16.msra.mxu0 %v2452
        %2510 = vmatpush.bf16.msra.mxu0 %v2450
        %2511 = vmatpush.bf16.msra.mxu0 %v2448
        %2512 = vmatmul.bf16.gmra.mxu0 %v2464
        %v2513 = vpop.f32.mrf.mxu0
        %v2514 = vadd.f32 0.0, %v2513
        %v2515 = vpop.f32.mrf.mxu0
        %v2516 = vadd.f32 0.0, %v2515
        %2517 = vmatmul.bf16.gmra.mxu0 %v2467
        %v2518 = vpop.f32.mrf.mxu0
        %v2519 = vadd.f32 0.0, %v2518
        %v2520 = vpop.f32.mrf.mxu0
        %v2521 = vadd.f32 0.0, %v2520
        %2522 = vmatmul.bf16.gmra.mxu0 %v2470
        %v2523 = vpop.f32.mrf.mxu0
        %v2524 = vadd.f32 0.0, %v2523
        %v2525 = vpop.f32.mrf.mxu0
        %v2526 = vadd.f32 0.0, %v2525
        %2527 = vmatmul.bf16.gmra.mxu0 %v2473
        %v2528 = vpop.f32.mrf.mxu0
        %v2529 = vadd.f32 0.0, %v2528
        %v2530 = vpop.f32.mrf.mxu0
        %v2531 = vadd.f32 0.0, %v2530
        %2532 = vdwg.mxu0
        %v2541 = vunpack.c.l.b16 %v2399
        %v2542 = vunpack.c.h.b16 %v2399
        %v2543 = vunpack.c.l.b16 %v2400
        %v2544 = vunpack.c.h.b16 %v2400
        %v2545 = vunpack.c.l.b16 %v2401
        %v2546 = vunpack.c.h.b16 %v2401
        %v2547 = vunpack.c.l.b16 %v2402
        %v2548 = vunpack.c.h.b16 %v2402
        %v2549 = vunpack.c.l.b16 %v2403
        %v2550 = vunpack.c.h.b16 %v2403
        %v2551 = vunpack.c.l.b16 %v2404
        %v2552 = vunpack.c.h.b16 %v2404
        %v2553 = vunpack.c.l.b16 %v2405
        %v2554 = vunpack.c.h.b16 %v2405
        %v2555 = vunpack.c.l.b16 %v2406
        %v2556 = vunpack.c.h.b16 %v2406
        %v2557 = vpack.c.b16 %v2543, %v2541
        %v2558 = vpack.c.b16 %v2544, %v2542
        %v2559 = vpack.c.b16 %v2547, %v2545
        %v2560 = vpack.c.b16 %v2548, %v2546
        %v2561 = vpack.c.b16 %v2551, %v2549
        %v2562 = vpack.c.b16 %v2552, %v2550
        %v2563 = vpack.c.b16 %v2555, %v2553
        %v2564 = vpack.c.b16 %v2556, %v2554
        %v2574 = vsel %vm1653, %v2407, 0
        %v2577 = vsel %vm1653, %v2408, 0
        %v2580 = vsel %vm1653, %v2409, 0
        %v2583 = vsel %vm1653, %v2410, 0
        %2585 = vmatpush.bf16.msra.mxu0 0
        %2586 = vmatpush.bf16.msra.mxu0 0
        %2587 = vmatpush.bf16.msra.mxu0 0
        %2588 = vmatpush.bf16.msra.mxu0 0
        %2589 = vmatpush.bf16.msra.mxu0 %v2563
        %2590 = vmatpush.bf16.msra.mxu0 %v2561
        %2591 = vmatpush.bf16.msra.mxu0 %v2559
        %2592 = vmatpush.bf16.msra.mxu0 %v2557
        %2593 = vmatmul.bf16.gmra.mxu0 %v2574
        %v2594 = vpop.f32.mrf.mxu0
        %v2595 = vadd.f32 %v2485, %v2594
        %v2596 = vpop.f32.mrf.mxu0
        %v2597 = vadd.f32 %v2487, %v2596
        %2598 = vmatmul.bf16.gmra.mxu0 %v2577
        %v2599 = vpop.f32.mrf.mxu0
        %v2600 = vadd.f32 %v2490, %v2599
        %v2601 = vpop.f32.mrf.mxu0
        %v2602 = vadd.f32 %v2492, %v2601
        %2603 = vmatmul.bf16.gmra.mxu0 %v2580
        %v2604 = vpop.f32.mrf.mxu0
        %v2605 = vadd.f32 %v2495, %v2604
        %v2606 = vpop.f32.mrf.mxu0
        %v2607 = vadd.f32 %v2497, %v2606
        %2608 = vmatmul.bf16.gmra.mxu0 %v2583
        %v2609 = vpop.f32.mrf.mxu0
        %v2610 = vadd.f32 %v2500, %v2609
        %v2611 = vpop.f32.mrf.mxu0
        %v2612 = vadd.f32 %v2502, %v2611
        %2613 = vdwg.mxu0
        %2614 = vmatpush.bf16.msra.mxu0 0
        %2615 = vmatpush.bf16.msra.mxu0 0
        %2616 = vmatpush.bf16.msra.mxu0 0
        %2617 = vmatpush.bf16.msra.mxu0 0
        %2618 = vmatpush.bf16.msra.mxu0 %v2564
        %2619 = vmatpush.bf16.msra.mxu0 %v2562
        %2620 = vmatpush.bf16.msra.mxu0 %v2560
        %2621 = vmatpush.bf16.msra.mxu0 %v2558
        %2622 = vmatmul.bf16.gmra.mxu0 %v2574
        %v2623 = vpop.f32.mrf.mxu0
        %v2624 = vadd.f32 %v2514, %v2623
        %v2625 = vpop.f32.mrf.mxu0
        %v2626 = vadd.f32 %v2516, %v2625
        %2627 = vmatmul.bf16.gmra.mxu0 %v2577
        %v2628 = vpop.f32.mrf.mxu0
        %v2629 = vadd.f32 %v2519, %v2628
        %v2630 = vpop.f32.mrf.mxu0
        %v2631 = vadd.f32 %v2521, %v2630
        %2632 = vmatmul.bf16.gmra.mxu0 %v2580
        %v2633 = vpop.f32.mrf.mxu0
        %v2634 = vadd.f32 %v2524, %v2633
        %v2635 = vpop.f32.mrf.mxu0
        %v2636 = vadd.f32 %v2526, %v2635
        %2637 = vmatmul.bf16.gmra.mxu0 %v2583
        %v2638 = vpop.f32.mrf.mxu0
        %v2639 = vadd.f32 %v2529, %v2638
        %v2640 = vpop.f32.mrf.mxu0
        %v2641 = vadd.f32 %v2531, %v2640
        %2642 = vdwg.mxu0
        %v2643 = vld [vmem:[%s6 + $0x80] sm:$0xff]
        %v2644 = vld [vmem:[%s6 + $0x88] sm:$0xff]
        %v2645 = vld [vmem:[%s6 + $0x90] sm:$0xff]
        %v2646 = vld [vmem:[%s6 + $0x98] sm:$0xff]
        %v2647 = vld [vmem:[%s6 + $0xa0] sm:$0xff]
        %v2648 = vld [vmem:[%s6 + $0xa8] sm:$0xff]
        %v2649 = vld [vmem:[%s6 + $0xb0] sm:$0xff]
        %v2650 = vld [vmem:[%s6 + $0xb8] sm:$0xff]
        %v2651 = vpack.c.bf16 %v2361, %v2360
        %v2652 = vpack.c.bf16 %v2363, %v2362
        %v2653 = vpack.c.bf16 %v2365, %v2364
        %v2654 = vpack.c.bf16 %v2367, %v2366
        %v2663 = vunpack.c.l.b16 %v2643
        %v2664 = vunpack.c.h.b16 %v2643
        %v2665 = vunpack.c.l.b16 %v2644
        %v2666 = vunpack.c.h.b16 %v2644
        %v2667 = vunpack.c.l.b16 %v2645
        %v2668 = vunpack.c.h.b16 %v2645
        %v2669 = vunpack.c.l.b16 %v2646
        %v2670 = vunpack.c.h.b16 %v2646
        %v2671 = vunpack.c.l.b16 %v2647
        %v2672 = vunpack.c.h.b16 %v2647
        %v2673 = vunpack.c.l.b16 %v2648
        %v2674 = vunpack.c.h.b16 %v2648
        %v2675 = vunpack.c.l.b16 %v2649
        %v2676 = vunpack.c.h.b16 %v2649
        %v2677 = vunpack.c.l.b16 %v2650
        %v2678 = vunpack.c.h.b16 %v2650
        %v2679 = vpack.c.b16 %v2665, %v2663
        %v2680 = vpack.c.b16 %v2666, %v2664
        %v2681 = vpack.c.b16 %v2669, %v2667
        %v2682 = vpack.c.b16 %v2670, %v2668
        %v2683 = vpack.c.b16 %v2673, %v2671
        %v2684 = vpack.c.b16 %v2674, %v2672
        %v2685 = vpack.c.b16 %v2677, %v2675
        %v2686 = vpack.c.b16 %v2678, %v2676
        %v2696 = vsel %vm1653, %v2651, 0
        %v2699 = vsel %vm1653, %v2652, 0
        %v2702 = vsel %vm1653, %v2653, 0
        %v2705 = vsel %vm1653, %v2654, 0
        %2707 = vmatpush.bf16.msra.mxu0 0
        %2708 = vmatpush.bf16.msra.mxu0 0
        %2709 = vmatpush.bf16.msra.mxu0 0
        %2710 = vmatpush.bf16.msra.mxu0 0
        %2711 = vmatpush.bf16.msra.mxu0 %v2685
        %2712 = vmatpush.bf16.msra.mxu0 %v2683
        %2713 = vmatpush.bf16.msra.mxu0 %v2681
        %2714 = vmatpush.bf16.msra.mxu0 %v2679
        %2715 = vmatmul.bf16.gmra.mxu0 %v2696
        %v2716 = vpop.f32.mrf.mxu0
        %v2717 = vadd.f32 0.0, %v2716
        %v2718 = vpop.f32.mrf.mxu0
        %v2719 = vadd.f32 0.0, %v2718
        %2720 = vmatmul.bf16.gmra.mxu0 %v2699
        %v2721 = vpop.f32.mrf.mxu0
        %v2722 = vadd.f32 0.0, %v2721
        %v2723 = vpop.f32.mrf.mxu0
        %v2724 = vadd.f32 0.0, %v2723
        %2725 = vmatmul.bf16.gmra.mxu0 %v2702
        %v2726 = vpop.f32.mrf.mxu0
        %v2727 = vadd.f32 0.0, %v2726
        %v2728 = vpop.f32.mrf.mxu0
        %v2729 = vadd.f32 0.0, %v2728
        %2730 = vmatmul.bf16.gmra.mxu0 %v2705
        %v2731 = vpop.f32.mrf.mxu0
        %v2732 = vadd.f32 0.0, %v2731
        %v2733 = vpop.f32.mrf.mxu0
        %v2734 = vadd.f32 0.0, %v2733
        %2735 = vdwg.mxu0
        %2736 = vmatpush.bf16.msra.mxu0 0
        %2737 = vmatpush.bf16.msra.mxu0 0
        %2738 = vmatpush.bf16.msra.mxu0 0
        %2739 = vmatpush.bf16.msra.mxu0 0
        %2740 = vmatpush.bf16.msra.mxu0 %v2686
        %2741 = vmatpush.bf16.msra.mxu0 %v2684
        %2742 = vmatpush.bf16.msra.mxu0 %v2682
        %2743 = vmatpush.bf16.msra.mxu0 %v2680
        %2744 = vmatmul.bf16.gmra.mxu0 %v2696
        %v2745 = vpop.f32.mrf.mxu0
        %v2746 = vadd.f32 0.0, %v2745
        %v2747 = vpop.f32.mrf.mxu0
        %v2748 = vadd.f32 0.0, %v2747
        %2749 = vmatmul.bf16.gmra.mxu0 %v2699
        %v2750 = vpop.f32.mrf.mxu0
        %v2751 = vadd.f32 0.0, %v2750
        %v2752 = vpop.f32.mrf.mxu0
        %v2753 = vadd.f32 0.0, %v2752
        %2754 = vmatmul.bf16.gmra.mxu0 %v2702
        %v2755 = vpop.f32.mrf.mxu0
        %v2756 = vadd.f32 0.0, %v2755
        %v2757 = vpop.f32.mrf.mxu0
        %v2758 = vadd.f32 0.0, %v2757
        %2759 = vmatmul.bf16.gmra.mxu0 %v2705
        %v2760 = vpop.f32.mrf.mxu0
        %v2761 = vadd.f32 0.0, %v2760
        %v2762 = vpop.f32.mrf.mxu0
        %v2763 = vadd.f32 0.0, %v2762
        %2764 = vdwg.mxu0
        %v2765 = vadd.f32 %v2595, %v2717
        %v2766 = vadd.f32 %v2624, %v2746
        %v2767 = vadd.f32 %v2597, %v2719
        %v2768 = vadd.f32 %v2626, %v2748
        %v2769 = vadd.f32 %v2600, %v2722
        %v2770 = vadd.f32 %v2629, %v2751
        %v2771 = vadd.f32 %v2602, %v2724
        %v2772 = vadd.f32 %v2631, %v2753
        %v2773 = vadd.f32 %v2605, %v2727
        %v2774 = vadd.f32 %v2634, %v2756
        %v2775 = vadd.f32 %v2607, %v2729
        %v2776 = vadd.f32 %v2636, %v2758
        %v2777 = vadd.f32 %v2610, %v2732
        %v2778 = vadd.f32 %v2639, %v2761
        %v2779 = vadd.f32 %v2612, %v2734
        %v2780 = vadd.f32 %v2641, %v2763
        %v2781 = vld [vmem:[%s6 + $0xc0] sm:$0xff]
        %v2782 = vld [vmem:[%s6 + $0xc8] sm:$0xff]
        %v2783 = vld [vmem:[%s6 + $0xd0] sm:$0xff]
        %v2784 = vld [vmem:[%s6 + $0xd8] sm:$0xff]
        %v2785 = vld [vmem:[%s6 + $0xe0] sm:$0xff]
        %v2786 = vld [vmem:[%s6 + $0xe8] sm:$0xff]
        %v2787 = vld [vmem:[%s6 + $0xf0] sm:$0xff]
        %v2788 = vld [vmem:[%s6 + $0xf8] sm:$0xff]
        %v2789 = vpack.c.bf16 %v2392, %v2391
        %v2790 = vpack.c.bf16 %v2394, %v2393
        %v2791 = vpack.c.bf16 %v2396, %v2395
        %v2792 = vpack.c.bf16 %v2398, %v2397
        %v2801 = vunpack.c.l.b16 %v2781
        %v2802 = vunpack.c.h.b16 %v2781
        %v2803 = vunpack.c.l.b16 %v2782
        %v2804 = vunpack.c.h.b16 %v2782
        %v2805 = vunpack.c.l.b16 %v2783
        %v2806 = vunpack.c.h.b16 %v2783
        %v2807 = vunpack.c.l.b16 %v2784
        %v2808 = vunpack.c.h.b16 %v2784
        %v2809 = vunpack.c.l.b16 %v2785
        %v2810 = vunpack.c.h.b16 %v2785
        %v2811 = vunpack.c.l.b16 %v2786
        %v2812 = vunpack.c.h.b16 %v2786
        %v2813 = vunpack.c.l.b16 %v2787
        %v2814 = vunpack.c.h.b16 %v2787
        %v2815 = vunpack.c.l.b16 %v2788
        %v2816 = vunpack.c.h.b16 %v2788
        %v2817 = vpack.c.b16 %v2803, %v2801
        %v2818 = vpack.c.b16 %v2804, %v2802
        %v2819 = vpack.c.b16 %v2807, %v2805
        %v2820 = vpack.c.b16 %v2808, %v2806
        %v2821 = vpack.c.b16 %v2811, %v2809
        %v2822 = vpack.c.b16 %v2812, %v2810
        %v2823 = vpack.c.b16 %v2815, %v2813
        %v2824 = vpack.c.b16 %v2816, %v2814
        %v2834 = vsel %vm1653, %v2789, 0
        %v2837 = vsel %vm1653, %v2790, 0
        %v2840 = vsel %vm1653, %v2791, 0
        %v2843 = vsel %vm1653, %v2792, 0
        %2845 = vmatpush.bf16.msra.mxu0 0
        %2846 = vmatpush.bf16.msra.mxu0 0
        %2847 = vmatpush.bf16.msra.mxu0 0
        %2848 = vmatpush.bf16.msra.mxu0 0
        %2849 = vmatpush.bf16.msra.mxu0 %v2823
        %2850 = vmatpush.bf16.msra.mxu0 %v2821
        %2851 = vmatpush.bf16.msra.mxu0 %v2819
        %2852 = vmatpush.bf16.msra.mxu0 %v2817
        %2853 = vmatmul.bf16.gmra.mxu0 %v2834
        %v2854 = vpop.f32.mrf.mxu0
        %v2855 = vadd.f32 0.0, %v2854
        %v2856 = vpop.f32.mrf.mxu0
        %v2857 = vadd.f32 0.0, %v2856
        %2858 = vmatmul.bf16.gmra.mxu0 %v2837
        %v2859 = vpop.f32.mrf.mxu0
        %v2860 = vadd.f32 0.0, %v2859
        %v2861 = vpop.f32.mrf.mxu0
        %v2862 = vadd.f32 0.0, %v2861
        %2863 = vmatmul.bf16.gmra.mxu0 %v2840
        %v2864 = vpop.f32.mrf.mxu0
        %v2865 = vadd.f32 0.0, %v2864
        %v2866 = vpop.f32.mrf.mxu0
        %v2867 = vadd.f32 0.0, %v2866
        %2868 = vmatmul.bf16.gmra.mxu0 %v2843
        %v2869 = vpop.f32.mrf.mxu0
        %v2870 = vadd.f32 0.0, %v2869
        %v2871 = vpop.f32.mrf.mxu0
        %v2872 = vadd.f32 0.0, %v2871
        %2873 = vdwg.mxu0
        %2874 = vmatpush.bf16.msra.mxu0 0
        %2875 = vmatpush.bf16.msra.mxu0 0
        %2876 = vmatpush.bf16.msra.mxu0 0
        %2877 = vmatpush.bf16.msra.mxu0 0
        %2878 = vmatpush.bf16.msra.mxu0 %v2824
        %2879 = vmatpush.bf16.msra.mxu0 %v2822
        %2880 = vmatpush.bf16.msra.mxu0 %v2820
        %2881 = vmatpush.bf16.msra.mxu0 %v2818
        %2882 = vmatmul.bf16.gmra.mxu0 %v2834
        %v2883 = vpop.f32.mrf.mxu0
        %v2884 = vadd.f32 0.0, %v2883
        %v2885 = vpop.f32.mrf.mxu0
        %v2886 = vadd.f32 0.0, %v2885
        %2887 = vmatmul.bf16.gmra.mxu0 %v2837
        %v2888 = vpop.f32.mrf.mxu0
        %v2889 = vadd.f32 0.0, %v2888
        %v2890 = vpop.f32.mrf.mxu0
        %v2891 = vadd.f32 0.0, %v2890
        %2892 = vmatmul.bf16.gmra.mxu0 %v2840
        %v2893 = vpop.f32.mrf.mxu0
        %v2894 = vadd.f32 0.0, %v2893
        %v2895 = vpop.f32.mrf.mxu0
        %v2896 = vadd.f32 0.0, %v2895
        %2897 = vmatmul.bf16.gmra.mxu0 %v2843
        %v2898 = vpop.f32.mrf.mxu0
        %v2899 = vadd.f32 0.0, %v2898
        %v2900 = vpop.f32.mrf.mxu0
        %v2901 = vadd.f32 0.0, %v2900
        %2902 = vdwg.mxu0
        %v2903 = vadd.f32 %v2765, %v2855
        %v2904 = vadd.f32 %v2766, %v2884
        %v2905 = vadd.f32 %v2767, %v2857
        %v2906 = vadd.f32 %v2768, %v2886
        %v2907 = vadd.f32 %v2769, %v2860
        %v2908 = vadd.f32 %v2770, %v2889
        %v2909 = vadd.f32 %v2771, %v2862
        %v2910 = vadd.f32 %v2772, %v2891
        %v2911 = vadd.f32 %v2773, %v2865
        %v2912 = vadd.f32 %v2774, %v2894
        %v2913 = vadd.f32 %v2775, %v2867
        %v2914 = vadd.f32 %v2776, %v2896
        %v2915 = vadd.f32 %v2777, %v2870
        %v2916 = vadd.f32 %v2778, %v2899
        %v2917 = vadd.f32 %v2779, %v2872
        %v2918 = vadd.f32 %v2780, %v2901
        %v2919 = vld [vmem:[%s9] sm:$0x3]
        %v2921 = vperm.slane %v2919, 0
        %v2922 = vperm.slane %v2919, 1
        %v2925 = vadd.f32 %v2903, %v2921
        %v2926 = vadd.f32 %v2904, %v2922
        %v2927 = vadd.f32 %v2905, %v2921
        %v2928 = vadd.f32 %v2906, %v2922
        %v2929 = vadd.f32 %v2907, %v2921
        %v2930 = vadd.f32 %v2908, %v2922
        %v2931 = vadd.f32 %v2909, %v2921
        %v2932 = vadd.f32 %v2910, %v2922
        %v2933 = vadd.f32 %v2911, %v2921
        %v2934 = vadd.f32 %v2912, %v2922
        %v2935 = vadd.f32 %v2913, %v2921
        %v2936 = vadd.f32 %v2914, %v2922
        %v2937 = vadd.f32 %v2915, %v2921
        %v2938 = vadd.f32 %v2916, %v2922
        %v2939 = vadd.f32 %v2917, %v2921
        %v2940 = vadd.f32 %v2918, %v2922
        %2941 = vst [vmem:[#allocation2] sm:$0xff] %v2925
        %2942 = vst [vmem:[#allocation2 + $0x8] sm:$0xff] %v2926
        %2943 = vst [vmem:[#allocation2 + $0x10] sm:$0xff] %v2927
        %2944 = vst [vmem:[#allocation2 + $0x18] sm:$0xff] %v2928
        %2945 = vst [vmem:[#allocation2 + $0x20] sm:$0xff] %v2929
        %2946 = vst [vmem:[#allocation2 + $0x28] sm:$0xff] %v2930
        %2947 = vst [vmem:[#allocation2 + $0x30] sm:$0xff] %v2931
        %2948 = vst [vmem:[#allocation2 + $0x38] sm:$0xff] %v2932
        %2949 = vst [vmem:[#allocation2 + $0x40] sm:$0xff] %v2933
        %2950 = vst [vmem:[#allocation2 + $0x48] sm:$0xff] %v2934
        %2951 = vst [vmem:[#allocation2 + $0x50] sm:$0xff] %v2935
        %2952 = vst [vmem:[#allocation2 + $0x58] sm:$0xff] %v2936
        %2953 = vst [vmem:[#allocation2 + $0x60] sm:$0xff] %v2937
        %2954 = vst [vmem:[#allocation2 + $0x68] sm:$0xff] %v2938
        %2955 = vst [vmem:[#allocation2 + $0x70] sm:$0xff] %v2939
        %2956 = vst [vmem:[#allocation2 + $0x78] sm:$0xff] %v2940
        %v2957 = vld [vmem:[%s7] sm:$0xf]
        %v2958 = vld [vmem:[%s7 + $0x4] sm:$0xf]
        %v2959 = vld [vmem:[%s7 + $0x8] sm:$0xf]
        %v2960 = vld [vmem:[%s7 + $0xc] sm:$0xf]
        %v2961 = vld [vmem:[%s8] sm:$0xf]
        %v2962 = vld [vmem:[%s8 + $0x4] sm:$0xf]
        %v2963 = vld [vmem:[%s8 + $0x8] sm:$0xf]
        %v2964 = vld [vmem:[%s8 + $0xc] sm:$0xf]
        loop: start=0, step=1, limit=8
        $region190: #{bidaf_forward.1} parent=173 // loop_pre_header
          _
        $region191: #{bidaf_forward.1} parent=173 // loop_header
          %s2966 = sphi 0, %s2970
          %p2967 = scmp.ge.s32.totalorder %s2966, 8
          %v2971 = vphi 0.0, %v3091
          %v2972 = vphi 0.0, %v3085
          %v2973 = vphi 0.0, %v3128
          %v2974 = vphi 0.0, %v3122
        $region192: #{bidaf_forward.1} parent=173 // loop_header_branch
          %2969 = sbr.rel (%p2967) target = $region196
        $region193: #{bidaf_forward.1} parent=173 // loop_body
          %p2975 = scmp.lt.s32.totalorder %s2966, 7
          %s2976 = scalar_select %p2975, %s2966, 7
          %s2977 = ssub.s32 7, %s2966
          %p2978 = scmp.gt.s32.totalorder %s2977, 0
          %s2979 = scalar_select %p2978, %s2977, 0
          %s2980 = smul.u32 %s2976, 2
          %s2981 = smul.addr %s2980, 8
          %s2982 = scalar_lea.vmem [#allocation2], %s2981
          %v2983 = vld [vmem:[%s2982] sm:$0xff]
          %s2984 = smul.u32 %s2979, 2
          %s2985 = smul.addr %s2984, 8
          %s2986 = scalar_lea.vmem [#allocation2], %s2985
          %v2987 = vld [vmem:[%s2986 + $0x8] sm:$0xff]
          %v2988 = vpack.c.bf16 %v2971, %v2971
          %2990 = vrot.lane.b32.xlu0 %v2988, 32
          %v2991 = vpop.permute.xlu0 %2990
          %v2996 = vunpack.c.l.b16 %v2957
          %v2997 = vunpack.c.l.b16 %v2958
          %v2998 = vunpack.c.l.b16 %v2959
          %v2999 = vunpack.c.l.b16 %v2960
          %v3000 = vpack.c.b16 %v2997, %v2996
          %v3001 = vpack.c.b16 %v2999, %v2998
          %vm3004 = vcmask 261120
          %v3006 = vsel %vm3004, %v2991, 0
          %3008 = vmatpush.bf16.msra.mxu0 0
          %3009 = vmatpush.bf16.msra.mxu0 0
          %3010 = vmatpush.bf16.msra.mxu0 0
          %3011 = vmatpush.bf16.msra.mxu0 0
          %3012 = vmatpush.bf16.msra.mxu0 0
          %3013 = vmatpush.bf16.msra.mxu0 0
          %3014 = vmatpush.bf16.msra.mxu0 %v3001
          %3015 = vmatpush.bf16.msra.mxu0 %v3000
          %3016 = vmatmul.bf16.gmra.mxu0 %v3006
          %v3017 = vpop.f32.mrf.mxu0
          %v3018 = vadd.f32 0.0, %v3017
          %v3019 = vpop.f32.mrf.mxu0
          %3020 = vdwg.mxu0
          %v3021 = vadd.f32 %v2983, %v3018
          %v3022 = vpack.c.bf16 %v2973, %v2973
          %3024 = vrot.lane.b32.xlu0 %v3022, 32
          %v3025 = vpop.permute.xlu0 %3024
          %v3030 = vunpack.c.l.b16 %v2961
          %v3031 = vunpack.c.l.b16 %v2962
          %v3032 = vunpack.c.l.b16 %v2963
          %v3033 = vunpack.c.l.b16 %v2964
          %v3034 = vpack.c.b16 %v3031, %v3030
          %v3035 = vpack.c.b16 %v3033, %v3032
          %v3039 = vsel %vm3004, %v3025, 0
          %3041 = vmatpush.bf16.msra.mxu0 0
          %3042 = vmatpush.bf16.msra.mxu0 0
          %3043 = vmatpush.bf16.msra.mxu0 0
          %3044 = vmatpush.bf16.msra.mxu0 0
          %3045 = vmatpush.bf16.msra.mxu0 0
          %3046 = vmatpush.bf16.msra.mxu0 0
          %3047 = vmatpush.bf16.msra.mxu0 %v3035
          %3048 = vmatpush.bf16.msra.mxu0 %v3034
          %3049 = vmatmul.bf16.gmra.mxu0 %v3039
          %v3050 = vpop.f32.mrf.mxu0
          %v3051 = vadd.f32 0.0, %v3050
          %v3052 = vpop.f32.mrf.mxu0
          %3053 = vdwg.mxu0
          %v3054 = vadd.f32 %v2987, %v3051
          %v3055 = vxor.u32 %v3021, 2147483648
          %v3056 = vmul.f32 %v3055, 1.442695
          %v3057 = vpow.pop %v3056
          %v3058 = vadd.f32 %v3057, 1.0
          %v3059 = vrcp.pop %v3058
          %v3060 = vmul.f32 %v3058, %v3059
          %v3061 = vsub.f32 1.0, %v3060
          %v3062 = vmul.f32 %v3059, %v3061
          %v3063 = vadd.f32 %v3059, %v3062
          %vm3064 = vweird.f32 %v3058
          %vm3065 = vweird.f32 %v3059
          %vm3066 = vmor %vm3064, %vm3065
          %v3067 = vsel %vm3066, %v3059, %v3063
          %v3068 = vand.u32 2147483647, %v3058
          %vm3069 = vcmp.eq.f32.partialorder %v3068, 8.507059e+37
          %v3070 = vand.u32 %v3058, 2147483648
          %v3071 = vor.u32 1.1754944e-38, %v3070
          %v3072 = vsel %vm3069, %v3071, %v3067
          %v3073 = vmul.f32 1.0, %v3072
          %v3074 = vtanh.pop %v3021
          %v3075 = vmul.f32 %v3073, %v2972
          %3077 = vrot.lane.b32.xlu0 %v3074, 64
          %v3078 = vpop.permute.xlu0 %3077
          %v3080 = vmul.f32 %v3073, %v3078
          %3082 = vrot.lane.b32.xlu0 %v3080, 32
          %v3083 = vpop.permute.xlu0 %3082
          %v3085 = vadd.f32 %v3075, %v3083
          %v3086 = vtanh.pop %v3085
          %3088 = vrot.lane.b32.xlu0 %v3086, 64
          %v3089 = vpop.permute.xlu0 %3088
          %v3091 = vmul.f32 %v3073, %v3089
          %v3092 = vxor.u32 %v3054, 2147483648
          %v3093 = vmul.f32 %v3092, 1.442695
          %v3094 = vpow.pop %v3093
          %v3095 = vadd.f32 %v3094, 1.0
          %v3096 = vrcp.pop %v3095
          %v3097 = vmul.f32 %v3095, %v3096
          %v3098 = vsub.f32 1.0, %v3097
          %v3099 = vmul.f32 %v3096, %v3098
          %v3100 = vadd.f32 %v3096, %v3099
          %vm3101 = vweird.f32 %v3095
          %vm3102 = vweird.f32 %v3096
          %vm3103 = vmor %vm3101, %vm3102
          %v3104 = vsel %vm3103, %v3096, %v3100
          %v3105 = vand.u32 2147483647, %v3095
          %vm3106 = vcmp.eq.f32.partialorder %v3105, 8.507059e+37
          %v3107 = vand.u32 %v3095, 2147483648
          %v3108 = vor.u32 1.1754944e-38, %v3107
          %v3109 = vsel %vm3106, %v3108, %v3104
          %v3110 = vmul.f32 1.0, %v3109
          %v3111 = vtanh.pop %v3054
          %v3112 = vmul.f32 %v3110, %v2974
          %3114 = vrot.lane.b32.xlu0 %v3111, 64
          %v3115 = vpop.permute.xlu0 %3114
          %v3117 = vmul.f32 %v3110, %v3115
          %3119 = vrot.lane.b32.xlu0 %v3117, 32
          %v3120 = vpop.permute.xlu0 %3119
          %v3122 = vadd.f32 %v3112, %v3120
          %v3123 = vtanh.pop %v3122
          %3125 = vrot.lane.b32.xlu0 %v3123, 64
          %v3126 = vpop.permute.xlu0 %3125
          %v3128 = vmul.f32 %v3110, %v3126
          %3130 = vrot.lane.b32.xlu0 %v3091, 32
          %v3131 = vpop.permute.xlu0 %3130
          %s3133 = smul.u32 %s2976, 8
          %s3134 = scalar_lea.vmem [#allocation5], %s3133
          %3135 = vst.msk [vmem:[%s3134] sm:$0xff] %vm3004, %v3131
          %3137 = vrot.lane.b32.xlu0 %v3128, 64
          %v3138 = vpop.permute.xlu0 %3137
          %s3140 = smul.u32 %s2979, 8
          %s3141 = scalar_lea.vmem [#allocation5], %s3140
          %vm3142 = vcmask 523520
          %3143 = vst.msk [vmem:[%s3141] sm:$0xff] %vm3142, %v3138
        $region194: #{bidaf_forward.1} parent=173 // loop_footer
          %s2970 = sadd.s32 1, %s2966
        $region195: #{bidaf_forward.1} parent=173 // loop_footer_branch
          %2965 = sbr.rel target = $region191
        $region196: #{bidaf_forward.1} parent=173 // loop_exit
          _
        %v3144 = vld [vmem:[#allocation5] sm:$0xff]
        %v3145 = vld [vmem:[#allocation5 + $0x8] sm:$0xff]
        %v3146 = vld [vmem:[#allocation5 + $0x10] sm:$0xff]
        %v3147 = vld [vmem:[#allocation5 + $0x18] sm:$0xff]
        %v3148 = vld [vmem:[#allocation5 + $0x20] sm:$0xff]
        %v3149 = vld [vmem:[#allocation5 + $0x28] sm:$0xff]
        %v3150 = vld [vmem:[#allocation5 + $0x30] sm:$0xff]
        %v3151 = vld [vmem:[#allocation5 + $0x38] sm:$0xff]
        %v3152 = vpack.c.bf16 %v3145, %v3144
        %v3153 = vpack.c.bf16 %v3147, %v3146
        %v3154 = vpack.c.bf16 %v3149, %v3148
        %v3155 = vpack.c.bf16 %v3151, %v3150
        %v3156 = vld [vmem:[%s10] sm:$0xff]
        %v3157 = vld [vmem:[%s10 + $0x8] sm:$0xff]
        %v3158 = vld [vmem:[%s10 + $0x10] sm:$0xff]
        %v3159 = vld [vmem:[%s10 + $0x18] sm:$0xff]
        %v3160 = vld [vmem:[%s10 + $0x20] sm:$0xff]
        %v3161 = vld [vmem:[%s10 + $0x28] sm:$0xff]
        %v3162 = vld [vmem:[%s10 + $0x30] sm:$0xff]
        %v3163 = vld [vmem:[%s10 + $0x38] sm:$0xff]
        %v3164 = vld [vmem:[%s13] sm:$0x3]
        %v3166 = vperm.slane %v3164, 0
        %v3167 = vperm.slane %v3164, 1
        %v3178 = vunpack.c.l.b16 %v3156
        %v3179 = vunpack.c.h.b16 %v3156
        %v3180 = vunpack.c.l.b16 %v3157
        %v3181 = vunpack.c.h.b16 %v3157
        %v3182 = vunpack.c.l.b16 %v3158
        %v3183 = vunpack.c.h.b16 %v3158
        %v3184 = vunpack.c.l.b16 %v3159
        %v3185 = vunpack.c.h.b16 %v3159
        %v3186 = vunpack.c.l.b16 %v3160
        %v3187 = vunpack.c.h.b16 %v3160
        %v3188 = vunpack.c.l.b16 %v3161
        %v3189 = vunpack.c.h.b16 %v3161
        %v3190 = vunpack.c.l.b16 %v3162
        %v3191 = vunpack.c.h.b16 %v3162
        %v3192 = vunpack.c.l.b16 %v3163
        %v3193 = vunpack.c.h.b16 %v3163
        %v3194 = vpack.c.b16 %v3180, %v3178
        %v3195 = vpack.c.b16 %v3181, %v3179
        %v3196 = vpack.c.b16 %v3184, %v3182
        %v3197 = vpack.c.b16 %v3185, %v3183
        %v3198 = vpack.c.b16 %v3188, %v3186
        %v3199 = vpack.c.b16 %v3189, %v3187
        %v3200 = vpack.c.b16 %v3192, %v3190
        %v3201 = vpack.c.b16 %v3193, %v3191
        %v3211 = vsel %vm1653, %v3152, 0
        %v3214 = vsel %vm1653, %v3153, 0
        %v3217 = vsel %vm1653, %v3154, 0
        %v3220 = vsel %vm1653, %v3155, 0
        %3222 = vmatpush.bf16.msra.mxu0 0
        %3223 = vmatpush.bf16.msra.mxu0 0
        %3224 = vmatpush.bf16.msra.mxu0 0
        %3225 = vmatpush.bf16.msra.mxu0 0
        %3226 = vmatpush.bf16.msra.mxu0 %v3200
        %3227 = vmatpush.bf16.msra.mxu0 %v3198
        %3228 = vmatpush.bf16.msra.mxu0 %v3196
        %3229 = vmatpush.bf16.msra.mxu0 %v3194
        %3230 = vmatmul.bf16.gmra.mxu0 %v3211
        %v3231 = vpop.f32.mrf.mxu0
        %v3232 = vadd.f32 %v3166, %v3231
        %v3233 = vpop.f32.mrf.mxu0
        %v3234 = vadd.f32 %v3166, %v3233
        %3235 = vmatmul.bf16.gmra.mxu0 %v3214
        %v3236 = vpop.f32.mrf.mxu0
        %v3237 = vadd.f32 %v3166, %v3236
        %v3238 = vpop.f32.mrf.mxu0
        %v3239 = vadd.f32 %v3166, %v3238
        %3240 = vmatmul.bf16.gmra.mxu0 %v3217
        %v3241 = vpop.f32.mrf.mxu0
        %v3242 = vadd.f32 %v3166, %v3241
        %v3243 = vpop.f32.mrf.mxu0
        %v3244 = vadd.f32 %v3166, %v3243
        %3245 = vmatmul.bf16.gmra.mxu0 %v3220
        %v3246 = vpop.f32.mrf.mxu0
        %v3247 = vadd.f32 %v3166, %v3246
        %v3248 = vpop.f32.mrf.mxu0
        %v3249 = vadd.f32 %v3166, %v3248
        %3250 = vdwg.mxu0
        %3251 = vmatpush.bf16.msra.mxu0 0
        %3252 = vmatpush.bf16.msra.mxu0 0
        %3253 = vmatpush.bf16.msra.mxu0 0
        %3254 = vmatpush.bf16.msra.mxu0 0
        %3255 = vmatpush.bf16.msra.mxu0 %v3201
        %3256 = vmatpush.bf16.msra.mxu0 %v3199
        %3257 = vmatpush.bf16.msra.mxu0 %v3197
        %3258 = vmatpush.bf16.msra.mxu0 %v3195
        %3259 = vmatmul.bf16.gmra.mxu0 %v3211
        %v3260 = vpop.f32.mrf.mxu0
        %v3261 = vadd.f32 %v3167, %v3260
        %v3262 = vpop.f32.mrf.mxu0
        %v3263 = vadd.f32 %v3167, %v3262
        %3264 = vmatmul.bf16.gmra.mxu0 %v3214
        %v3265 = vpop.f32.mrf.mxu0
        %v3266 = vadd.f32 %v3167, %v3265
        %v3267 = vpop.f32.mrf.mxu0
        %v3268 = vadd.f32 %v3167, %v3267
        %3269 = vmatmul.bf16.gmra.mxu0 %v3217
        %v3270 = vpop.f32.mrf.mxu0
        %v3271 = vadd.f32 %v3167, %v3270
        %v3272 = vpop.f32.mrf.mxu0
        %v3273 = vadd.f32 %v3167, %v3272
        %3274 = vmatmul.bf16.gmra.mxu0 %v3220
        %v3275 = vpop.f32.mrf.mxu0
        %v3276 = vadd.f32 %v3167, %v3275
        %v3277 = vpop.f32.mrf.mxu0
        %v3278 = vadd.f32 %v3167, %v3277
        %3279 = vdwg.mxu0
        %3280 = vst [vmem:[#allocation2] sm:$0xff] %v3232
        %3281 = vst [vmem:[#allocation2 + $0x8] sm:$0xff] %v3261
        %3282 = vst [vmem:[#allocation2 + $0x10] sm:$0xff] %v3234
        %3283 = vst [vmem:[#allocation2 + $0x18] sm:$0xff] %v3263
        %3284 = vst [vmem:[#allocation2 + $0x20] sm:$0xff] %v3237
        %3285 = vst [vmem:[#allocation2 + $0x28] sm:$0xff] %v3266
        %3286 = vst [vmem:[#allocation2 + $0x30] sm:$0xff] %v3239
        %3287 = vst [vmem:[#allocation2 + $0x38] sm:$0xff] %v3268
        %3288 = vst [vmem:[#allocation2 + $0x40] sm:$0xff] %v3242
        %3289 = vst [vmem:[#allocation2 + $0x48] sm:$0xff] %v3271
        %3290 = vst [vmem:[#allocation2 + $0x50] sm:$0xff] %v3244
        %3291 = vst [vmem:[#allocation2 + $0x58] sm:$0xff] %v3273
        %3292 = vst [vmem:[#allocation2 + $0x60] sm:$0xff] %v3247
        %3293 = vst [vmem:[#allocation2 + $0x68] sm:$0xff] %v3276
        %3294 = vst [vmem:[#allocation2 + $0x70] sm:$0xff] %v3249
        %3295 = vst [vmem:[#allocation2 + $0x78] sm:$0xff] %v3278
        %v3296 = vld [vmem:[%s11] sm:$0xf]
        %v3297 = vld [vmem:[%s11 + $0x4] sm:$0xf]
        %v3298 = vld [vmem:[%s11 + $0x8] sm:$0xf]
        %v3299 = vld [vmem:[%s11 + $0xc] sm:$0xf]
        %v3300 = vld [vmem:[%s12] sm:$0xf]
        %v3301 = vld [vmem:[%s12 + $0x4] sm:$0xf]
        %v3302 = vld [vmem:[%s12 + $0x8] sm:$0xf]
        %v3303 = vld [vmem:[%s12 + $0xc] sm:$0xf]
        loop: start=0, step=1, limit=8
        $region197: #{bidaf_forward.1} parent=173 // loop_pre_header
          _
        $region198: #{bidaf_forward.1} parent=173 // loop_header
          %s3305 = sphi 0, %s3309
          %p3306 = scmp.ge.s32.totalorder %s3305, 8
          %v3310 = vphi 0.0, %v3430
          %v3311 = vphi 0.0, %v3424
          %v3312 = vphi 0.0, %v3467
          %v3313 = vphi 0.0, %v3461
        $region199: #{bidaf_forward.1} parent=173 // loop_header_branch
          %3308 = sbr.rel (%p3306) target = $region203
        $region200: #{bidaf_forward.1} parent=173 // loop_body
          %p3314 = scmp.lt.s32.totalorder %s3305, 7
          %s3315 = scalar_select %p3314, %s3305, 7
          %s3316 = ssub.s32 7, %s3305
          %p3317 = scmp.gt.s32.totalorder %s3316, 0
          %s3318 = scalar_select %p3317, %s3316, 0
          %s3319 = smul.u32 %s3315, 2
          %s3320 = smul.addr %s3319, 8
          %s3321 = scalar_lea.vmem [#allocation2], %s3320
          %v3322 = vld [vmem:[%s3321] sm:$0xff]
          %s3323 = smul.u32 %s3318, 2
          %s3324 = smul.addr %s3323, 8
          %s3325 = scalar_lea.vmem [#allocation2], %s3324
          %v3326 = vld [vmem:[%s3325 + $0x8] sm:$0xff]
          %v3327 = vpack.c.bf16 %v3310, %v3310
          %3329 = vrot.lane.b32.xlu0 %v3327, 32
          %v3330 = vpop.permute.xlu0 %3329
          %v3335 = vunpack.c.l.b16 %v3296
          %v3336 = vunpack.c.l.b16 %v3297
          %v3337 = vunpack.c.l.b16 %v3298
          %v3338 = vunpack.c.l.b16 %v3299
          %v3339 = vpack.c.b16 %v3336, %v3335
          %v3340 = vpack.c.b16 %v3338, %v3337
          %vm3343 = vcmask 261120
          %v3345 = vsel %vm3343, %v3330, 0
          %3347 = vmatpush.bf16.msra.mxu0 0
          %3348 = vmatpush.bf16.msra.mxu0 0
          %3349 = vmatpush.bf16.msra.mxu0 0
          %3350 = vmatpush.bf16.msra.mxu0 0
          %3351 = vmatpush.bf16.msra.mxu0 0
          %3352 = vmatpush.bf16.msra.mxu0 0
          %3353 = vmatpush.bf16.msra.mxu0 %v3340
          %3354 = vmatpush.bf16.msra.mxu0 %v3339
          %3355 = vmatmul.bf16.gmra.mxu0 %v3345
          %v3356 = vpop.f32.mrf.mxu0
          %v3357 = vadd.f32 0.0, %v3356
          %v3358 = vpop.f32.mrf.mxu0
          %3359 = vdwg.mxu0
          %v3360 = vadd.f32 %v3322, %v3357
          %v3361 = vpack.c.bf16 %v3312, %v3312
          %3363 = vrot.lane.b32.xlu0 %v3361, 32
          %v3364 = vpop.permute.xlu0 %3363
          %v3369 = vunpack.c.l.b16 %v3300
          %v3370 = vunpack.c.l.b16 %v3301
          %v3371 = vunpack.c.l.b16 %v3302
          %v3372 = vunpack.c.l.b16 %v3303
          %v3373 = vpack.c.b16 %v3370, %v3369
          %v3374 = vpack.c.b16 %v3372, %v3371
          %v3378 = vsel %vm3343, %v3364, 0
          %3380 = vmatpush.bf16.msra.mxu0 0
          %3381 = vmatpush.bf16.msra.mxu0 0
          %3382 = vmatpush.bf16.msra.mxu0 0
          %3383 = vmatpush.bf16.msra.mxu0 0
          %3384 = vmatpush.bf16.msra.mxu0 0
          %3385 = vmatpush.bf16.msra.mxu0 0
          %3386 = vmatpush.bf16.msra.mxu0 %v3374
          %3387 = vmatpush.bf16.msra.mxu0 %v3373
          %3388 = vmatmul.bf16.gmra.mxu0 %v3378
          %v3389 = vpop.f32.mrf.mxu0
          %v3390 = vadd.f32 0.0, %v3389
          %v3391 = vpop.f32.mrf.mxu0
          %3392 = vdwg.mxu0
          %v3393 = vadd.f32 %v3326, %v3390
          %v3394 = vxor.u32 %v3360, 2147483648
          %v3395 = vmul.f32 %v3394, 1.442695
          %v3396 = vpow.pop %v3395
          %v3397 = vadd.f32 %v3396, 1.0
          %v3398 = vrcp.pop %v3397
          %v3399 = vmul.f32 %v3397, %v3398
          %v3400 = vsub.f32 1.0, %v3399
          %v3401 = vmul.f32 %v3398, %v3400
          %v3402 = vadd.f32 %v3398, %v3401
          %vm3403 = vweird.f32 %v3397
          %vm3404 = vweird.f32 %v3398
          %vm3405 = vmor %vm3403, %vm3404
          %v3406 = vsel %vm3405, %v3398, %v3402
          %v3407 = vand.u32 2147483647, %v3397
          %vm3408 = vcmp.eq.f32.partialorder %v3407, 8.507059e+37
          %v3409 = vand.u32 %v3397, 2147483648
          %v3410 = vor.u32 1.1754944e-38, %v3409
          %v3411 = vsel %vm3408, %v3410, %v3406
          %v3412 = vmul.f32 1.0, %v3411
          %v3413 = vtanh.pop %v3360
          %v3414 = vmul.f32 %v3412, %v3311
          %3416 = vrot.lane.b32.xlu0 %v3413, 64
          %v3417 = vpop.permute.xlu0 %3416
          %v3419 = vmul.f32 %v3412, %v3417
          %3421 = vrot.lane.b32.xlu0 %v3419, 32
          %v3422 = vpop.permute.xlu0 %3421
          %v3424 = vadd.f32 %v3414, %v3422
          %v3425 = vtanh.pop %v3424
          %3427 = vrot.lane.b32.xlu0 %v3425, 64
          %v3428 = vpop.permute.xlu0 %3427
          %v3430 = vmul.f32 %v3412, %v3428
          %v3431 = vxor.u32 %v3393, 2147483648
          %v3432 = vmul.f32 %v3431, 1.442695
          %v3433 = vpow.pop %v3432
          %v3434 = vadd.f32 %v3433, 1.0
          %v3435 = vrcp.pop %v3434
          %v3436 = vmul.f32 %v3434, %v3435
          %v3437 = vsub.f32 1.0, %v3436
          %v3438 = vmul.f32 %v3435, %v3437
          %v3439 = vadd.f32 %v3435, %v3438
          %vm3440 = vweird.f32 %v3434
          %vm3441 = vweird.f32 %v3435
          %vm3442 = vmor %vm3440, %vm3441
          %v3443 = vsel %vm3442, %v3435, %v3439
          %v3444 = vand.u32 2147483647, %v3434
          %vm3445 = vcmp.eq.f32.partialorder %v3444, 8.507059e+37
          %v3446 = vand.u32 %v3434, 2147483648
          %v3447 = vor.u32 1.1754944e-38, %v3446
          %v3448 = vsel %vm3445, %v3447, %v3443
          %v3449 = vmul.f32 1.0, %v3448
          %v3450 = vtanh.pop %v3393
          %v3451 = vmul.f32 %v3449, %v3313
          %3453 = vrot.lane.b32.xlu0 %v3450, 64
          %v3454 = vpop.permute.xlu0 %3453
          %v3456 = vmul.f32 %v3449, %v3454
          %3458 = vrot.lane.b32.xlu0 %v3456, 32
          %v3459 = vpop.permute.xlu0 %3458
          %v3461 = vadd.f32 %v3451, %v3459
          %v3462 = vtanh.pop %v3461
          %3464 = vrot.lane.b32.xlu0 %v3462, 64
          %v3465 = vpop.permute.xlu0 %3464
          %v3467 = vmul.f32 %v3449, %v3465
          %3469 = vrot.lane.b32.xlu0 %v3430, 32
          %v3470 = vpop.permute.xlu0 %3469
          %s3472 = smul.u32 %s3315, 8
          %s3473 = scalar_lea.vmem [#allocation3], %s3472
          %3474 = vst.msk [vmem:[%s3473] sm:$0xff] %vm3343, %v3470
          %3476 = vrot.lane.b32.xlu0 %v3467, 64
          %v3477 = vpop.permute.xlu0 %3476
          %s3479 = smul.u32 %s3318, 8
          %s3480 = scalar_lea.vmem [#allocation3], %s3479
          %vm3481 = vcmask 523520
          %3482 = vst.msk [vmem:[%s3480] sm:$0xff] %vm3481, %v3477
        $region201: #{bidaf_forward.1} parent=173 // loop_footer
          %s3309 = sadd.s32 1, %s3305
        $region202: #{bidaf_forward.1} parent=173 // loop_footer_branch
          %3304 = sbr.rel target = $region198
        $region203: #{bidaf_forward.1} parent=173 // loop_exit
          _
        %v3483 = vld [vmem:[#allocation3] sm:$0xff]
        %v3484 = vld [vmem:[#allocation3 + $0x8] sm:$0xff]
        %v3485 = vld [vmem:[#allocation3 + $0x10] sm:$0xff]
        %v3486 = vld [vmem:[#allocation3 + $0x18] sm:$0xff]
        %v3487 = vld [vmem:[#allocation3 + $0x20] sm:$0xff]
        %v3488 = vld [vmem:[#allocation3 + $0x28] sm:$0xff]
        %v3489 = vld [vmem:[#allocation3 + $0x30] sm:$0xff]
        %v3490 = vld [vmem:[#allocation3 + $0x38] sm:$0xff]
        %v3491 = vsel %vm1653, %v3483, -inf
        %v3492 = vsel %vm1653, %v3484, -inf
        %v3493 = vsel %vm1653, %v3485, -inf
        %v3494 = vsel %vm1653, %v3486, -inf
        %v3495 = vsel %vm1653, %v3487, -inf
        %v3496 = vmax.f32 %v3491, %v3495
        %v3497 = vsel %vm1653, %v3488, -inf
        %v3498 = vmax.f32 %v3492, %v3497
        %v3499 = vsel %vm1653, %v3489, -inf
        %v3500 = vmax.f32 %v3493, %v3499
        %v3501 = vsel %vm1653, %v3490, -inf
        %v3502 = vmax.f32 %v3494, %v3501
        %v3503 = vmax.f32 %v3496, %v3498
        %v3504 = vmax.f32 %v3500, %v3502
        %v3505 = vmax.f32 %v3503, %v3504
        %v3506 = vsel %vm1653, %v3483, 0.0
        %v3507 = vsel %vm1653, %v3484, 0.0
        %v3508 = vadd.f32 %v3506, %v3507
        %v3509 = vsel %vm1653, %v3485, 0.0
        %v3510 = vadd.f32 %v3508, %v3509
        %v3511 = vsel %vm1653, %v3486, 0.0
        %v3512 = vadd.f32 %v3510, %v3511
        %v3513 = vsel %vm1653, %v3487, 0.0
        %v3514 = vadd.f32 %v3512, %v3513
        %v3515 = vsel %vm1653, %v3488, 0.0
        %v3516 = vadd.f32 %v3514, %v3515
        %v3517 = vsel %vm1653, %v3489, 0.0
        %v3518 = vadd.f32 %v3516, %v3517
        %v3519 = vsel %vm1653, %v3490, 0.0
        %v3520 = vadd.f32 %v3518, %v3519
        %v3521 = vrcp.pop 8.0
        %v3522 = vmul.f32 8.0, %v3521
        %v3523 = vsub.f32 1.0, %v3522
        %v3524 = vmul.f32 %v3521, %v3523
        %v3525 = vadd.f32 %v3521, %v3524
        %vm3526 = vweird.f32 %v3521
        %v3527 = vsel %vm3526, %v3521, %v3525
        %v3528 = vmul.f32 %v3520, %v3527
        %3530 = vrot.lane.b32.xlu0 %v3505, 64
        %v3531 = vpop.permute.xlu0 %3530
        %v3533 = vsel %vm1653, %v3490, %v3531
        %v3534 = vpack.c.bf16 %v3533, %v3533
        %v3535 = vpack.c.bf16 %v3528, %v3528
        %v3536 = vld [vmem:[%s14] sm:$0xf]
        %v3537 = vld [vmem:[%s14 + $0x4] sm:$0xf]
        %v3538 = vld [vmem:[%s14 + $0x8] sm:$0xf]
        %v3539 = vld [vmem:[%s14 + $0xc] sm:$0xf]
        %v3540 = vld [vmem:[%s14 + $0x10] sm:$0xf]
        %v3541 = vld [vmem:[%s14 + $0x14] sm:$0xf]
        %v3542 = vld [vmem:[%s14 + $0x18] sm:$0xf]
        %v3543 = vld [vmem:[%s14 + $0x1c] sm:$0xf]
        %v3544 = vld [vmem:[%s14 + $0x20] sm:$0xf]
        %v3545 = vld [vmem:[%s14 + $0x24] sm:$0xf]
        %v3546 = vld [vmem:[%s14 + $0x28] sm:$0xf]
        %v3547 = vld [vmem:[%s14 + $0x2c] sm:$0xf]
        %v3548 = vld [vmem:[%s14 + $0x30] sm:$0xf]
        %v3549 = vld [vmem:[%s14 + $0x34] sm:$0xf]
        %v3550 = vld [vmem:[%s14 + $0x38] sm:$0xf]
        %v3551 = vld [vmem:[%s14 + $0x3c] sm:$0xf]
        %v3552 = vld [vmem:[%s14 + $0x40] sm:$0xf]
        %v3553 = vld [vmem:[%s14 + $0x44] sm:$0xf]
        %v3554 = vld [vmem:[%s14 + $0x48] sm:$0xf]
        %v3555 = vld [vmem:[%s14 + $0x4c] sm:$0xf]
        %v3556 = vld [vmem:[%s14 + $0x50] sm:$0xf]
        %v3557 = vld [vmem:[%s14 + $0x54] sm:$0xf]
        %v3558 = vld [vmem:[%s14 + $0x58] sm:$0xf]
        %v3559 = vld [vmem:[%s14 + $0x5c] sm:$0xf]
        %v3560 = vld [vmem:[%s15] sm:$0x1]
        %v3562 = vperm.slane %v3560, 0
        %v3588 = vunpack.c.l.b16 %v3536
        %v3589 = vunpack.c.l.b16 %v3537
        %v3590 = vunpack.c.l.b16 %v3538
        %v3591 = vunpack.c.l.b16 %v3539
        %v3592 = vunpack.c.l.b16 %v3540
        %v3593 = vunpack.c.l.b16 %v3541
        %v3594 = vunpack.c.l.b16 %v3542
        %v3595 = vunpack.c.l.b16 %v3543
        %v3596 = vunpack.c.l.b16 %v3544
        %v3597 = vunpack.c.l.b16 %v3545
        %v3598 = vunpack.c.l.b16 %v3546
        %v3599 = vunpack.c.l.b16 %v3547
        %v3600 = vunpack.c.l.b16 %v3548
        %v3601 = vunpack.c.l.b16 %v3549
        %v3602 = vunpack.c.l.b16 %v3550
        %v3603 = vunpack.c.l.b16 %v3551
        %v3604 = vunpack.c.l.b16 %v3552
        %v3605 = vunpack.c.l.b16 %v3553
        %v3606 = vunpack.c.l.b16 %v3554
        %v3607 = vunpack.c.l.b16 %v3555
        %v3608 = vunpack.c.l.b16 %v3556
        %v3609 = vunpack.c.l.b16 %v3557
        %v3610 = vunpack.c.l.b16 %v3558
        %v3611 = vunpack.c.l.b16 %v3559
        %v3612 = vpack.c.b16 %v3589, %v3588
        %v3613 = vpack.c.b16 %v3591, %v3590
        %v3614 = vpack.c.b16 %v3593, %v3592
        %v3615 = vpack.c.b16 %v3595, %v3594
        %v3616 = vpack.c.b16 %v3597, %v3596
        %v3617 = vpack.c.b16 %v3599, %v3598
        %v3618 = vpack.c.b16 %v3601, %v3600
        %v3619 = vpack.c.b16 %v3603, %v3602
        %v3620 = vpack.c.b16 %v3605, %v3604
        %v3621 = vpack.c.b16 %v3607, %v3606
        %v3622 = vpack.c.b16 %v3609, %v3608
        %v3623 = vpack.c.b16 %v3611, %v3610
        %v3637 = vsel %vm1653, %v3535, 0
        %3639 = vmatpush.bf16.msra.mxu0 %v3619
        %3640 = vmatpush.bf16.msra.mxu0 %v3618
        %3641 = vmatpush.bf16.msra.mxu0 %v3617
        %3642 = vmatpush.bf16.msra.mxu0 %v3616
        %3643 = vmatpush.bf16.msra.mxu0 %v3615
        %3644 = vmatpush.bf16.msra.mxu0 %v3614
        %3645 = vmatpush.bf16.msra.mxu0 %v3613
        %3646 = vmatpush.bf16.msra.mxu0 %v3612
        %3647 = vmatmul.bf16.gmra.mxu0 %v3534
        %v3648 = vpop.f32.mrf.mxu0
        %v3649 = vadd.f32 %v3562, %v3648
        %v3650 = vpop.f32.mrf.mxu0
        %3651 = vdwg.mxu0
        %3652 = vmatpush.bf16.msra.mxu0 0
        %3653 = vmatpush.bf16.msra.mxu0 0
        %3654 = vmatpush.bf16.msra.mxu0 0
        %3655 = vmatpush.bf16.msra.mxu0 0
        %3656 = vmatpush.bf16.msra.mxu0 %v3623
        %3657 = vmatpush.bf16.msra.mxu0 %v3622
        %3658 = vmatpush.bf16.msra.mxu0 %v3621
        %3659 = vmatpush.bf16.msra.mxu0 %v3620
        %3660 = vmatmul.bf16.gmra.mxu0 %v3637
        %v3661 = vpop.f32.mrf.mxu0
        %v3662 = vadd.f32 %v3649, %v3661
        %v3663 = vpop.f32.mrf.mxu0
        %3664 = vdwg.mxu0
        %v3665 = vmax.f32 %v3662, 0.0
        %v3666 = vpack.c.bf16 %v3665, %v3665
        %v3667 = vld [vmem:[%s16] sm:$0xf]
        %v3668 = vld [vmem:[%s16 + $0x4] sm:$0xf]
        %v3669 = vld [vmem:[%s16 + $0x8] sm:$0xf]
        %v3670 = vld [vmem:[%s16 + $0xc] sm:$0xf]
        %v3671 = vld [vmem:[%s17] sm:$0x1]
        %v3673 = vperm.slane %v3671, 0
        %v3679 = vunpack.c.l.b16 %v3667
        %v3680 = vunpack.c.l.b16 %v3668
        %v3681 = vunpack.c.l.b16 %v3669
        %v3682 = vunpack.c.l.b16 %v3670
        %v3683 = vpack.c.b16 %v3680, %v3679
        %v3684 = vpack.c.b16 %v3682, %v3681
        %vm3687 = vcmask 261120
        %v3689 = vsel %vm3687, %v3666, 0
        %3691 = vmatpush.bf16.msra.mxu0 0
        %3692 = vmatpush.bf16.msra.mxu0 0
        %3693 = vmatpush.bf16.msra.mxu0 0
        %3694 = vmatpush.bf16.msra.mxu0 0
        %3695 = vmatpush.bf16.msra.mxu0 0
        %3696 = vmatpush.bf16.msra.mxu0 0
        %3697 = vmatpush.bf16.msra.mxu0 %v3684
        %3698 = vmatpush.bf16.msra.mxu0 %v3683
        %3699 = vmatmul.bf16.gmra.mxu0 %v3689
        %v3700 = vpop.f32.mrf.mxu0
        %v3701 = vadd.f32 %v3673, %v3700
        %v3702 = vpop.f32.mrf.mxu0
        %3703 = vdwg.mxu0
        %v3704 = vmax.f32 %v3701, 0.0
        %v3705 = vld [vmem:[%s18] sm:$0x1]
        %v3707 = vperm.slane %v3705, 0
        %v3709 = vmul.f32 %v3704, %v3707
        %v3710 = vsel %vm3687, %v3709, 0.0
        %3711 = vadd.xlane.f32.xlu0 %v3710
        %v3712 = vpop.xlane.xlu0 %3711
        %v3713 = vld [vmem:[#allocation6] sm:$0x1]
        %v3715 = vperm.slane %v3713, 0
        %v3717 = vadd.f32 %v3712, %v3715
        %vm3718 = vcmask 7168
        %3719 = vst.msk [vmem:[%s783] sm:$0xff] %vm3718, %v3717
        %p3720 = scmp.lt.s32.totalorder %s33, 1
        %s3721 = scalar_select %p3720, %s33, 1
        %s3722 = smul.addr %s3721, 8
        %s3723 = scalar_lea.vmem %s20, %s3722
        // Predicated region
        $region204: #{bidaf_forward.1} parent=173 // pred_check
          %p3724 = pneg %p481
        $region205: #{bidaf_forward.1} parent=173 // pred_check_branch
          %3726 = sbr.rel (%p3724) target = $region207
        $region206: #{bidaf_forward.1} parent=173 // pred_region
          _
        $region207: #{bidaf_forward.1} parent=173 // pred_fallthru
          _
      $region174: #{bidaf_forward.1} parent=5 // pred_fallthru
        _
      %p3727 = scmp.le.s32.totalorder 2, %s28
      // Predicated region
      $region208: #{bidaf_forward.1} parent=5 // pred_check
        %p3728 = pneg %p3727
      $region209: #{bidaf_forward.1} parent=5 // pred_check_branch
        %3730 = sbr.rel (%p3728) target = $region211
      $region210: #{bidaf_forward.1} parent=5 // pred_region
        %s3731 = ssub.s32 %s28, 2
        // Predicated region
        $region212: #{bidaf_forward.1} parent=210 // pred_check
          %p3732 = pneg %p487
        $region213: #{bidaf_forward.1} parent=210 // pred_check_branch
          %3734 = sbr.rel (%p3732) target = $region215
        $region214: #{bidaf_forward.1} parent=210 // pred_region
          %p3735 = scmp.lt.s32.totalorder %s34, 1
          %s3736 = scalar_select %p3735, %s34, 1
          %s3737 = smul.addr %s3736, 8
          %s3738 = scalar_lea.vmem %s20, %s3737
        $region215: #{bidaf_forward.1} parent=210 // pred_fallthru
          _
      $region211: #{bidaf_forward.1} parent=5 // pred_fallthru
        _
    $region6: #{bidaf_forward.1} parent=1 // loop_footer
      %s32 = sadd.s32 1, %s28
    $region7: #{bidaf_forward.1} parent=1 // loop_footer_branch
      %27 = sbr.rel target = $region3
    $region8: #{bidaf_forward.1} parent=1 // loop_exit
      _

</llo_original>
